<compile_context>
chip_gen: v7x
topology: tpu7x:2x2x1
jax: 0.10.0
libtpu: 0.0.40
codegen_flags: <defaults>
</compile_context>

<pallas_src>
import functools
import math

import jax
import jax.numpy as jnp
from jax.experimental import pallas as pl
from jax.experimental.pallas import tpu as pltpu


def decoder_layer_kernel(x_ref, kts_ref, vs_ref, ktc_ref, vc_ref,
                         src_mask_ref, trg_mask_ref,
                         norm_a_ref, norm_b_ref,
                         wq_ref, wo_ref, bq_ref, bo_ref,
                         ff_w1_ref, ff_b1_ref, ff_w2_ref, ff_b2_ref,
                         o_ref, concat_ref, *, heads):
    x_t = x_ref[0]                   # (tq, D) residual-stream tile (f32)
    na = norm_a_ref[...]             # (3, D) f32
    nb = norm_b_ref[...]             # (3, D) f32
    bq = bq_ref[...]                 # (2, D) f32 (q bias pre-scaled)
    bo = bo_ref[...]                 # (2, D) f32
    D = x_t.shape[-1]
    d_k = D // heads
    eps = 1e-6

    def norm(z, lyr):
        # matches torch: mean/std over last dim, unbiased std (ddof=1), eps added to std
        mean = jnp.mean(z, axis=-1, keepdims=True)
        diff = z - mean
        var = jnp.sum(diff * diff, axis=-1, keepdims=True) * (1.0 / (D - 1))
        return na[lyr:lyr + 1, :] * (diff / (jnp.sqrt(var) + eps)) + nb[lyr:lyr + 1, :]

    def mha(q_in, kt_ref, v_ref, layer, mask_bias):
        # q_in: (tq, D) f32; kt_ref: (1,H,d_k,Sk) bf16; v_ref: (1,H,Sk,d_k) bf16
        # mask_bias: additive bias broadcastable to (tq, Sk), 0 or -1e9.
        q = jnp.dot(q_in.astype(jnp.bfloat16), wq_ref[layer],
                    preferred_element_type=jnp.float32) + bq[layer:layer + 1, :]
        q = q.astype(jnp.bfloat16)
        for h in range(heads):
            q_h = q[:, h * d_k:(h + 1) * d_k]                                   # static slice
            s = jnp.dot(q_h, kt_ref[0, h], preferred_element_type=jnp.float32)  # (tq, Sk)
            s = s + mask_bias
            m = jnp.max(s, axis=-1, keepdims=True)
            p = jnp.exp(s - m)
            p = p * pl.reciprocal(jnp.sum(p, axis=-1, keepdims=True), approx=True)
            oh = jnp.dot(p.astype(jnp.bfloat16), v_ref[0, h],
                         preferred_element_type=jnp.float32)                    # (tq, d_k)
            concat_ref[:, h * d_k:(h + 1) * d_k] = oh.astype(jnp.bfloat16)
        # single full-width out-projection from the head-concatenated slab
        return jnp.dot(concat_ref[...], wo_ref[layer],
                       preferred_element_type=jnp.float32) + bo[layer:layer + 1, :]

    # hoist mask compare+select out of the head loops (one additive bias per sublayer)
    trg_bias = jnp.where(trg_mask_ref[0] == 0.0, -1e9, 0.0)   # (tq, S_pad)
    src_bias = jnp.where(src_mask_ref[0] == 0.0, -1e9, 0.0)   # (1, Se)

    # sublayer 1: masked self-attention (K/V precomputed from norm_1(x) in the wrapper)
    x_t = x_t + mha(norm(x_t, 0), kts_ref, vs_ref, 0, trg_bias)
    # sublayer 2: cross-attention over encoder outputs (K/V precomputed in the wrapper)
    x_t = x_t + mha(norm(x_t, 1), ktc_ref, vc_ref, 1, src_bias)

    # sublayer 3: position-wise feed-forward (Linear -> ReLU -> Linear)
    x2 = norm(x_t, 2)
    hdn = jnp.maximum(
        jnp.dot(x2.astype(jnp.bfloat16), ff_w1_ref[...],
                preferred_element_type=jnp.float32) + ff_b1_ref[...], 0.0)
    x_t = x_t + jnp.dot(hdn.astype(jnp.bfloat16), ff_w2_ref[...],
                        preferred_element_type=jnp.float32) + ff_b2_ref[...]

    o_ref[0] = x_t


def decoder_layer(x, e_outputs, src_mask, trg_mask, params, *, heads):
    B, S, D = x.shape
    Se = e_outputs.shape[1]
    Dff = params["ff_w1"].shape[1]
    assert D % heads == 0, "d_model must be divisible by heads"
    d_k = D // heads
    assert src_mask.shape == (B, 1, Se)
    assert trg_mask.shape == (B, S, S)

    f32, bf16 = jnp.float32, jnp.bfloat16
    eps = 1e-6
    scale = 1.0 / (float(d_k) ** 0.5)

    x = x.astype(f32)
    e = e_outputs.astype(f32)
    src_mask = src_mask.astype(f32)
    trg_mask = trg_mask.astype(f32)

    # query-tile size; pad sequences longer than 128 to a tile multiple instead of tq = S
    if S >= 256 and S % 256 == 0:
        tq = 256
    elif S >= 128:
        tq = 128
    else:
        tq = S
    S_pad = pl.cdiv(S, tq) * tq
    if S_pad != S:
        x = jnp.pad(x, ((0, 0), (0, S_pad - S), (0, 0)))
        # zero padding => padded key columns are masked; padded query rows trimmed below
        trg_mask = jnp.pad(trg_mask, ((0, 0), (0, S_pad - S), (0, S_pad - S)))
    n_tq = S_pad // tq

    na = params["norm_a"].astype(f32)      # (3, D)
    nbv = params["norm_b"].astype(f32)     # (3, D)
    aw = params["attn_w"].astype(f32)      # (2, 4, D, D)  [q,k,v,out], (in, out) layout
    ab = params["attn_b"].astype(f32)      # (2, 4, D)

    # --- per-(batch, layer) K/V precompute: done ONCE here, not per query tile ---
    def full_norm(z, a, b):
        mean = z.mean(-1, keepdims=True)
        diff = z - mean
        var = (diff * diff).sum(-1, keepdims=True) / (D - 1)
        return a * diff / (jnp.sqrt(var) + eps) + b

    def kv(src, layer):
        Sk = src.shape[1]
        k = src @ aw[layer, 1] + ab[layer, 1]
        v = src @ aw[layer, 2] + ab[layer, 2]
        kt = k.reshape(B, Sk, heads, d_k).transpose(0, 2, 3, 1)   # (B, H, d_k, Sk)
        v = v.reshape(B, Sk, heads, d_k).transpose(0, 2, 1, 3)    # (B, H, Sk, d_k)
        return kt.astype(bf16), v.astype(bf16)

    kts, vs = kv(full_norm(x, na[0], nbv[0]), 0)    # self-attention K/V from norm_1(x)
    ktc, vc = kv(e, 1)                              # cross-attention K/V from e_outputs

    # fused full-width q / out-proj weights; fold 1/sqrt(d_k) into the q projection
    wq = (aw[:, 0] * scale).astype(bf16)    # (2, D, D)
    wo = aw[:, 3].astype(bf16)              # (2, D, D)
    bq = ab[:, 0] * scale                   # (2, D)
    bo = ab[:, 3]                           # (2, D)

    ff_w1 = params["ff_w1"].astype(bf16)
    ff_b1 = params["ff_b1"].astype(f32).reshape(1, Dff)
    ff_w2 = params["ff_w2"].astype(bf16)
    ff_b2 = params["ff_b2"].astype(f32).reshape(1, D)

    # --- generation-aware VMEM budget (double-buffered inputs + scratch + slack) ---
    def nbytes(shape, dt):
        return math.prod(shape) * jnp.dtype(dt).itemsize

    act_bytes = (2 * nbytes((1, tq, D), f32)
                 + nbytes((1, heads, d_k, S_pad), bf16)
                 + nbytes((1, heads, S_pad, d_k), bf16)
                 + nbytes((1, heads, d_k, Se), bf16)
                 + nbytes((1, heads, Se, d_k), bf16)
                 + nbytes((1, 1, Se), f32) + nbytes((1, tq, S_pad), f32))
    w_bytes = (2 * nbytes((2, D, D), bf16) + 2 * nbytes((2, D), f32)
               + 2 * nbytes((3, D), f32)
               + nbytes((D, Dff), bf16) + nbytes((Dff, D), bf16)
               + nbytes((1, Dff), f32) + nbytes((1, D), f32))
    est = 2 * (act_bytes + w_bytes) + nbytes((tq, D), bf16) + (4 << 20)
    try:
        cap = getattr(pltpu.get_tpu_info(), "vmem_capacity_bytes", 64 << 20)
    except Exception:  # pragma: no cover - trace-time info unavailable
        cap = 64 << 20
    vmem_limit = int(min(0.9 * cap, max(32 << 20, 2 * est)))

    kernel = functools.partial(decoder_layer_kernel, heads=heads)

    out = pl.pallas_call(
        kernel,
        out_shape=jax.ShapeDtypeStruct((B, S_pad, D), f32),
        grid=(B, n_tq),
        in_specs=[
            pl.BlockSpec((1, tq, D), lambda b, t: (b, t, 0)),                  # x (query tile)
            pl.BlockSpec((1, heads, d_k, S_pad), lambda b, t: (b, 0, 0, 0)),   # self K^T (bf16)
            pl.BlockSpec((1, heads, S_pad, d_k), lambda b, t: (b, 0, 0, 0)),   # self V   (bf16)
            pl.BlockSpec((1, heads, d_k, Se), lambda b, t: (b, 0, 0, 0)),      # cross K^T (bf16)
            pl.BlockSpec((1, heads, Se, d_k), lambda b, t: (b, 0, 0, 0)),      # cross V   (bf16)
            pl.BlockSpec((1, 1, Se), lambda b, t: (b, 0, 0)),                  # src_mask
            pl.BlockSpec((1, tq, S_pad), lambda b, t: (b, t, 0)),              # trg_mask tile
            pl.BlockSpec((3, D), lambda b, t: (0, 0)),                         # norm alpha
            pl.BlockSpec((3, D), lambda b, t: (0, 0)),                         # norm bias
            pl.BlockSpec((2, D, D), lambda b, t: (0, 0, 0)),                   # wq (bf16, scaled)
            pl.BlockSpec((2, D, D), lambda b, t: (0, 0, 0)),                   # wo (bf16)
            pl.BlockSpec((2, D), lambda b, t: (0, 0)),                         # q bias (scaled)
            pl.BlockSpec((2, D), lambda b, t: (0, 0)),                         # out-proj bias
            pl.BlockSpec((D, Dff), lambda b, t: (0, 0)),                       # ff w1 (bf16)
            pl.BlockSpec((1, Dff), lambda b, t: (0, 0)),                       # ff b1
            pl.BlockSpec((Dff, D), lambda b, t: (0, 0)),                       # ff w2 (bf16)
            pl.BlockSpec((1, D), lambda b, t: (0, 0)),                         # ff b2
        ],
        out_specs=pl.BlockSpec((1, tq, D), lambda b, t: (b, t, 0)),
        scratch_shapes=[pltpu.VMEM((tq, D), bf16)],                            # head-concat slab
        compiler_params=pltpu.CompilerParams(
            dimension_semantics=("parallel", "parallel"),
            vmem_limit_bytes=vmem_limit),
    )(x, kts, vs, ktc, vc, src_mask, trg_mask, na, nbv,
      wq, wo, bq, bo, ff_w1, ff_b1, ff_w2, ff_b2)

    return out[:, :S] if S_pad != S else out


def reference_decoder_layer(x, e, src_mask, trg_mask, params, *, heads):
    """Pure-JAX f32 reference mirroring the PyTorch forward (eval mode)."""
    eps = 1e-6

    def norm(z, a, b):
        mean = z.mean(-1, keepdims=True)
        diff = z - mean
        var = (diff ** 2).sum(-1, keepdims=True) / (z.shape[-1] - 1)
        return a * diff / (jnp.sqrt(var) + eps) + b

    def mha(xq, xkv, w, b, mask):
        B, Sq, D = xq.shape
        Sk = xkv.shape[1]
        dk = D // heads
        q = xq @ w[0] + b[0]
        k = xkv @ w[1] + b[1]
        v = xkv @ w[2] + b[2]
        q = q.reshape(B, Sq, heads, dk).transpose(0, 2, 1, 3)
        k = k.reshape(B, Sk, heads, dk).transpose(0, 2, 1, 3)
        v = v.reshape(B, Sk, heads, dk).transpose(0, 2, 1, 3)
        scores = jnp.einsum("bhqd,bhkd->bhqk", q, k) / jnp.sqrt(jnp.float32(dk))
        scores = jnp.where(mask[:, None] == 0.0, -1e9, scores)
        p = jax.nn.softmax(scores, axis=-1)
        o = jnp.einsum("bhqk,bhkd->bhqd", p, v)
        o = o.transpose(0, 2, 1, 3).reshape(B, Sq, D)
        return o @ w[3] + b[3]

    na, nb = params["norm_a"], params["norm_b"]
    aw, ab = params["attn_w"], params["attn_b"]
    x2 = norm(x, na[0], nb[0])
    x = x + mha(x2, x2, aw[0], ab[0], trg_mask)
    x2 = norm(x, na[1], nb[1])
    x = x + mha(x2, e, aw[1], ab[1], src_mask)
    x2 = norm(x, na[2], nb[2])
    h = jnp.maximum(x2 @ params["ff_w1"] + params["ff_b1"], 0.0)
    x = x + h @ params["ff_w2"] + params["ff_b2"]
    return x


if __name__ == "__main__":
    B, S, Se, D, H, Dff = 2, 8, 8, 32, 4, 64

    key = jax.random.PRNGKey(0)
    keys = jax.random.split(key, 10)

    x = jax.random.normal(keys[0], (B, S, D), jnp.float32)
    e_outputs = jax.random.normal(keys[1], (B, Se, D), jnp.float32)

    # causal target mask, padding-style source mask (last 2 positions masked)
    trg_mask = jnp.tile(jnp.tril(jnp.ones((S, S), jnp.float32))[None], (B, 1, 1))
    src_mask = jnp.ones((B, 1, Se), jnp.float32).at[:, :, -2:].set(0.0)

    params = {
        "norm_a": jnp.ones((3, D), jnp.float32),      # Norm.alpha init = ones
        "norm_b": jnp.zeros((3, D), jnp.float32),     # Norm.bias  init = zeros
        "attn_w": 0.1 * jax.random.normal(keys[2], (2, 4, D, D), jnp.float32),
        "attn_b": 0.01 * jax.random.normal(keys[3], (2, 4, D), jnp.float32),
        "ff_w1": 0.1 * jax.random.normal(keys[4], (D, Dff), jnp.float32),
        "ff_b1": 0.01 * jax.random.normal(keys[5], (1, Dff), jnp.float32),
        "ff_w2": 0.1 * jax.random.normal(keys[6], (Dff, D), jnp.float32),
        "ff_b2": 0.01 * jax.random.normal(keys[7], (1, D), jnp.float32),
    }

    out = decoder_layer(x, e_outputs, src_mask, trg_mask, params, heads=H)
    out = jax.block_until_ready(out)

    ref = reference_decoder_layer(x, e_outputs, src_mask, trg_mask, params, heads=H)
    assert out.shape == (B, S, D)
    err_max = float(jnp.max(jnp.abs(out - ref)))
    err_mean = float(jnp.mean(jnp.abs(out - ref)))
    # bf16 MXU operands + EUP approx reciprocal (softmax) vs. the pure-f32 reference
    assert err_max < 5e-2, (err_max, err_mean)
    assert err_mean < 1e-2, (err_max, err_mean)

    print("KERNEL_OK")
</pallas_src>

<mosaic_0001>
module attributes {stable_mosaic.version = 11 : i64} {
  func.func @decoder_layer_kernel(%arg0: i32, %arg1: i32, %arg2: memref<1x8x32xf32, #tpu.memory_space<vmem>>, %arg3: memref<1x4x8x8xbf16, #tpu.memory_space<vmem>>, %arg4: memref<1x4x8x8xbf16, #tpu.memory_space<vmem>>, %arg5: memref<1x4x8x8xbf16, #tpu.memory_space<vmem>>, %arg6: memref<1x4x8x8xbf16, #tpu.memory_space<vmem>>, %arg7: memref<1x1x8xf32, #tpu.memory_space<vmem>>, %arg8: memref<1x8x8xf32, #tpu.memory_space<vmem>>, %arg9: memref<3x32xf32, #tpu.memory_space<vmem>>, %arg10: memref<3x32xf32, #tpu.memory_space<vmem>>, %arg11: memref<2x32x32xbf16, #tpu.memory_space<vmem>>, %arg12: memref<2x32x32xbf16, #tpu.memory_space<vmem>>, %arg13: memref<2x32xf32, #tpu.memory_space<vmem>>, %arg14: memref<2x32xf32, #tpu.memory_space<vmem>>, %arg15: memref<32x64xbf16, #tpu.memory_space<vmem>>, %arg16: memref<1x64xf32, #tpu.memory_space<vmem>>, %arg17: memref<64x32xbf16, #tpu.memory_space<vmem>>, %arg18: memref<1x32xf32, #tpu.memory_space<vmem>>, %arg19: memref<1x8x32xf32, #tpu.memory_space<vmem>>, %arg20: memref<8x32xbf16, #tpu.memory_space<vmem>>) attributes {dimension_semantics = [#tpu.dimension_semantics<parallel>, #tpu.dimension_semantics<parallel>], iteration_bounds = array<i64: 2, 1>, scalar_prefetch = 0 : i64, scratch_operands = 1 : i64, tpu.core_type = #tpu.core_type<tc>, window_params = [{transform_indices = @transform_0, window_bounds = array<i64: 1, 8, 32>}, {transform_indices = @transform_1, window_bounds = array<i64: 1, 4, 8, 8>}, {transform_indices = @transform_2, window_bounds = array<i64: 1, 4, 8, 8>}, {transform_indices = @transform_3, window_bounds = array<i64: 1, 4, 8, 8>}, {transform_indices = @transform_4, window_bounds = array<i64: 1, 4, 8, 8>}, {transform_indices = @transform_5, window_bounds = array<i64: 1, 1, 8>}, {transform_indices = @transform_6, window_bounds = array<i64: 1, 8, 8>}, {pipeline_mode = #tpu.pipeline_mode<synchronous>, transform_indices = @transform_7, window_bounds = array<i64: 3, 32>}, {pipeline_mode = #tpu.pipeline_mode<synchronous>, transform_indices = @transform_8, window_bounds = array<i64: 3, 32>}, {pipeline_mode = #tpu.pipeline_mode<synchronous>, transform_indices = @transform_9, window_bounds = array<i64: 2, 32, 32>}, {pipeline_mode = #tpu.pipeline_mode<synchronous>, transform_indices = @transform_10, window_bounds = array<i64: 2, 32, 32>}, {pipeline_mode = #tpu.pipeline_mode<synchronous>, transform_indices = @transform_11, window_bounds = array<i64: 2, 32>}, {pipeline_mode = #tpu.pipeline_mode<synchronous>, transform_indices = @transform_12, window_bounds = array<i64: 2, 32>}, {pipeline_mode = #tpu.pipeline_mode<synchronous>, transform_indices = @transform_13, window_bounds = array<i64: 32, 64>}, {pipeline_mode = #tpu.pipeline_mode<synchronous>, transform_indices = @transform_14, window_bounds = array<i64: 1, 64>}, {pipeline_mode = #tpu.pipeline_mode<synchronous>, transform_indices = @transform_15, window_bounds = array<i64: 64, 32>}, {pipeline_mode = #tpu.pipeline_mode<synchronous>, transform_indices = @transform_16, window_bounds = array<i64: 1, 32>}, {transform_indices = @transform_17, window_bounds = array<i64: 1, 8, 32>}]} {
    %c0 = arith.constant 0 : index
    %c0_0 = arith.constant 0 : index
    %c0_1 = arith.constant 0 : index
    %0 = vector.load %arg2[%c0, %c0_0, %c0_1] : memref<1x8x32xf32, #tpu.memory_space<vmem>>, vector<1x8x32xf32>
    %1 = vector.shape_cast %0 : vector<1x8x32xf32> to vector<8x32xf32>
    %c0_2 = arith.constant 0 : index
    %c0_3 = arith.constant 0 : index
    %2 = vector.load %arg9[%c0_2, %c0_3] : memref<3x32xf32, #tpu.memory_space<vmem>>, vector<3x32xf32>
    %c0_4 = arith.constant 0 : index
    %c0_5 = arith.constant 0 : index
    %3 = vector.load %arg10[%c0_4, %c0_5] : memref<3x32xf32, #tpu.memory_space<vmem>>, vector<3x32xf32>
    %c0_6 = arith.constant 0 : index
    %c0_7 = arith.constant 0 : index
    %4 = vector.load %arg13[%c0_6, %c0_7] : memref<2x32xf32, #tpu.memory_space<vmem>>, vector<2x32xf32>
    %c0_8 = arith.constant 0 : index
    %c0_9 = arith.constant 0 : index
    %5 = vector.load %arg14[%c0_8, %c0_9] : memref<2x32xf32, #tpu.memory_space<vmem>>, vector<2x32xf32>
    %c0_10 = arith.constant 0 : index
    %c0_11 = arith.constant 0 : index
    %c0_12 = arith.constant 0 : index
    %6 = vector.load %arg8[%c0_10, %c0_11, %c0_12] : memref<1x8x8xf32, #tpu.memory_space<vmem>>, vector<1x8x8xf32>
    %7 = vector.shape_cast %6 : vector<1x8x8xf32> to vector<8x8xf32>
    %cst = arith.constant 0.000000e+00 : f32
    %8 = vector.broadcast %cst : f32 to vector<8x8xf32>
    %9 = arith.cmpf oeq, %7, %8 : vector<8x8xf32>
    %cst_13 = arith.constant -1.000000e+09 : f32
    %cst_14 = arith.constant 0.000000e+00 : f32
    %10 = vector.broadcast %cst_13 : f32 to vector<8x8xf32>
    %11 = vector.broadcast %cst_14 : f32 to vector<8x8xf32>
    %12 = arith.select %9, %10, %11 : vector<8x8xi1>, vector<8x8xf32>
    %c0_15 = arith.constant 0 : index
    %c0_16 = arith.constant 0 : index
    %c0_17 = arith.constant 0 : index
    %13 = vector.load %arg7[%c0_15, %c0_16, %c0_17] : memref<1x1x8xf32, #tpu.memory_space<vmem>>, vector<1x1x8xf32>
    %14 = vector.shape_cast %13 : vector<1x1x8xf32> to vector<1x8xf32>
    %cst_18 = arith.constant 0.000000e+00 : f32
    %15 = vector.broadcast %cst_18 : f32 to vector<1x8xf32>
    %16 = arith.cmpf oeq, %14, %15 : vector<1x8xf32>
    %cst_19 = arith.constant -1.000000e+09 : f32
    %cst_20 = arith.constant 0.000000e+00 : f32
    %17 = vector.broadcast %cst_19 : f32 to vector<1x8xf32>
    %18 = vector.broadcast %cst_20 : f32 to vector<1x8xf32>
    %19 = arith.select %16, %17, %18 : vector<1x8xi1>, vector<1x8xf32>
    %cst_21 = arith.constant dense<0.000000e+00> : vector<8xf32>
    %20 = vector.multi_reduction <add>, %1, %cst_21 [1] : vector<8x32xf32> to vector<8xf32>
    %21 = vector.shape_cast %20 : vector<8xf32> to vector<8x1xf32>
    %cst_22 = arith.constant 3.200000e+01 : f32
    %22 = vector.broadcast %cst_22 : f32 to vector<8x1xf32>
    %23 = arith.divf %21, %22 : vector<8x1xf32>
    %24 = vector.broadcast %23 : vector<8x1xf32> to vector<8x32xf32>
    %25 = arith.subf %1, %24 : vector<8x32xf32>
    %26 = arith.mulf %25, %25 : vector<8x32xf32>
    %cst_23 = arith.constant dense<0.000000e+00> : vector<8xf32>
    %27 = vector.multi_reduction <add>, %26, %cst_23 [1] : vector<8x32xf32> to vector<8xf32>
    %28 = vector.shape_cast %27 : vector<8xf32> to vector<8x1xf32>
    %cst_24 = arith.constant 0.0322580636 : f32
    %29 = vector.broadcast %cst_24 : f32 to vector<8x1xf32>
    %30 = arith.mulf %28, %29 : vector<8x1xf32>
    %31 = vector.extract_strided_slice %2 {offsets = [0, 0], sizes = [1, 32], strides = [1, 1]} : vector<3x32xf32> to vector<1x32xf32>
    %32 = math.sqrt %30 : vector<8x1xf32>
    %cst_25 = arith.constant 9.99999997E-7 : f32
    %33 = vector.broadcast %cst_25 : f32 to vector<8x1xf32>
    %34 = arith.addf %32, %33 : vector<8x1xf32>
    %35 = vector.broadcast %34 : vector<8x1xf32> to vector<8x32xf32>
    %36 = arith.divf %25, %35 : vector<8x32xf32>
    %37 = vector.broadcast %31 : vector<1x32xf32> to vector<8x32xf32>
    %38 = arith.mulf %37, %36 : vector<8x32xf32>
    %39 = vector.extract_strided_slice %3 {offsets = [0, 0], sizes = [1, 32], strides = [1, 1]} : vector<3x32xf32> to vector<1x32xf32>
    %40 = vector.broadcast %39 : vector<1x32xf32> to vector<8x32xf32>
    %41 = arith.addf %38, %40 : vector<8x32xf32>
    %42 = arith.truncf %41 : vector<8x32xf32> to vector<8x32xbf16>
    %c0_26 = arith.constant 0 : index
    %c0_27 = arith.constant 0 : index
    %c0_28 = arith.constant 0 : index
    %43 = vector.load %arg11[%c0_26, %c0_27, %c0_28] : memref<2x32x32xbf16, #tpu.memory_space<vmem>>, vector<1x32x32xbf16>
    %44 = vector.shape_cast %43 : vector<1x32x32xbf16> to vector<32x32xbf16>
    %cst_29 = arith.constant dense<0.000000e+00> : vector<8x32xf32>
    %45 = tpu.matmul %42, %44, %cst_29 {dimension_numbers = #tpu.dot_dimension_numbers<[1], [0], [0], [1], [0, 0, 1, 1], [], []>} : vector<8x32xbf16>, vector<32x32xbf16>, vector<8x32xf32> -> vector<8x32xf32>
    %46 = vector.extract_strided_slice %4 {offsets = [0, 0], sizes = [1, 32], strides = [1, 1]} : vector<2x32xf32> to vector<1x32xf32>
    %47 = vector.broadcast %46 : vector<1x32xf32> to vector<8x32xf32>
    %48 = arith.addf %45, %47 : vector<8x32xf32>
    %49 = arith.truncf %48 : vector<8x32xf32> to vector<8x32xbf16>
    %50 = vector.extract_strided_slice %49 {offsets = [0, 0], sizes = [8, 8], strides = [1, 1]} : vector<8x32xbf16> to vector<8x8xbf16>
    %c0_30 = arith.constant 0 : index
    %c0_31 = arith.constant 0 : index
    %c0_32 = arith.constant 0 : index
    %c0_33 = arith.constant 0 : index
    %51 = vector.load %arg3[%c0_30, %c0_31, %c0_32, %c0_33] : memref<1x4x8x8xbf16, #tpu.memory_space<vmem>>, vector<1x1x8x8xbf16>
    %52 = vector.shape_cast %51 : vector<1x1x8x8xbf16> to vector<8x8xbf16>
    %cst_34 = arith.constant dense<0.000000e+00> : vector<8x8xf32>
    %53 = tpu.matmul %50, %52, %cst_34 {dimension_numbers = #tpu.dot_dimension_numbers<[1], [0], [0], [1], [0, 0, 1, 1], [], []>} : vector<8x8xbf16>, vector<8x8xbf16>, vector<8x8xf32> -> vector<8x8xf32>
    %54 = arith.addf %53, %12 : vector<8x8xf32>
    %cst_35 = arith.constant dense<0xFF800000> : vector<8xf32>
    %55 = vector.multi_reduction <maximumf>, %54, %cst_35 [1] : vector<8x8xf32> to vector<8xf32>
    %56 = vector.shape_cast %55 : vector<8xf32> to vector<8x1xf32>
    %57 = vector.broadcast %56 : vector<8x1xf32> to vector<8x8xf32>
    %58 = arith.subf %54, %57 : vector<8x8xf32>
    %59 = math.exp %58 : vector<8x8xf32>
    %cst_36 = arith.constant dense<0.000000e+00> : vector<8xf32>
    %60 = vector.multi_reduction <add>, %59, %cst_36 [1] : vector<8x8xf32> to vector<8xf32>
    %61 = vector.shape_cast %60 : vector<8xf32> to vector<8x1xf32>
    %62 = tpu.reciprocal %61 {approx = true} : vector<8x1xf32> -> vector<8x1xf32>
    %63 = vector.broadcast %62 : vector<8x1xf32> to vector<8x8xf32>
    %64 = arith.mulf %59, %63 : vector<8x8xf32>
    %65 = arith.truncf %64 : vector<8x8xf32> to vector<8x8xbf16>
    %c0_37 = arith.constant 0 : index
    %c0_38 = arith.constant 0 : index
    %c0_39 = arith.constant 0 : index
    %c0_40 = arith.constant 0 : index
    %66 = vector.load %arg4[%c0_37, %c0_38, %c0_39, %c0_40] : memref<1x4x8x8xbf16, #tpu.memory_space<vmem>>, vector<1x1x8x8xbf16>
    %67 = vector.shape_cast %66 : vector<1x1x8x8xbf16> to vector<8x8xbf16>
    %cst_41 = arith.constant dense<0.000000e+00> : vector<8x8xf32>
    %68 = tpu.matmul %65, %67, %cst_41 {dimension_numbers = #tpu.dot_dimension_numbers<[1], [0], [0], [1], [0, 0, 1, 1], [], []>} : vector<8x8xbf16>, vector<8x8xbf16>, vector<8x8xf32> -> vector<8x8xf32>
    %69 = arith.truncf %68 : vector<8x8xf32> to vector<8x8xbf16>
    %c0_42 = arith.constant 0 : index
    %c0_43 = arith.constant 0 : index
    %70 = vector.load %arg20[%c0_42, %c0_43] : memref<8x32xbf16, #tpu.memory_space<vmem>>, vector<8x8xbf16>
    tpu.vector_store %arg20[%c0_42, %c0_43], %69 {strides = array<i32>} : memref<8x32xbf16, #tpu.memory_space<vmem>>, vector<8x8xbf16>,
    %71 = vector.extract_strided_slice %49 {offsets = [0, 8], sizes = [8, 8], strides = [1, 1]} : vector<8x32xbf16> to vector<8x8xbf16>
    %c0_44 = arith.constant 0 : index
    %c1 = arith.constant 1 : index
    %c0_45 = arith.constant 0 : index
    %c0_46 = arith.constant 0 : index
    %72 = vector.load %arg3[%c0_44, %c1, %c0_45, %c0_46] : memref<1x4x8x8xbf16, #tpu.memory_space<vmem>>, vector<1x1x8x8xbf16>
    %73 = vector.shape_cast %72 : vector<1x1x8x8xbf16> to vector<8x8xbf16>
    %cst_47 = arith.constant dense<0.000000e+00> : vector<8x8xf32>
    %74 = tpu.matmul %71, %73, %cst_47 {dimension_numbers = #tpu.dot_dimension_numbers<[1], [0], [0], [1], [0, 0, 1, 1], [], []>} : vector<8x8xbf16>, vector<8x8xbf16>, vector<8x8xf32> -> vector<8x8xf32>
    %75 = arith.addf %74, %12 : vector<8x8xf32>
    %cst_48 = arith.constant dense<0xFF800000> : vector<8xf32>
    %76 = vector.multi_reduction <maximumf>, %75, %cst_48 [1] : vector<8x8xf32> to vector<8xf32>
    %77 = vector.shape_cast %76 : vector<8xf32> to vector<8x1xf32>
    %78 = vector.broadcast %77 : vector<8x1xf32> to vector<8x8xf32>
    %79 = arith.subf %75, %78 : vector<8x8xf32>
    %80 = math.exp %79 : vector<8x8xf32>
    %cst_49 = arith.constant dense<0.000000e+00> : vector<8xf32>
    %81 = vector.multi_reduction <add>, %80, %cst_49 [1] : vector<8x8xf32> to vector<8xf32>
    %82 = vector.shape_cast %81 : vector<8xf32> to vector<8x1xf32>
    %83 = tpu.reciprocal %82 {approx = true} : vector<8x1xf32> -> vector<8x1xf32>
    %84 = vector.broadcast %83 : vector<8x1xf32> to vector<8x8xf32>
    %85 = arith.mulf %80, %84 : vector<8x8xf32>
    %86 = arith.truncf %85 : vector<8x8xf32> to vector<8x8xbf16>
    %c0_50 = arith.constant 0 : index
    %c1_51 = arith.constant 1 : index
    %c0_52 = arith.constant 0 : index
    %c0_53 = arith.constant 0 : index
    %87 = vector.load %arg4[%c0_50, %c1_51, %c0_52, %c0_53] : memref<1x4x8x8xbf16, #tpu.memory_space<vmem>>, vector<1x1x8x8xbf16>
    %88 = vector.shape_cast %87 : vector<1x1x8x8xbf16> to vector<8x8xbf16>
    %cst_54 = arith.constant dense<0.000000e+00> : vector<8x8xf32>
    %89 = tpu.matmul %86, %88, %cst_54 {dimension_numbers = #tpu.dot_dimension_numbers<[1], [0], [0], [1], [0, 0, 1, 1], [], []>} : vector<8x8xbf16>, vector<8x8xbf16>, vector<8x8xf32> -> vector<8x8xf32>
    %90 = arith.truncf %89 : vector<8x8xf32> to vector<8x8xbf16>
    %c0_55 = arith.constant 0 : index
    %c8 = arith.constant 8 : index
    %91 = vector.load %arg20[%c0_55, %c8] : memref<8x32xbf16, #tpu.memory_space<vmem>>, vector<8x8xbf16>
    tpu.vector_store %arg20[%c0_55, %c8], %90 {strides = array<i32>} : memref<8x32xbf16, #tpu.memory_space<vmem>>, vector<8x8xbf16>,
    %92 = vector.extract_strided_slice %49 {offsets = [0, 16], sizes = [8, 8], strides = [1, 1]} : vector<8x32xbf16> to vector<8x8xbf16>
    %c0_56 = arith.constant 0 : index
    %c2 = arith.constant 2 : index
    %c0_57 = arith.constant 0 : index
    %c0_58 = arith.constant 0 : index
    %93 = vector.load %arg3[%c0_56, %c2, %c0_57, %c0_58] : memref<1x4x8x8xbf16, #tpu.memory_space<vmem>>, vector<1x1x8x8xbf16>
    %94 = vector.shape_cast %93 : vector<1x1x8x8xbf16> to vector<8x8xbf16>
    %cst_59 = arith.constant dense<0.000000e+00> : vector<8x8xf32>
    %95 = tpu.matmul %92, %94, %cst_59 {dimension_numbers = #tpu.dot_dimension_numbers<[1], [0], [0], [1], [0, 0, 1, 1], [], []>} : vector<8x8xbf16>, vector<8x8xbf16>, vector<8x8xf32> -> vector<8x8xf32>
    %96 = arith.addf %95, %12 : vector<8x8xf32>
    %cst_60 = arith.constant dense<0xFF800000> : vector<8xf32>
    %97 = vector.multi_reduction <maximumf>, %96, %cst_60 [1] : vector<8x8xf32> to vector<8xf32>
    %98 = vector.shape_cast %97 : vector<8xf32> to vector<8x1xf32>
    %99 = vector.broadcast %98 : vector<8x1xf32> to vector<8x8xf32>
    %100 = arith.subf %96, %99 : vector<8x8xf32>
    %101 = math.exp %100 : vector<8x8xf32>
    %cst_61 = arith.constant dense<0.000000e+00> : vector<8xf32>
    %102 = vector.multi_reduction <add>, %101, %cst_61 [1] : vector<8x8xf32> to vector<8xf32>
    %103 = vector.shape_cast %102 : vector<8xf32> to vector<8x1xf32>
    %104 = tpu.reciprocal %103 {approx = true} : vector<8x1xf32> -> vector<8x1xf32>
    %105 = vector.broadcast %104 : vector<8x1xf32> to vector<8x8xf32>
    %106 = arith.mulf %101, %105 : vector<8x8xf32>
    %107 = arith.truncf %106 : vector<8x8xf32> to vector<8x8xbf16>
    %c0_62 = arith.constant 0 : index
    %c2_63 = arith.constant 2 : index
    %c0_64 = arith.constant 0 : index
    %c0_65 = arith.constant 0 : index
    %108 = vector.load %arg4[%c0_62, %c2_63, %c0_64, %c0_65] : memref<1x4x8x8xbf16, #tpu.memory_space<vmem>>, vector<1x1x8x8xbf16>
    %109 = vector.shape_cast %108 : vector<1x1x8x8xbf16> to vector<8x8xbf16>
    %cst_66 = arith.constant dense<0.000000e+00> : vector<8x8xf32>
    %110 = tpu.matmul %107, %109, %cst_66 {dimension_numbers = #tpu.dot_dimension_numbers<[1], [0], [0], [1], [0, 0, 1, 1], [], []>} : vector<8x8xbf16>, vector<8x8xbf16>, vector<8x8xf32> -> vector<8x8xf32>
    %111 = arith.truncf %110 : vector<8x8xf32> to vector<8x8xbf16>
    %c0_67 = arith.constant 0 : index
    %c16 = arith.constant 16 : index
    %112 = vector.load %arg20[%c0_67, %c16] : memref<8x32xbf16, #tpu.memory_space<vmem>>, vector<8x8xbf16>
    tpu.vector_store %arg20[%c0_67, %c16], %111 {strides = array<i32>} : memref<8x32xbf16, #tpu.memory_space<vmem>>, vector<8x8xbf16>,
    %113 = vector.extract_strided_slice %49 {offsets = [0, 24], sizes = [8, 8], strides = [1, 1]} : vector<8x32xbf16> to vector<8x8xbf16>
    %c0_68 = arith.constant 0 : index
    %c3 = arith.constant 3 : index
    %c0_69 = arith.constant 0 : index
    %c0_70 = arith.constant 0 : index
    %114 = vector.load %arg3[%c0_68, %c3, %c0_69, %c0_70] : memref<1x4x8x8xbf16, #tpu.memory_space<vmem>>, vector<1x1x8x8xbf16>
    %115 = vector.shape_cast %114 : vector<1x1x8x8xbf16> to vector<8x8xbf16>
    %cst_71 = arith.constant dense<0.000000e+00> : vector<8x8xf32>
    %116 = tpu.matmul %113, %115, %cst_71 {dimension_numbers = #tpu.dot_dimension_numbers<[1], [0], [0], [1], [0, 0, 1, 1], [], []>} : vector<8x8xbf16>, vector<8x8xbf16>, vector<8x8xf32> -> vector<8x8xf32>
    %117 = arith.addf %116, %12 : vector<8x8xf32>
    %cst_72 = arith.constant dense<0xFF800000> : vector<8xf32>
    %118 = vector.multi_reduction <maximumf>, %117, %cst_72 [1] : vector<8x8xf32> to vector<8xf32>
    %119 = vector.shape_cast %118 : vector<8xf32> to vector<8x1xf32>
    %120 = vector.broadcast %119 : vector<8x1xf32> to vector<8x8xf32>
    %121 = arith.subf %117, %120 : vector<8x8xf32>
    %122 = math.exp %121 : vector<8x8xf32>
    %cst_73 = arith.constant dense<0.000000e+00> : vector<8xf32>
    %123 = vector.multi_reduction <add>, %122, %cst_73 [1] : vector<8x8xf32> to vector<8xf32>
    %124 = vector.shape_cast %123 : vector<8xf32> to vector<8x1xf32>
    %125 = tpu.reciprocal %124 {approx = true} : vector<8x1xf32> -> vector<8x1xf32>
    %126 = vector.broadcast %125 : vector<8x1xf32> to vector<8x8xf32>
    %127 = arith.mulf %122, %126 : vector<8x8xf32>
    %128 = arith.truncf %127 : vector<8x8xf32> to vector<8x8xbf16>
    %c0_74 = arith.constant 0 : index
    %c3_75 = arith.constant 3 : index
    %c0_76 = arith.constant 0 : index
    %c0_77 = arith.constant 0 : index
    %129 = vector.load %arg4[%c0_74, %c3_75, %c0_76, %c0_77] : memref<1x4x8x8xbf16, #tpu.memory_space<vmem>>, vector<1x1x8x8xbf16>
    %130 = vector.shape_cast %129 : vector<1x1x8x8xbf16> to vector<8x8xbf16>
    %cst_78 = arith.constant dense<0.000000e+00> : vector<8x8xf32>
    %131 = tpu.matmul %128, %130, %cst_78 {dimension_numbers = #tpu.dot_dimension_numbers<[1], [0], [0], [1], [0, 0, 1, 1], [], []>} : vector<8x8xbf16>, vector<8x8xbf16>, vector<8x8xf32> -> vector<8x8xf32>
    %132 = arith.truncf %131 : vector<8x8xf32> to vector<8x8xbf16>
    %c0_79 = arith.constant 0 : index
    %c24 = arith.constant 24 : index
    %133 = vector.load %arg20[%c0_79, %c24] : memref<8x32xbf16, #tpu.memory_space<vmem>>, vector<8x8xbf16>
    tpu.vector_store %arg20[%c0_79, %c24], %132 {strides = array<i32>} : memref<8x32xbf16, #tpu.memory_space<vmem>>, vector<8x8xbf16>,
    %c0_80 = arith.constant 0 : index
    %c0_81 = arith.constant 0 : index
    %134 = vector.load %arg20[%c0_80, %c0_81] : memref<8x32xbf16, #tpu.memory_space<vmem>>, vector<8x32xbf16>
    %c0_82 = arith.constant 0 : index
    %c0_83 = arith.constant 0 : index
    %c0_84 = arith.constant 0 : index
    %135 = vector.load %arg12[%c0_82, %c0_83, %c0_84] : memref<2x32x32xbf16, #tpu.memory_space<vmem>>, vector<1x32x32xbf16>
    %136 = vector.shape_cast %135 : vector<1x32x32xbf16> to vector<32x32xbf16>
    %cst_85 = arith.constant dense<0.000000e+00> : vector<8x32xf32>
    %137 = tpu.matmul %134, %136, %cst_85 {dimension_numbers = #tpu.dot_dimension_numbers<[1], [0], [0], [1], [0, 0, 1, 1], [], []>} : vector<8x32xbf16>, vector<32x32xbf16>, vector<8x32xf32> -> vector<8x32xf32>
    %138 = vector.extract_strided_slice %5 {offsets = [0, 0], sizes = [1, 32], strides = [1, 1]} : vector<2x32xf32> to vector<1x32xf32>
    %139 = vector.broadcast %138 : vector<1x32xf32> to vector<8x32xf32>
    %140 = arith.addf %137, %139 : vector<8x32xf32>
    %141 = arith.addf %1, %140 : vector<8x32xf32>
    %cst_86 = arith.constant dense<0.000000e+00> : vector<8xf32>
    %142 = vector.multi_reduction <add>, %141, %cst_86 [1] : vector<8x32xf32> to vector<8xf32>
    %143 = vector.shape_cast %142 : vector<8xf32> to vector<8x1xf32>
    %cst_87 = arith.constant 3.200000e+01 : f32
    %144 = vector.broadcast %cst_87 : f32 to vector<8x1xf32>
    %145 = arith.divf %143, %144 : vector<8x1xf32>
    %146 = vector.broadcast %145 : vector<8x1xf32> to vector<8x32xf32>
    %147 = arith.subf %141, %146 : vector<8x32xf32>
    %148 = arith.mulf %147, %147 : vector<8x32xf32>
    %cst_88 = arith.constant dense<0.000000e+00> : vector<8xf32>
    %149 = vector.multi_reduction <add>, %148, %cst_88 [1] : vector<8x32xf32> to vector<8xf32>
    %150 = vector.shape_cast %149 : vector<8xf32> to vector<8x1xf32>
    %cst_89 = arith.constant 0.0322580636 : f32
    %151 = vector.broadcast %cst_89 : f32 to vector<8x1xf32>
    %152 = arith.mulf %150, %151 : vector<8x1xf32>
    %153 = vector.extract_strided_slice %2 {offsets = [1, 0], sizes = [1, 32], strides = [1, 1]} : vector<3x32xf32> to vector<1x32xf32>
    %154 = math.sqrt %152 : vector<8x1xf32>
    %cst_90 = arith.constant 9.99999997E-7 : f32
    %155 = vector.broadcast %cst_90 : f32 to vector<8x1xf32>
    %156 = arith.addf %154, %155 : vector<8x1xf32>
    %157 = vector.broadcast %156 : vector<8x1xf32> to vector<8x32xf32>
    %158 = arith.divf %147, %157 : vector<8x32xf32>
    %159 = vector.broadcast %153 : vector<1x32xf32> to vector<8x32xf32>
    %160 = arith.mulf %159, %158 : vector<8x32xf32>
    %161 = vector.extract_strided_slice %3 {offsets = [1, 0], sizes = [1, 32], strides = [1, 1]} : vector<3x32xf32> to vector<1x32xf32>
    %162 = vector.broadcast %161 : vector<1x32xf32> to vector<8x32xf32>
    %163 = arith.addf %160, %162 : vector<8x32xf32>
    %164 = arith.truncf %163 : vector<8x32xf32> to vector<8x32xbf16>
    %c1_91 = arith.constant 1 : index
    %c0_92 = arith.constant 0 : index
    %c0_93 = arith.constant 0 : index
    %165 = vector.load %arg11[%c1_91, %c0_92, %c0_93] : memref<2x32x32xbf16, #tpu.memory_space<vmem>>, vector<1x32x32xbf16>
    %166 = vector.shape_cast %165 : vector<1x32x32xbf16> to vector<32x32xbf16>
    %cst_94 = arith.constant dense<0.000000e+00> : vector<8x32xf32>
    %167 = tpu.matmul %164, %166, %cst_94 {dimension_numbers = #tpu.dot_dimension_numbers<[1], [0], [0], [1], [0, 0, 1, 1], [], []>} : vector<8x32xbf16>, vector<32x32xbf16>, vector<8x32xf32> -> vector<8x32xf32>
    %168 = vector.extract_strided_slice %4 {offsets = [1, 0], sizes = [1, 32], strides = [1, 1]} : vector<2x32xf32> to vector<1x32xf32>
    %169 = vector.broadcast %168 : vector<1x32xf32> to vector<8x32xf32>
    %170 = arith.addf %167, %169 : vector<8x32xf32>
    %171 = arith.truncf %170 : vector<8x32xf32> to vector<8x32xbf16>
    %172 = vector.extract_strided_slice %171 {offsets = [0, 0], sizes = [8, 8], strides = [1, 1]} : vector<8x32xbf16> to vector<8x8xbf16>
    %c0_95 = arith.constant 0 : index
    %c0_96 = arith.constant 0 : index
    %c0_97 = arith.constant 0 : index
    %c0_98 = arith.constant 0 : index
    %173 = vector.load %arg5[%c0_95, %c0_96, %c0_97, %c0_98] : memref<1x4x8x8xbf16, #tpu.memory_space<vmem>>, vector<1x1x8x8xbf16>
    %174 = vector.shape_cast %173 : vector<1x1x8x8xbf16> to vector<8x8xbf16>
    %cst_99 = arith.constant dense<0.000000e+00> : vector<8x8xf32>
    %175 = tpu.matmul %172, %174, %cst_99 {dimension_numbers = #tpu.dot_dimension_numbers<[1], [0], [0], [1], [0, 0, 1, 1], [], []>} : vector<8x8xbf16>, vector<8x8xbf16>, vector<8x8xf32> -> vector<8x8xf32>
    %176 = vector.broadcast %19 : vector<1x8xf32> to vector<8x8xf32>
    %177 = arith.addf %175, %176 : vector<8x8xf32>
    %cst_100 = arith.constant dense<0xFF800000> : vector<8xf32>
    %178 = vector.multi_reduction <maximumf>, %177, %cst_100 [1] : vector<8x8xf32> to vector<8xf32>
    %179 = vector.shape_cast %178 : vector<8xf32> to vector<8x1xf32>
    %180 = vector.broadcast %179 : vector<8x1xf32> to vector<8x8xf32>
    %181 = arith.subf %177, %180 : vector<8x8xf32>
    %182 = math.exp %181 : vector<8x8xf32>
    %cst_101 = arith.constant dense<0.000000e+00> : vector<8xf32>
    %183 = vector.multi_reduction <add>, %182, %cst_101 [1] : vector<8x8xf32> to vector<8xf32>
    %184 = vector.shape_cast %183 : vector<8xf32> to vector<8x1xf32>
    %185 = tpu.reciprocal %184 {approx = true} : vector<8x1xf32> -> vector<8x1xf32>
    %186 = vector.broadcast %185 : vector<8x1xf32> to vector<8x8xf32>
    %187 = arith.mulf %182, %186 : vector<8x8xf32>
    %188 = arith.truncf %187 : vector<8x8xf32> to vector<8x8xbf16>
    %c0_102 = arith.constant 0 : index
    %c0_103 = arith.constant 0 : index
    %c0_104 = arith.constant 0 : index
    %c0_105 = arith.constant 0 : index
    %189 = vector.load %arg6[%c0_102, %c0_103, %c0_104, %c0_105] : memref<1x4x8x8xbf16, #tpu.memory_space<vmem>>, vector<1x1x8x8xbf16>
    %190 = vector.shape_cast %189 : vector<1x1x8x8xbf16> to vector<8x8xbf16>
    %cst_106 = arith.constant dense<0.000000e+00> : vector<8x8xf32>
    %191 = tpu.matmul %188, %190, %cst_106 {dimension_numbers = #tpu.dot_dimension_numbers<[1], [0], [0], [1], [0, 0, 1, 1], [], []>} : vector<8x8xbf16>, vector<8x8xbf16>, vector<8x8xf32> -> vector<8x8xf32>
    %192 = arith.truncf %191 : vector<8x8xf32> to vector<8x8xbf16>
    %c0_107 = arith.constant 0 : index
    %c0_108 = arith.constant 0 : index
    %193 = vector.load %arg20[%c0_107, %c0_108] : memref<8x32xbf16, #tpu.memory_space<vmem>>, vector<8x8xbf16>
    tpu.vector_store %arg20[%c0_107, %c0_108], %192 {strides = array<i32>} : memref<8x32xbf16, #tpu.memory_space<vmem>>, vector<8x8xbf16>,
    %194 = vector.extract_strided_slice %171 {offsets = [0, 8], sizes = [8, 8], strides = [1, 1]} : vector<8x32xbf16> to vector<8x8xbf16>
    %c0_109 = arith.constant 0 : index
    %c1_110 = arith.constant 1 : index
    %c0_111 = arith.constant 0 : index
    %c0_112 = arith.constant 0 : index
    %195 = vector.load %arg5[%c0_109, %c1_110, %c0_111, %c0_112] : memref<1x4x8x8xbf16, #tpu.memory_space<vmem>>, vector<1x1x8x8xbf16>
    %196 = vector.shape_cast %195 : vector<1x1x8x8xbf16> to vector<8x8xbf16>
    %cst_113 = arith.constant dense<0.000000e+00> : vector<8x8xf32>
    %197 = tpu.matmul %194, %196, %cst_113 {dimension_numbers = #tpu.dot_dimension_numbers<[1], [0], [0], [1], [0, 0, 1, 1], [], []>} : vector<8x8xbf16>, vector<8x8xbf16>, vector<8x8xf32> -> vector<8x8xf32>
    %198 = vector.broadcast %19 : vector<1x8xf32> to vector<8x8xf32>
    %199 = arith.addf %197, %198 : vector<8x8xf32>
    %cst_114 = arith.constant dense<0xFF800000> : vector<8xf32>
    %200 = vector.multi_reduction <maximumf>, %199, %cst_114 [1] : vector<8x8xf32> to vector<8xf32>
    %201 = vector.shape_cast %200 : vector<8xf32> to vector<8x1xf32>
    %202 = vector.broadcast %201 : vector<8x1xf32> to vector<8x8xf32>
    %203 = arith.subf %199, %202 : vector<8x8xf32>
    %204 = math.exp %203 : vector<8x8xf32>
    %cst_115 = arith.constant dense<0.000000e+00> : vector<8xf32>
    %205 = vector.multi_reduction <add>, %204, %cst_115 [1] : vector<8x8xf32> to vector<8xf32>
    %206 = vector.shape_cast %205 : vector<8xf32> to vector<8x1xf32>
    %207 = tpu.reciprocal %206 {approx = true} : vector<8x1xf32> -> vector<8x1xf32>
    %208 = vector.broadcast %207 : vector<8x1xf32> to vector<8x8xf32>
    %209 = arith.mulf %204, %208 : vector<8x8xf32>
    %210 = arith.truncf %209 : vector<8x8xf32> to vector<8x8xbf16>
    %c0_116 = arith.constant 0 : index
    %c1_117 = arith.constant 1 : index
    %c0_118 = arith.constant 0 : index
    %c0_119 = arith.constant 0 : index
    %211 = vector.load %arg6[%c0_116, %c1_117, %c0_118, %c0_119] : memref<1x4x8x8xbf16, #tpu.memory_space<vmem>>, vector<1x1x8x8xbf16>
    %212 = vector.shape_cast %211 : vector<1x1x8x8xbf16> to vector<8x8xbf16>
    %cst_120 = arith.constant dense<0.000000e+00> : vector<8x8xf32>
    %213 = tpu.matmul %210, %212, %cst_120 {dimension_numbers = #tpu.dot_dimension_numbers<[1], [0], [0], [1], [0, 0, 1, 1], [], []>} : vector<8x8xbf16>, vector<8x8xbf16>, vector<8x8xf32> -> vector<8x8xf32>
    %214 = arith.truncf %213 : vector<8x8xf32> to vector<8x8xbf16>
    %c0_121 = arith.constant 0 : index
    %c8_122 = arith.constant 8 : index
    %215 = vector.load %arg20[%c0_121, %c8_122] : memref<8x32xbf16, #tpu.memory_space<vmem>>, vector<8x8xbf16>
    tpu.vector_store %arg20[%c0_121, %c8_122], %214 {strides = array<i32>} : memref<8x32xbf16, #tpu.memory_space<vmem>>, vector<8x8xbf16>,
    %216 = vector.extract_strided_slice %171 {offsets = [0, 16], sizes = [8, 8], strides = [1, 1]} : vector<8x32xbf16> to vector<8x8xbf16>
    %c0_123 = arith.constant 0 : index
    %c2_124 = arith.constant 2 : index
    %c0_125 = arith.constant 0 : index
    %c0_126 = arith.constant 0 : index
    %217 = vector.load %arg5[%c0_123, %c2_124, %c0_125, %c0_126] : memref<1x4x8x8xbf16, #tpu.memory_space<vmem>>, vector<1x1x8x8xbf16>
    %218 = vector.shape_cast %217 : vector<1x1x8x8xbf16> to vector<8x8xbf16>
    %cst_127 = arith.constant dense<0.000000e+00> : vector<8x8xf32>
    %219 = tpu.matmul %216, %218, %cst_127 {dimension_numbers = #tpu.dot_dimension_numbers<[1], [0], [0], [1], [0, 0, 1, 1], [], []>} : vector<8x8xbf16>, vector<8x8xbf16>, vector<8x8xf32> -> vector<8x8xf32>
    %220 = vector.broadcast %19 : vector<1x8xf32> to vector<8x8xf32>
    %221 = arith.addf %219, %220 : vector<8x8xf32>
    %cst_128 = arith.constant dense<0xFF800000> : vector<8xf32>
    %222 = vector.multi_reduction <maximumf>, %221, %cst_128 [1] : vector<8x8xf32> to vector<8xf32>
    %223 = vector.shape_cast %222 : vector<8xf32> to vector<8x1xf32>
    %224 = vector.broadcast %223 : vector<8x1xf32> to vector<8x8xf32>
    %225 = arith.subf %221, %224 : vector<8x8xf32>
    %226 = math.exp %225 : vector<8x8xf32>
    %cst_129 = arith.constant dense<0.000000e+00> : vector<8xf32>
    %227 = vector.multi_reduction <add>, %226, %cst_129 [1] : vector<8x8xf32> to vector<8xf32>
    %228 = vector.shape_cast %227 : vector<8xf32> to vector<8x1xf32>
    %229 = tpu.reciprocal %228 {approx = true} : vector<8x1xf32> -> vector<8x1xf32>
    %230 = vector.broadcast %229 : vector<8x1xf32> to vector<8x8xf32>
    %231 = arith.mulf %226, %230 : vector<8x8xf32>
    %232 = arith.truncf %231 : vector<8x8xf32> to vector<8x8xbf16>
    %c0_130 = arith.constant 0 : index
    %c2_131 = arith.constant 2 : index
    %c0_132 = arith.constant 0 : index
    %c0_133 = arith.constant 0 : index
    %233 = vector.load %arg6[%c0_130, %c2_131, %c0_132, %c0_133] : memref<1x4x8x8xbf16, #tpu.memory_space<vmem>>, vector<1x1x8x8xbf16>
    %234 = vector.shape_cast %233 : vector<1x1x8x8xbf16> to vector<8x8xbf16>
    %cst_134 = arith.constant dense<0.000000e+00> : vector<8x8xf32>
    %235 = tpu.matmul %232, %234, %cst_134 {dimension_numbers = #tpu.dot_dimension_numbers<[1], [0], [0], [1], [0, 0, 1, 1], [], []>} : vector<8x8xbf16>, vector<8x8xbf16>, vector<8x8xf32> -> vector<8x8xf32>
    %236 = arith.truncf %235 : vector<8x8xf32> to vector<8x8xbf16>
    %c0_135 = arith.constant 0 : index
    %c16_136 = arith.constant 16 : index
    %237 = vector.load %arg20[%c0_135, %c16_136] : memref<8x32xbf16, #tpu.memory_space<vmem>>, vector<8x8xbf16>
    tpu.vector_store %arg20[%c0_135, %c16_136], %236 {strides = array<i32>} : memref<8x32xbf16, #tpu.memory_space<vmem>>, vector<8x8xbf16>,
    %238 = vector.extract_strided_slice %171 {offsets = [0, 24], sizes = [8, 8], strides = [1, 1]} : vector<8x32xbf16> to vector<8x8xbf16>
    %c0_137 = arith.constant 0 : index
    %c3_138 = arith.constant 3 : index
    %c0_139 = arith.constant 0 : index
    %c0_140 = arith.constant 0 : index
    %239 = vector.load %arg5[%c0_137, %c3_138, %c0_139, %c0_140] : memref<1x4x8x8xbf16, #tpu.memory_space<vmem>>, vector<1x1x8x8xbf16>
    %240 = vector.shape_cast %239 : vector<1x1x8x8xbf16> to vector<8x8xbf16>
    %cst_141 = arith.constant dense<0.000000e+00> : vector<8x8xf32>
    %241 = tpu.matmul %238, %240, %cst_141 {dimension_numbers = #tpu.dot_dimension_numbers<[1], [0], [0], [1], [0, 0, 1, 1], [], []>} : vector<8x8xbf16>, vector<8x8xbf16>, vector<8x8xf32> -> vector<8x8xf32>
    %242 = vector.broadcast %19 : vector<1x8xf32> to vector<8x8xf32>
    %243 = arith.addf %241, %242 : vector<8x8xf32>
    %cst_142 = arith.constant dense<0xFF800000> : vector<8xf32>
    %244 = vector.multi_reduction <maximumf>, %243, %cst_142 [1] : vector<8x8xf32> to vector<8xf32>
    %245 = vector.shape_cast %244 : vector<8xf32> to vector<8x1xf32>
    %246 = vector.broadcast %245 : vector<8x1xf32> to vector<8x8xf32>
    %247 = arith.subf %243, %246 : vector<8x8xf32>
    %248 = math.exp %247 : vector<8x8xf32>
    %cst_143 = arith.constant dense<0.000000e+00> : vector<8xf32>
    %249 = vector.multi_reduction <add>, %248, %cst_143 [1] : vector<8x8xf32> to vector<8xf32>
    %250 = vector.shape_cast %249 : vector<8xf32> to vector<8x1xf32>
    %251 = tpu.reciprocal %250 {approx = true} : vector<8x1xf32> -> vector<8x1xf32>
    %252 = vector.broadcast %251 : vector<8x1xf32> to vector<8x8xf32>
    %253 = arith.mulf %248, %252 : vector<8x8xf32>
    %254 = arith.truncf %253 : vector<8x8xf32> to vector<8x8xbf16>
    %c0_144 = arith.constant 0 : index
    %c3_145 = arith.constant 3 : index
    %c0_146 = arith.constant 0 : index
    %c0_147 = arith.constant 0 : index
    %255 = vector.load %arg6[%c0_144, %c3_145, %c0_146, %c0_147] : memref<1x4x8x8xbf16, #tpu.memory_space<vmem>>, vector<1x1x8x8xbf16>
    %256 = vector.shape_cast %255 : vector<1x1x8x8xbf16> to vector<8x8xbf16>
    %cst_148 = arith.constant dense<0.000000e+00> : vector<8x8xf32>
    %257 = tpu.matmul %254, %256, %cst_148 {dimension_numbers = #tpu.dot_dimension_numbers<[1], [0], [0], [1], [0, 0, 1, 1], [], []>} : vector<8x8xbf16>, vector<8x8xbf16>, vector<8x8xf32> -> vector<8x8xf32>
    %258 = arith.truncf %257 : vector<8x8xf32> to vector<8x8xbf16>
    %c0_149 = arith.constant 0 : index
    %c24_150 = arith.constant 24 : index
    %259 = vector.load %arg20[%c0_149, %c24_150] : memref<8x32xbf16, #tpu.memory_space<vmem>>, vector<8x8xbf16>
    tpu.vector_store %arg20[%c0_149, %c24_150], %258 {strides = array<i32>} : memref<8x32xbf16, #tpu.memory_space<vmem>>, vector<8x8xbf16>,
    %c0_151 = arith.constant 0 : index
    %c0_152 = arith.constant 0 : index
    %260 = vector.load %arg20[%c0_151, %c0_152] : memref<8x32xbf16, #tpu.memory_space<vmem>>, vector<8x32xbf16>
    %c1_153 = arith.constant 1 : index
    %c0_154 = arith.constant 0 : index
    %c0_155 = arith.constant 0 : index
    %261 = vector.load %arg12[%c1_153, %c0_154, %c0_155] : memref<2x32x32xbf16, #tpu.memory_space<vmem>>, vector<1x32x32xbf16>
    %262 = vector.shape_cast %261 : vector<1x32x32xbf16> to vector<32x32xbf16>
    %cst_156 = arith.constant dense<0.000000e+00> : vector<8x32xf32>
    %263 = tpu.matmul %260, %262, %cst_156 {dimension_numbers = #tpu.dot_dimension_numbers<[1], [0], [0], [1], [0, 0, 1, 1], [], []>} : vector<8x32xbf16>, vector<32x32xbf16>, vector<8x32xf32> -> vector<8x32xf32>
    %264 = vector.extract_strided_slice %5 {offsets = [1, 0], sizes = [1, 32], strides = [1, 1]} : vector<2x32xf32> to vector<1x32xf32>
    %265 = vector.broadcast %264 : vector<1x32xf32> to vector<8x32xf32>
    %266 = arith.addf %263, %265 : vector<8x32xf32>
    %267 = arith.addf %141, %266 : vector<8x32xf32>
    %cst_157 = arith.constant dense<0.000000e+00> : vector<8xf32>
    %268 = vector.multi_reduction <add>, %267, %cst_157 [1] : vector<8x32xf32> to vector<8xf32>
    %269 = vector.shape_cast %268 : vector<8xf32> to vector<8x1xf32>
    %cst_158 = arith.constant 3.200000e+01 : f32
    %270 = vector.broadcast %cst_158 : f32 to vector<8x1xf32>
    %271 = arith.divf %269, %270 : vector<8x1xf32>
    %272 = vector.broadcast %271 : vector<8x1xf32> to vector<8x32xf32>
    %273 = arith.subf %267, %272 : vector<8x32xf32>
    %274 = arith.mulf %273, %273 : vector<8x32xf32>
    %cst_159 = arith.constant dense<0.000000e+00> : vector<8xf32>
    %275 = vector.multi_reduction <add>, %274, %cst_159 [1] : vector<8x32xf32> to vector<8xf32>
    %276 = vector.shape_cast %275 : vector<8xf32> to vector<8x1xf32>
    %cst_160 = arith.constant 0.0322580636 : f32
    %277 = vector.broadcast %cst_160 : f32 to vector<8x1xf32>
    %278 = arith.mulf %276, %277 : vector<8x1xf32>
    %279 = vector.extract_strided_slice %2 {offsets = [2, 0], sizes = [1, 32], strides = [1, 1]} : vector<3x32xf32> to vector<1x32xf32>
    %280 = math.sqrt %278 : vector<8x1xf32>
    %cst_161 = arith.constant 9.99999997E-7 : f32
    %281 = vector.broadcast %cst_161 : f32 to vector<8x1xf32>
    %282 = arith.addf %280, %281 : vector<8x1xf32>
    %283 = vector.broadcast %282 : vector<8x1xf32> to vector<8x32xf32>
    %284 = arith.divf %273, %283 : vector<8x32xf32>
    %285 = vector.broadcast %279 : vector<1x32xf32> to vector<8x32xf32>
    %286 = arith.mulf %285, %284 : vector<8x32xf32>
    %287 = vector.extract_strided_slice %3 {offsets = [2, 0], sizes = [1, 32], strides = [1, 1]} : vector<3x32xf32> to vector<1x32xf32>
    %288 = vector.broadcast %287 : vector<1x32xf32> to vector<8x32xf32>
    %289 = arith.addf %286, %288 : vector<8x32xf32>
    %290 = arith.truncf %289 : vector<8x32xf32> to vector<8x32xbf16>
    %c0_162 = arith.constant 0 : index
    %c0_163 = arith.constant 0 : index
    %291 = vector.load %arg15[%c0_162, %c0_163] : memref<32x64xbf16, #tpu.memory_space<vmem>>, vector<32x64xbf16>
    %cst_164 = arith.constant dense<0.000000e+00> : vector<8x64xf32>
    %292 = tpu.matmul %290, %291, %cst_164 {dimension_numbers = #tpu.dot_dimension_numbers<[1], [0], [0], [1], [0, 0, 1, 1], [], []>} : vector<8x32xbf16>, vector<32x64xbf16>, vector<8x64xf32> -> vector<8x64xf32>
    %c0_165 = arith.constant 0 : index
    %c0_166 = arith.constant 0 : index
    %293 = vector.load %arg16[%c0_165, %c0_166] : memref<1x64xf32, #tpu.memory_space<vmem>>, vector<1x64xf32>
    %294 = vector.broadcast %293 : vector<1x64xf32> to vector<8x64xf32>
    %295 = arith.addf %292, %294 : vector<8x64xf32>
    %cst_167 = arith.constant 0.000000e+00 : f32
    %296 = vector.broadcast %cst_167 : f32 to vector<8x64xf32>
    %297 = arith.maximumf %295, %296 : vector<8x64xf32>
    %298 = arith.truncf %297 : vector<8x64xf32> to vector<8x64xbf16>
    %c0_168 = arith.constant 0 : index
    %c0_169 = arith.constant 0 : index
    %299 = vector.load %arg17[%c0_168, %c0_169] : memref<64x32xbf16, #tpu.memory_space<vmem>>, vector<64x32xbf16>
    %cst_170 = arith.constant dense<0.000000e+00> : vector<8x32xf32>
    %300 = tpu.matmul %298, %299, %cst_170 {dimension_numbers = #tpu.dot_dimension_numbers<[1], [0], [0], [1], [0, 0, 1, 1], [], []>} : vector<8x64xbf16>, vector<64x32xbf16>, vector<8x32xf32> -> vector<8x32xf32>
    %301 = arith.addf %267, %300 : vector<8x32xf32>
    %c0_171 = arith.constant 0 : index
    %c0_172 = arith.constant 0 : index
    %302 = vector.load %arg18[%c0_171, %c0_172] : memref<1x32xf32, #tpu.memory_space<vmem>>, vector<1x32xf32>
    %303 = vector.broadcast %302 : vector<1x32xf32> to vector<8x32xf32>
    %304 = arith.addf %301, %303 : vector<8x32xf32>
    %c0_173 = arith.constant 0 : index
    %c0_174 = arith.constant 0 : index
    %c0_175 = arith.constant 0 : index
    %305 = vector.load %arg19[%c0_173, %c0_174, %c0_175] : memref<1x8x32xf32, #tpu.memory_space<vmem>>, vector<1x8x32xf32>
    %306 = vector.shape_cast %305 : vector<1x8x32xf32> to vector<8x32xf32>
    %307 = vector.shape_cast %304 : vector<8x32xf32> to vector<1x8x32xf32>
    tpu.vector_store %arg19[%c0_173, %c0_174, %c0_175], %307 {strides = array<i32>} : memref<1x8x32xf32, #tpu.memory_space<vmem>>, vector<1x8x32xf32>,
    return
  }
  func.func @transform_0(%arg0: i32, %arg1: i32) -> (i32, i32, i32) {
    %c0_i32 = arith.constant 0 : i32
    %c0_i32_0 = arith.constant 0 : i32
    return %arg0, %arg1, %c0_i32 : i32, i32, i32
  }
  func.func @transform_1(%arg0: i32, %arg1: i32) -> (i32, i32, i32, i32) {
    %c0_i32 = arith.constant 0 : i32
    %c0_i32_0 = arith.constant 0 : i32
    %c0_i32_1 = arith.constant 0 : i32
    %c0_i32_2 = arith.constant 0 : i32
    return %arg0, %c0_i32, %c0_i32_0, %c0_i32_1 : i32, i32, i32, i32
  }
  func.func @transform_2(%arg0: i32, %arg1: i32) -> (i32, i32, i32, i32) {
    %c0_i32 = arith.constant 0 : i32
    %c0_i32_0 = arith.constant 0 : i32
    %c0_i32_1 = arith.constant 0 : i32
    %c0_i32_2 = arith.constant 0 : i32
    return %arg0, %c0_i32, %c0_i32_0, %c0_i32_1 : i32, i32, i32, i32
  }
  func.func @transform_3(%arg0: i32, %arg1: i32) -> (i32, i32, i32, i32) {
    %c0_i32 = arith.constant 0 : i32
    %c0_i32_0 = arith.constant 0 : i32
    %c0_i32_1 = arith.constant 0 : i32
    %c0_i32_2 = arith.constant 0 : i32
    return %arg0, %c0_i32, %c0_i32_0, %c0_i32_1 : i32, i32, i32, i32
  }
  func.func @transform_4(%arg0: i32, %arg1: i32) -> (i32, i32, i32, i32) {
    %c0_i32 = arith.constant 0 : i32
    %c0_i32_0 = arith.constant 0 : i32
    %c0_i32_1 = arith.constant 0 : i32
    %c0_i32_2 = arith.constant 0 : i32
    return %arg0, %c0_i32, %c0_i32_0, %c0_i32_1 : i32, i32, i32, i32
  }
  func.func @transform_5(%arg0: i32, %arg1: i32) -> (i32, i32, i32) {
    %c0_i32 = arith.constant 0 : i32
    %c0_i32_0 = arith.constant 0 : i32
    %c0_i32_1 = arith.constant 0 : i32
    return %arg0, %c0_i32, %c0_i32_0 : i32, i32, i32
  }
  func.func @transform_6(%arg0: i32, %arg1: i32) -> (i32, i32, i32) {
    %c0_i32 = arith.constant 0 : i32
    %c0_i32_0 = arith.constant 0 : i32
    return %arg0, %arg1, %c0_i32 : i32, i32, i32
  }
  func.func @transform_7(%arg0: i32, %arg1: i32) -> (i32, i32) {
    %c0_i32 = arith.constant 0 : i32
    %c0_i32_0 = arith.constant 0 : i32
    %c0_i32_1 = arith.constant 0 : i32
    return %c0_i32, %c0_i32_0 : i32, i32
  }
  func.func @transform_8(%arg0: i32, %arg1: i32) -> (i32, i32) {
    %c0_i32 = arith.constant 0 : i32
    %c0_i32_0 = arith.constant 0 : i32
    %c0_i32_1 = arith.constant 0 : i32
    return %c0_i32, %c0_i32_0 : i32, i32
  }
  func.func @transform_9(%arg0: i32, %arg1: i32) -> (i32, i32, i32) {
    %c0_i32 = arith.constant 0 : i32
    %c0_i32_0 = arith.constant 0 : i32
    %c0_i32_1 = arith.constant 0 : i32
    %c0_i32_2 = arith.constant 0 : i32
    return %c0_i32, %c0_i32_0, %c0_i32_1 : i32, i32, i32
  }
  func.func @transform_10(%arg0: i32, %arg1: i32) -> (i32, i32, i32) {
    %c0_i32 = arith.constant 0 : i32
    %c0_i32_0 = arith.constant 0 : i32
    %c0_i32_1 = arith.constant 0 : i32
    %c0_i32_2 = arith.constant 0 : i32
    return %c0_i32, %c0_i32_0, %c0_i32_1 : i32, i32, i32
  }
  func.func @transform_11(%arg0: i32, %arg1: i32) -> (i32, i32) {
    %c0_i32 = arith.constant 0 : i32
    %c0_i32_0 = arith.constant 0 : i32
    %c0_i32_1 = arith.constant 0 : i32
    return %c0_i32, %c0_i32_0 : i32, i32
  }
  func.func @transform_12(%arg0: i32, %arg1: i32) -> (i32, i32) {
    %c0_i32 = arith.constant 0 : i32
    %c0_i32_0 = arith.constant 0 : i32
    %c0_i32_1 = arith.constant 0 : i32
    return %c0_i32, %c0_i32_0 : i32, i32
  }
  func.func @transform_13(%arg0: i32, %arg1: i32) -> (i32, i32) {
    %c0_i32 = arith.constant 0 : i32
    %c0_i32_0 = arith.constant 0 : i32
    %c0_i32_1 = arith.constant 0 : i32
    return %c0_i32, %c0_i32_0 : i32, i32
  }
  func.func @transform_14(%arg0: i32, %arg1: i32) -> (i32, i32) {
    %c0_i32 = arith.constant 0 : i32
    %c0_i32_0 = arith.constant 0 : i32
    %c0_i32_1 = arith.constant 0 : i32
    return %c0_i32, %c0_i32_0 : i32, i32
  }
  func.func @transform_15(%arg0: i32, %arg1: i32) -> (i32, i32) {
    %c0_i32 = arith.constant 0 : i32
    %c0_i32_0 = arith.constant 0 : i32
    %c0_i32_1 = arith.constant 0 : i32
    return %c0_i32, %c0_i32_0 : i32, i32
  }
  func.func @transform_16(%arg0: i32, %arg1: i32) -> (i32, i32) {
    %c0_i32 = arith.constant 0 : i32
    %c0_i32_0 = arith.constant 0 : i32
    %c0_i32_1 = arith.constant 0 : i32
    return %c0_i32, %c0_i32_0 : i32, i32
  }
  func.func @transform_17(%arg0: i32, %arg1: i32) -> (i32, i32, i32) {
    %c0_i32 = arith.constant 0 : i32
    %c0_i32_0 = arith.constant 0 : i32
    return %arg0, %arg1, %c0_i32 : i32, i32, i32
  }
}

</mosaic_0001>

<llo_original>
// kernel: tpu_custom_call.1
$region0: #{tpu_custom_call.1}
  #allocation0 [shape = 'u32[]', space=smem, size = 0x4, offset = 0x4, fixed_abs, tag = 'smem constant byte address 0x4 - core index']
  #allocation1 [shape = 'u32[144,128]{1,0:T(1,128)}', space=vmem, size = 0x12000, scoped, tag = 'internal scratch']
  #allocation2 [shape = 'bf16[8,32]{1,0:T(8,128)(2,1)}', space=vmem, size = 0x800, scoped, tag = 'scratch operand']
  %s0 = inlined_call_operand.hbm [shape: f32[2,8,32], index: 0, kind: input, shape index: {}]
  %s1 = inlined_call_operand.vmem [shape: bf16[2,4,8,8], index: 1, kind: input, shape index: {}]
  %s2 = inlined_call_operand.hbm [shape: bf16[2,4,8,8], index: 2, kind: input, shape index: {}]
  %s3 = inlined_call_operand.hbm [shape: bf16[2,4,8,8], index: 3, kind: input, shape index: {}]
  %s4 = inlined_call_operand.hbm [shape: bf16[2,4,8,8], index: 4, kind: input, shape index: {}]
  %s5 = inlined_call_operand.hbm [shape: f32[2,1,8], index: 5, kind: input, shape index: {}]
  %s6 = inlined_call_operand.hbm [shape: f32[2,8,8], index: 6, kind: input, shape index: {}]
  %s7 = inlined_call_operand.hbm [shape: f32[3,32], index: 7, kind: input, shape index: {}]
  %s8 = inlined_call_operand.hbm [shape: f32[3,32], index: 8, kind: input, shape index: {}]
  %s9 = inlined_call_operand.vmem [shape: bf16[2,32,32], index: 9, kind: input, shape index: {}]
  %s10 = inlined_call_operand.hbm [shape: bf16[2,32,32], index: 10, kind: input, shape index: {}]
  %s11 = inlined_call_operand.hbm [shape: f32[2,32], index: 11, kind: input, shape index: {}]
  %s12 = inlined_call_operand.hbm [shape: f32[2,32], index: 12, kind: input, shape index: {}]
  %s13 = inlined_call_operand.vmem [shape: bf16[32,64], index: 13, kind: input, shape index: {}]
  %s14 = inlined_call_operand.vmem [shape: f32[1,64], index: 14, kind: input, shape index: {}]
  %s15 = inlined_call_operand.vmem [shape: bf16[64,32], index: 15, kind: input, shape index: {}]
  %s16 = inlined_call_operand.vmem [shape: f32[1,32], index: 16, kind: input, shape index: {}]
  %s17 = inlined_call_operand.hbm [shape: f32[2,8,32], index: 17, kind: output, shape index: {}]
  %s18 = sld [smem:[#allocation0]]
  $region145: #{tpu_custom_call.1} parent=0
    _
  %s20 = ssub.s32 1, %s18
  %s21 = scalar_select 0, %s20, %s18
  $region1: #{tpu_custom_call.1} parent=0
    #allocation3 [shape = 'u8[8192]{0}', space=vmem, size = 0x2000, scoped, tag = 'input window, operand 0']
    #allocation4 [shape = 's32[2]{0}', space=sflag, size = 0x8, scoped, tag = 'scoped memory for tpu_custom_call.1']
    #allocation5 [shape = 's32[2]{0}', space=sflag, size = 0x8, scoped, tag = 'scoped memory for tpu_custom_call.1']
    #allocation6 [shape = 'u8[16384]{0}', space=vmem, size = 0x4000, scoped, tag = 'input window, operand 2']
    #allocation7 [shape = 's32[2]{0}', space=sflag, size = 0x8, scoped, tag = 'scoped memory for tpu_custom_call.1']
    #allocation8 [shape = 'u8[16384]{0}', space=vmem, size = 0x4000, scoped, tag = 'input window, operand 3']
    #allocation9 [shape = 'u8[16384]{0}', space=vmem, size = 0x4000, scoped, tag = 'input window, operand 4']
    #allocation10 [shape = 's32[2]{0}', space=sflag, size = 0x8, scoped, tag = 'scoped memory for tpu_custom_call.1']
    #allocation11 [shape = 'u8[1024]{0}', space=vmem, size = 0x400, scoped, tag = 'input window, operand 5']
    #allocation12 [shape = 'u8[8192]{0}', space=vmem, size = 0x2000, scoped, tag = 'input window, operand 6']
    #allocation13 [shape = 's32[2]{0}', space=sflag, size = 0x8, scoped, tag = 'scoped memory for tpu_custom_call.1']
    #allocation14 [shape = 'u8[2048]{0}', space=vmem, size = 0x800, scoped, tag = 'input window, operand 7, single buffered']
    #allocation15 [shape = 'u8[2048]{0}', space=vmem, size = 0x800, scoped, tag = 'input window, operand 8, single buffered']
    #allocation16 [shape = 's32[1]{0}', space=sflag, size = 0x4, scoped, tag = 'scoped memory for tpu_custom_call.1']
    #allocation17 [shape = 'u8[16384]{0}', space=vmem, size = 0x4000, scoped, tag = 'input window, operand 10, single buffered']
    #allocation18 [shape = 'u8[1024]{0}', space=vmem, size = 0x400, scoped, tag = 'input window, operand 11, single buffered']
    #allocation19 [shape = 's32[1]{0}', space=sflag, size = 0x4, scoped, tag = 'scoped memory for tpu_custom_call.1']
    #allocation20 [shape = 'u8[1024]{0}', space=vmem, size = 0x400, scoped, tag = 'input window, operand 12, single buffered']
    #allocation21 [shape = 'u8[8192]{0}', space=vmem, size = 0x2000, scoped, tag = 'output window, operand 0']
    %22 = vsyncpa [#allocation4], 0
    %s23 = scalar_lea.sflag [#allocation4], 1
    %24 = vsyncpa %s23, 0
    %25 = vsyncpa [#allocation7], 0
    %s26 = scalar_lea.sflag [#allocation7], 1
    %27 = vsyncpa %s26, 0
    %28 = vsyncpa [#allocation10], 0
    %s29 = scalar_lea.sflag [#allocation10], 1
    %30 = vsyncpa %s29, 0
    %31 = vsyncpa [#allocation13], 0
    %s32 = scalar_lea.sflag [#allocation13], 1
    %33 = vsyncpa %s32, 0
    %34 = vsyncpa [#allocation16], 0
    %35 = vsyncpa [#allocation19], 0
    %36 = vsyncpa [#allocation5], 0
    %s37 = scalar_lea.sflag [#allocation5], 1
    %38 = vsyncpa %s37, 0
    loop: start=0, step=1, limit=4
    $region2: #{tpu_custom_call.1} parent=1 // loop_pre_header
      _
    $region3: #{tpu_custom_call.1} parent=1 // loop_header
      %s40 = sphi 0, %s44
      %p41 = scmp.ge.s32.totalorder %s40, 4
      %s47 = sphi 0, %s59
      %s48 = sphi 0, %s55
      %s49 = sphi 0, %s47
      %s50 = sphi 0, %s48
      %s51 = sphi 0, %s49
      %s52 = sphi 0, %s50
      %s64 = sphi 0, %s66
      %s67 = sphi 0, %s64
      %s68 = sphi 0, %s67
      %s84 = sphi 0, %s68
      %s90 = sphi 0, %s92
      %s93 = sphi 0, %s90
      %s94 = sphi 0, %s93
      %s110 = sphi 0, %s94
      %s116 = sphi 0, %s118
      %s119 = sphi 0, %s116
      %s120 = sphi 0, %s119
      %s136 = sphi 0, %s120
      %s142 = sphi 0, %s144
      %s145 = sphi 0, %s142
      %s146 = sphi 0, %s145
      %s162 = sphi 0, %s146
      %s168 = sphi 0, %s170
      %s171 = sphi 0, %s168
      %s172 = sphi 0, %s171
      %s188 = sphi 0, %s172
      %s194 = sphi 0, %s196
      %s197 = sphi 0, %s194
      %s198 = sphi 0, %s197
      %s214 = sphi 0, %s198
      %s222 = sphi 0, %s224
      %s225 = sphi 0, %s222
      %s226 = sphi 0, %s225
      %s242 = sphi 0, %s226
      %s246 = sphi 0, %s246
      %s248 = sphi 0, %s246
      %s249 = sphi 0, %s248
      %s263 = sphi 0, %s249
      %s267 = sphi 0, %s267
      %s269 = sphi 0, %s267
      %s270 = sphi 0, %s269
      %s284 = sphi 0, %s270
      %s288 = sphi 0, %s288
      %s290 = sphi 0, %s288
      %s291 = sphi 0, %s290
      %s305 = sphi 0, %s291
      %s309 = sphi 0, %s309
      %s311 = sphi 0, %s309
      %s312 = sphi 0, %s311
      %s326 = sphi 0, %s312
      %s330 = sphi 0, %s330
      %s332 = sphi 0, %s330
      %s333 = sphi 0, %s332
      %s347 = sphi 0, %s333
      %s351 = sphi 0, %s351
      %s353 = sphi 0, %s351
      %s354 = sphi 0, %s353
      %s368 = sphi 0, %s354
      %s372 = sphi 0, %s372
      %s374 = sphi 0, %s372
      %s375 = sphi 0, %s374
      %s389 = sphi 0, %s375
      %s393 = sphi 0, %s393
      %s395 = sphi 0, %s393
      %s396 = sphi 0, %s395
      %s410 = sphi 0, %s396
      %s414 = sphi 0, %s414
      %s416 = sphi 0, %s414
      %s417 = sphi 0, %s416
      %s431 = sphi 0, %s417
      %s435 = sphi 0, %s435
      %s437 = sphi 0, %s435
      %s438 = sphi 0, %s437
      %s452 = sphi 0, %s438
      %s460 = sphi 0, %s462
      %s463 = sphi 0, %s460
      %s464 = sphi 0, %s463
      %s480 = sphi 0, %s464
    $region4: #{tpu_custom_call.1} parent=1 // loop_header_branch
      %43 = sbr.rel (%p41) target = $region8
    $region5: #{tpu_custom_call.1} parent=1 // loop_body
      %s45 = ssub.s32 %s40, 1
      %s46 = ssub.s32 %s40, 2
      %s53 = sadd.s32 1, %s48
      %p54 = scmp.ge.s32.totalorder %s53, 1
      %s55 = scalar_select %p54, 0, %s53
      %s56 = sadd.s32 1, %s47
      %s57 = scalar_select %p54, %s56, %s47
      %p58 = scmp.ge.s32.totalorder %s57, 2
      %s59 = scalar_select %p58, 0, %s57
      %s60 = ssub.s32 %s47, %s59
      %s61 = ssub.s32 %s48, %s55
      %s62 = sor.u32 %s60, %s61
      %p63 = scmp.eq.s32.totalorder %s62, 0
      %s65 = sadd.s32 %s64, 1
      %s66 = scalar_select %p63, %s64, %s65
      %p69 = pneg %p63
      %p70 = scmp.eq.s32.totalorder %s40, 1
      %p71 = por %p69, %p70
      %p72 = scmp.ne.s32.totalorder %s64, %s67
      %p73 = scmp.eq.s32.totalorder %s40, 0
      %p74 = por %p72, %p73
      %p75 = scmp.ne.s32.totalorder %s64, %s67
      %p76 = scmp.eq.s32.totalorder %s45, 1
      %p77 = por %p75, %p76
      %p78 = scmp.ne.s32.totalorder %s67, %s68
      %p79 = scmp.eq.s32.totalorder %s45, 0
      %p80 = por %p78, %p79
      %p81 = scmp.ne.s32.totalorder %s67, %s68
      %p82 = scmp.eq.s32.totalorder %s46, 1
      %p83 = por %p81, %p82
      %p85 = scmp.ne.s32.totalorder %s68, %s84
      %p86 = scmp.eq.s32.totalorder %s46, 0
      %p87 = por %p85, %p86
      %s88 = ssub.s32 %s47, %s59
      %p89 = scmp.eq.s32.totalorder %s88, 0
      %s91 = sadd.s32 %s90, 1
      %s92 = scalar_select %p89, %s90, %s91
      %p95 = pneg %p89
      %p96 = scmp.eq.s32.totalorder %s40, 1
      %p97 = por %p95, %p96
      %p98 = scmp.ne.s32.totalorder %s90, %s93
      %p99 = scmp.eq.s32.totalorder %s40, 0
      %p100 = por %p98, %p99
      %p101 = scmp.ne.s32.totalorder %s90, %s93
      %p102 = scmp.eq.s32.totalorder %s45, 1
      %p103 = por %p101, %p102
      %p104 = scmp.ne.s32.totalorder %s93, %s94
      %p105 = scmp.eq.s32.totalorder %s45, 0
      %p106 = por %p104, %p105
      %p107 = scmp.ne.s32.totalorder %s93, %s94
      %p108 = scmp.eq.s32.totalorder %s46, 1
      %p109 = por %p107, %p108
      %p111 = scmp.ne.s32.totalorder %s94, %s110
      %p112 = scmp.eq.s32.totalorder %s46, 0
      %p113 = por %p111, %p112
      %s114 = ssub.s32 %s47, %s59
      %p115 = scmp.eq.s32.totalorder %s114, 0
      %s117 = sadd.s32 %s116, 1
      %s118 = scalar_select %p115, %s116, %s117
      %p121 = pneg %p115
      %p122 = scmp.eq.s32.totalorder %s40, 1
      %p123 = por %p121, %p122
      %p124 = scmp.ne.s32.totalorder %s116, %s119
      %p125 = scmp.eq.s32.totalorder %s40, 0
      %p126 = por %p124, %p125
      %p127 = scmp.ne.s32.totalorder %s116, %s119
      %p128 = scmp.eq.s32.totalorder %s45, 1
      %p129 = por %p127, %p128
      %p130 = scmp.ne.s32.totalorder %s119, %s120
      %p131 = scmp.eq.s32.totalorder %s45, 0
      %p132 = por %p130, %p131
      %p133 = scmp.ne.s32.totalorder %s119, %s120
      %p134 = scmp.eq.s32.totalorder %s46, 1
      %p135 = por %p133, %p134
      %p137 = scmp.ne.s32.totalorder %s120, %s136
      %p138 = scmp.eq.s32.totalorder %s46, 0
      %p139 = por %p137, %p138
      %s140 = ssub.s32 %s47, %s59
      %p141 = scmp.eq.s32.totalorder %s140, 0
      %s143 = sadd.s32 %s142, 1
      %s144 = scalar_select %p141, %s142, %s143
      %p147 = pneg %p141
      %p148 = scmp.eq.s32.totalorder %s40, 1
      %p149 = por %p147, %p148
      %p150 = scmp.ne.s32.totalorder %s142, %s145
      %p151 = scmp.eq.s32.totalorder %s40, 0
      %p152 = por %p150, %p151
      %p153 = scmp.ne.s32.totalorder %s142, %s145
      %p154 = scmp.eq.s32.totalorder %s45, 1
      %p155 = por %p153, %p154
      %p156 = scmp.ne.s32.totalorder %s145, %s146
      %p157 = scmp.eq.s32.totalorder %s45, 0
      %p158 = por %p156, %p157
      %p159 = scmp.ne.s32.totalorder %s145, %s146
      %p160 = scmp.eq.s32.totalorder %s46, 1
      %p161 = por %p159, %p160
      %p163 = scmp.ne.s32.totalorder %s146, %s162
      %p164 = scmp.eq.s32.totalorder %s46, 0
      %p165 = por %p163, %p164
      %s166 = ssub.s32 %s47, %s59
      %p167 = scmp.eq.s32.totalorder %s166, 0
      %s169 = sadd.s32 %s168, 1
      %s170 = scalar_select %p167, %s168, %s169
      %p173 = pneg %p167
      %p174 = scmp.eq.s32.totalorder %s40, 1
      %p175 = por %p173, %p174
      %p176 = scmp.ne.s32.totalorder %s168, %s171
      %p177 = scmp.eq.s32.totalorder %s40, 0
      %p178 = por %p176, %p177
      %p179 = scmp.ne.s32.totalorder %s168, %s171
      %p180 = scmp.eq.s32.totalorder %s45, 1
      %p181 = por %p179, %p180
      %p182 = scmp.ne.s32.totalorder %s171, %s172
      %p183 = scmp.eq.s32.totalorder %s45, 0
      %p184 = por %p182, %p183
      %p185 = scmp.ne.s32.totalorder %s171, %s172
      %p186 = scmp.eq.s32.totalorder %s46, 1
      %p187 = por %p185, %p186
      %p189 = scmp.ne.s32.totalorder %s172, %s188
      %p190 = scmp.eq.s32.totalorder %s46, 0
      %p191 = por %p189, %p190
      %s192 = ssub.s32 %s47, %s59
      %p193 = scmp.eq.s32.totalorder %s192, 0
      %s195 = sadd.s32 %s194, 1
      %s196 = scalar_select %p193, %s194, %s195
      %p199 = pneg %p193
      %p200 = scmp.eq.s32.totalorder %s40, 1
      %p201 = por %p199, %p200
      %p202 = scmp.ne.s32.totalorder %s194, %s197
      %p203 = scmp.eq.s32.totalorder %s40, 0
      %p204 = por %p202, %p203
      %p205 = scmp.ne.s32.totalorder %s194, %s197
      %p206 = scmp.eq.s32.totalorder %s45, 1
      %p207 = por %p205, %p206
      %p208 = scmp.ne.s32.totalorder %s197, %s198
      %p209 = scmp.eq.s32.totalorder %s45, 0
      %p210 = por %p208, %p209
      %p211 = scmp.ne.s32.totalorder %s197, %s198
      %p212 = scmp.eq.s32.totalorder %s46, 1
      %p213 = por %p211, %p212
      %p215 = scmp.ne.s32.totalorder %s198, %s214
      %p216 = scmp.eq.s32.totalorder %s46, 0
      %p217 = por %p215, %p216
      %s218 = ssub.s32 %s47, %s59
      %s219 = ssub.s32 %s48, %s55
      %s220 = sor.u32 %s218, %s219
      %p221 = scmp.eq.s32.totalorder %s220, 0
      %s223 = sadd.s32 %s222, 1
      %s224 = scalar_select %p221, %s222, %s223
      %p227 = pneg %p221
      %p228 = scmp.eq.s32.totalorder %s40, 1
      %p229 = por %p227, %p228
      %p230 = scmp.ne.s32.totalorder %s222, %s225
      %p231 = scmp.eq.s32.totalorder %s40, 0
      %p232 = por %p230, %p231
      %p233 = scmp.ne.s32.totalorder %s222, %s225
      %p234 = scmp.eq.s32.totalorder %s45, 1
      %p235 = por %p233, %p234
      %p236 = scmp.ne.s32.totalorder %s225, %s226
      %p237 = scmp.eq.s32.totalorder %s45, 0
      %p238 = por %p236, %p237
      %p239 = scmp.ne.s32.totalorder %s225, %s226
      %p240 = scmp.eq.s32.totalorder %s46, 1
      %p241 = por %p239, %p240
      %p243 = scmp.ne.s32.totalorder %s226, %s242
      %p244 = scmp.eq.s32.totalorder %s46, 0
      %p245 = por %p243, %p244
      %s247 = sadd.s32 %s246, 1
      %p250 = scmp.eq.s32.totalorder %s40, 1
      %p251 = scmp.ne.s32.totalorder %s246, %s248
      %p252 = scmp.eq.s32.totalorder %s40, 0
      %p253 = por %p251, %p252
      %p254 = scmp.ne.s32.totalorder %s246, %s248
      %p255 = scmp.eq.s32.totalorder %s45, 1
      %p256 = por %p254, %p255
      %p257 = scmp.ne.s32.totalorder %s248, %s249
      %p258 = scmp.eq.s32.totalorder %s45, 0
      %p259 = por %p257, %p258
      %p260 = scmp.ne.s32.totalorder %s248, %s249
      %p261 = scmp.eq.s32.totalorder %s46, 1
      %p262 = por %p260, %p261
      %p264 = scmp.ne.s32.totalorder %s249, %s263
      %p265 = scmp.eq.s32.totalorder %s46, 0
      %p266 = por %p264, %p265
      %s268 = sadd.s32 %s267, 1
      %p271 = scmp.eq.s32.totalorder %s40, 1
      %p272 = scmp.ne.s32.totalorder %s267, %s269
      %p273 = scmp.eq.s32.totalorder %s40, 0
      %p274 = por %p272, %p273
      %p275 = scmp.ne.s32.totalorder %s267, %s269
      %p276 = scmp.eq.s32.totalorder %s45, 1
      %p277 = por %p275, %p276
      %p278 = scmp.ne.s32.totalorder %s269, %s270
      %p279 = scmp.eq.s32.totalorder %s45, 0
      %p280 = por %p278, %p279
      %p281 = scmp.ne.s32.totalorder %s269, %s270
      %p282 = scmp.eq.s32.totalorder %s46, 1
      %p283 = por %p281, %p282
      %p285 = scmp.ne.s32.totalorder %s270, %s284
      %p286 = scmp.eq.s32.totalorder %s46, 0
      %p287 = por %p285, %p286
      %s289 = sadd.s32 %s288, 1
      %p292 = scmp.eq.s32.totalorder %s40, 1
      %p293 = scmp.ne.s32.totalorder %s288, %s290
      %p294 = scmp.eq.s32.totalorder %s40, 0
      %p295 = por %p293, %p294
      %p296 = scmp.ne.s32.totalorder %s288, %s290
      %p297 = scmp.eq.s32.totalorder %s45, 1
      %p298 = por %p296, %p297
      %p299 = scmp.ne.s32.totalorder %s290, %s291
      %p300 = scmp.eq.s32.totalorder %s45, 0
      %p301 = por %p299, %p300
      %p302 = scmp.ne.s32.totalorder %s290, %s291
      %p303 = scmp.eq.s32.totalorder %s46, 1
      %p304 = por %p302, %p303
      %p306 = scmp.ne.s32.totalorder %s291, %s305
      %p307 = scmp.eq.s32.totalorder %s46, 0
      %p308 = por %p306, %p307
      %s310 = sadd.s32 %s309, 1
      %p313 = scmp.eq.s32.totalorder %s40, 1
      %p314 = scmp.ne.s32.totalorder %s309, %s311
      %p315 = scmp.eq.s32.totalorder %s40, 0
      %p316 = por %p314, %p315
      %p317 = scmp.ne.s32.totalorder %s309, %s311
      %p318 = scmp.eq.s32.totalorder %s45, 1
      %p319 = por %p317, %p318
      %p320 = scmp.ne.s32.totalorder %s311, %s312
      %p321 = scmp.eq.s32.totalorder %s45, 0
      %p322 = por %p320, %p321
      %p323 = scmp.ne.s32.totalorder %s311, %s312
      %p324 = scmp.eq.s32.totalorder %s46, 1
      %p325 = por %p323, %p324
      %p327 = scmp.ne.s32.totalorder %s312, %s326
      %p328 = scmp.eq.s32.totalorder %s46, 0
      %p329 = por %p327, %p328
      %s331 = sadd.s32 %s330, 1
      %p334 = scmp.eq.s32.totalorder %s40, 1
      %p335 = scmp.ne.s32.totalorder %s330, %s332
      %p336 = scmp.eq.s32.totalorder %s40, 0
      %p337 = por %p335, %p336
      %p338 = scmp.ne.s32.totalorder %s330, %s332
      %p339 = scmp.eq.s32.totalorder %s45, 1
      %p340 = por %p338, %p339
      %p341 = scmp.ne.s32.totalorder %s332, %s333
      %p342 = scmp.eq.s32.totalorder %s45, 0
      %p343 = por %p341, %p342
      %p344 = scmp.ne.s32.totalorder %s332, %s333
      %p345 = scmp.eq.s32.totalorder %s46, 1
      %p346 = por %p344, %p345
      %p348 = scmp.ne.s32.totalorder %s333, %s347
      %p349 = scmp.eq.s32.totalorder %s46, 0
      %p350 = por %p348, %p349
      %s352 = sadd.s32 %s351, 1
      %p355 = scmp.eq.s32.totalorder %s40, 1
      %p356 = scmp.ne.s32.totalorder %s351, %s353
      %p357 = scmp.eq.s32.totalorder %s40, 0
      %p358 = por %p356, %p357
      %p359 = scmp.ne.s32.totalorder %s351, %s353
      %p360 = scmp.eq.s32.totalorder %s45, 1
      %p361 = por %p359, %p360
      %p362 = scmp.ne.s32.totalorder %s353, %s354
      %p363 = scmp.eq.s32.totalorder %s45, 0
      %p364 = por %p362, %p363
      %p365 = scmp.ne.s32.totalorder %s353, %s354
      %p366 = scmp.eq.s32.totalorder %s46, 1
      %p367 = por %p365, %p366
      %p369 = scmp.ne.s32.totalorder %s354, %s368
      %p370 = scmp.eq.s32.totalorder %s46, 0
      %p371 = por %p369, %p370
      %s373 = sadd.s32 %s372, 1
      %p376 = scmp.eq.s32.totalorder %s40, 1
      %p377 = scmp.ne.s32.totalorder %s372, %s374
      %p378 = scmp.eq.s32.totalorder %s40, 0
      %p379 = por %p377, %p378
      %p380 = scmp.ne.s32.totalorder %s372, %s374
      %p381 = scmp.eq.s32.totalorder %s45, 1
      %p382 = por %p380, %p381
      %p383 = scmp.ne.s32.totalorder %s374, %s375
      %p384 = scmp.eq.s32.totalorder %s45, 0
      %p385 = por %p383, %p384
      %p386 = scmp.ne.s32.totalorder %s374, %s375
      %p387 = scmp.eq.s32.totalorder %s46, 1
      %p388 = por %p386, %p387
      %p390 = scmp.ne.s32.totalorder %s375, %s389
      %p391 = scmp.eq.s32.totalorder %s46, 0
      %p392 = por %p390, %p391
      %s394 = sadd.s32 %s393, 1
      %p397 = scmp.eq.s32.totalorder %s40, 1
      %p398 = scmp.ne.s32.totalorder %s393, %s395
      %p399 = scmp.eq.s32.totalorder %s40, 0
      %p400 = por %p398, %p399
      %p401 = scmp.ne.s32.totalorder %s393, %s395
      %p402 = scmp.eq.s32.totalorder %s45, 1
      %p403 = por %p401, %p402
      %p404 = scmp.ne.s32.totalorder %s395, %s396
      %p405 = scmp.eq.s32.totalorder %s45, 0
      %p406 = por %p404, %p405
      %p407 = scmp.ne.s32.totalorder %s395, %s396
      %p408 = scmp.eq.s32.totalorder %s46, 1
      %p409 = por %p407, %p408
      %p411 = scmp.ne.s32.totalorder %s396, %s410
      %p412 = scmp.eq.s32.totalorder %s46, 0
      %p413 = por %p411, %p412
      %s415 = sadd.s32 %s414, 1
      %p418 = scmp.eq.s32.totalorder %s40, 1
      %p419 = scmp.ne.s32.totalorder %s414, %s416
      %p420 = scmp.eq.s32.totalorder %s40, 0
      %p421 = por %p419, %p420
      %p422 = scmp.ne.s32.totalorder %s414, %s416
      %p423 = scmp.eq.s32.totalorder %s45, 1
      %p424 = por %p422, %p423
      %p425 = scmp.ne.s32.totalorder %s416, %s417
      %p426 = scmp.eq.s32.totalorder %s45, 0
      %p427 = por %p425, %p426
      %p428 = scmp.ne.s32.totalorder %s416, %s417
      %p429 = scmp.eq.s32.totalorder %s46, 1
      %p430 = por %p428, %p429
      %p432 = scmp.ne.s32.totalorder %s417, %s431
      %p433 = scmp.eq.s32.totalorder %s46, 0
      %p434 = por %p432, %p433
      %s436 = sadd.s32 %s435, 1
      %p439 = scmp.eq.s32.totalorder %s40, 1
      %p440 = scmp.ne.s32.totalorder %s435, %s437
      %p441 = scmp.eq.s32.totalorder %s40, 0
      %p442 = por %p440, %p441
      %p443 = scmp.ne.s32.totalorder %s435, %s437
      %p444 = scmp.eq.s32.totalorder %s45, 1
      %p445 = por %p443, %p444
      %p446 = scmp.ne.s32.totalorder %s437, %s438
      %p447 = scmp.eq.s32.totalorder %s45, 0
      %p448 = por %p446, %p447
      %p449 = scmp.ne.s32.totalorder %s437, %s438
      %p450 = scmp.eq.s32.totalorder %s46, 1
      %p451 = por %p449, %p450
      %p453 = scmp.ne.s32.totalorder %s438, %s452
      %p454 = scmp.eq.s32.totalorder %s46, 0
      %p455 = por %p453, %p454
      %s456 = ssub.s32 %s47, %s59
      %s457 = ssub.s32 %s48, %s55
      %s458 = sor.u32 %s456, %s457
      %p459 = scmp.eq.s32.totalorder %s458, 0
      %s461 = sadd.s32 %s460, 1
      %s462 = scalar_select %p459, %s460, %s461
      %p465 = pneg %p459
      %p466 = scmp.eq.s32.totalorder %s40, 1
      %p467 = por %p465, %p466
      %p468 = scmp.ne.s32.totalorder %s460, %s463
      %p469 = scmp.eq.s32.totalorder %s40, 0
      %p470 = por %p468, %p469
      %p471 = scmp.ne.s32.totalorder %s460, %s463
      %p472 = scmp.eq.s32.totalorder %s45, 1
      %p473 = por %p471, %p472
      %p474 = scmp.ne.s32.totalorder %s463, %s464
      %p475 = scmp.eq.s32.totalorder %s45, 0
      %p476 = por %p474, %p475
      %p477 = scmp.ne.s32.totalorder %s463, %s464
      %p478 = scmp.eq.s32.totalorder %s46, 1
      %p479 = por %p477, %p478
      %p481 = scmp.ne.s32.totalorder %s464, %s480
      %p482 = scmp.eq.s32.totalorder %s46, 0
      %p483 = por %p481, %p482
      %p484 = scmp.le.s32.totalorder 1, %s40
      %p485 = scmp.lt.s32.totalorder %s40, 3
      %p486 = pnand %p484, %p485
      %p487 = pneg %p486
      // Predicated region
      $region9: #{tpu_custom_call.1} parent=5 // pred_check
        _
      $region10: #{tpu_custom_call.1} parent=5 // pred_check_branch
        %489 = sbr.rel (%p486) target = $region12
      $region11: #{tpu_custom_call.1} parent=5 // pred_region
        %s490 = ssub.s32 %s40, 1
        // Predicated region
        $region13: #{tpu_custom_call.1} parent=11 // pred_check
          %p491 = pneg %p259
        $region14: #{tpu_custom_call.1} parent=11 // pred_check_branch
          %493 = sbr.rel (%p491) target = $region16
        $region15: #{tpu_custom_call.1} parent=11 // pred_region
          %s495 = ssub.s32 64, 64
          %496 = vsyncadd [#allocation13], %s495
          %s498 = sshll.u32 [#allocation14], 4
          %s499 = int_to_ptr.vmem [resolvable:$true] %s498
          %501 = dma.hbm_to_vmem [thread:$0]  %s7, 64, %s499, [#allocation13]
        $region16: #{tpu_custom_call.1} parent=11 // pred_fallthru
          _
        // Predicated region
        $region17: #{tpu_custom_call.1} parent=11 // pred_check
          %p502 = pneg %p280
        $region18: #{tpu_custom_call.1} parent=11 // pred_check_branch
          %504 = sbr.rel (%p502) target = $region20
        $region19: #{tpu_custom_call.1} parent=11 // pred_region
          %s506 = ssub.s32 64, 64
          %507 = vsyncadd [#allocation16], %s506
          %s509 = sshll.u32 [#allocation15], 4
          %s510 = int_to_ptr.vmem [resolvable:$true] %s509
          %512 = dma.hbm_to_vmem [thread:$0]  %s8, 64, %s510, [#allocation16]
        $region20: #{tpu_custom_call.1} parent=11 // pred_fallthru
          _
        // Predicated region
        $region21: #{tpu_custom_call.1} parent=11 // pred_check
          %p513 = pneg %p301
        $region22: #{tpu_custom_call.1} parent=11 // pred_check_branch
          %515 = sbr.rel (%p513) target = $region24
        $region23: #{tpu_custom_call.1} parent=11 // pred_region
          _
        $region24: #{tpu_custom_call.1} parent=11 // pred_fallthru
          _
        // Predicated region
        $region25: #{tpu_custom_call.1} parent=11 // pred_check
          %p516 = pneg %p322
        $region26: #{tpu_custom_call.1} parent=11 // pred_check_branch
          %518 = sbr.rel (%p516) target = $region28
        $region27: #{tpu_custom_call.1} parent=11 // pred_region
          %s520 = ssub.s32 512, 512
          %521 = vsyncadd [#allocation16], %s520
          %s522 = sshll.u32 [#allocation17], 4
          %s523 = int_to_ptr.vmem [resolvable:$true] %s522
          %528 = dma.hbm_to_vmem [thread:$0]  %s10, 512, %s523, [#allocation16], 64, 64, 4
        $region28: #{tpu_custom_call.1} parent=11 // pred_fallthru
          _
        // Predicated region
        $region29: #{tpu_custom_call.1} parent=11 // pred_check
          %p529 = pneg %p343
        $region30: #{tpu_custom_call.1} parent=11 // pred_check_branch
          %531 = sbr.rel (%p529) target = $region32
        $region31: #{tpu_custom_call.1} parent=11 // pred_region
          %s533 = ssub.s32 32, 32
          %534 = vsyncadd [#allocation19], %s533
          %s536 = sshll.u32 [#allocation18], 4
          %s537 = int_to_ptr.vmem [resolvable:$true] %s536
          %539 = dma.hbm_to_vmem [thread:$0]  %s11, 32, %s537, [#allocation19]
        $region32: #{tpu_custom_call.1} parent=11 // pred_fallthru
          _
        // Predicated region
        $region33: #{tpu_custom_call.1} parent=11 // pred_check
          %p540 = pneg %p364
        $region34: #{tpu_custom_call.1} parent=11 // pred_check_branch
          %542 = sbr.rel (%p540) target = $region36
        $region35: #{tpu_custom_call.1} parent=11 // pred_region
          %s544 = ssub.s32 32, 32
          %545 = vsyncadd [#allocation19], %s544
          %s547 = sshll.u32 [#allocation20], 4
          %s548 = int_to_ptr.vmem [resolvable:$true] %s547
          %550 = dma.hbm_to_vmem [thread:$0]  %s12, 32, %s548, [#allocation19]
        $region36: #{tpu_custom_call.1} parent=11 // pred_fallthru
          _
        // Predicated region
        $region37: #{tpu_custom_call.1} parent=11 // pred_check
          %p551 = pneg %p385
        $region38: #{tpu_custom_call.1} parent=11 // pred_check_branch
          %553 = sbr.rel (%p551) target = $region40
        $region39: #{tpu_custom_call.1} parent=11 // pred_region
          _
        $region40: #{tpu_custom_call.1} parent=11 // pred_fallthru
          _
        // Predicated region
        $region41: #{tpu_custom_call.1} parent=11 // pred_check
          %p554 = pneg %p406
        $region42: #{tpu_custom_call.1} parent=11 // pred_check_branch
          %556 = sbr.rel (%p554) target = $region44
        $region43: #{tpu_custom_call.1} parent=11 // pred_region
          _
        $region44: #{tpu_custom_call.1} parent=11 // pred_fallthru
          _
        // Predicated region
        $region45: #{tpu_custom_call.1} parent=11 // pred_check
          %p557 = pneg %p427
        $region46: #{tpu_custom_call.1} parent=11 // pred_check_branch
          %559 = sbr.rel (%p557) target = $region48
        $region47: #{tpu_custom_call.1} parent=11 // pred_region
          _
        $region48: #{tpu_custom_call.1} parent=11 // pred_fallthru
          _
        // Predicated region
        $region49: #{tpu_custom_call.1} parent=11 // pred_check
          %p560 = pneg %p448
        $region50: #{tpu_custom_call.1} parent=11 // pred_check_branch
          %562 = sbr.rel (%p560) target = $region52
        $region51: #{tpu_custom_call.1} parent=11 // pred_region
          _
        $region52: #{tpu_custom_call.1} parent=11 // pred_fallthru
          _
      $region12: #{tpu_custom_call.1} parent=5 // pred_fallthru
        _
      %p563 = scmp.lt.s32.totalorder %s40, 2
      // Predicated region
      $region53: #{tpu_custom_call.1} parent=5 // pred_check
        %p564 = pneg %p563
      $region54: #{tpu_custom_call.1} parent=5 // pred_check_branch
        %566 = sbr.rel (%p564) target = $region56
      $region55: #{tpu_custom_call.1} parent=5 // pred_region
        // Predicated region
        $region57: #{tpu_custom_call.1} parent=55 // pred_check
          %p567 = pneg %p74
        $region58: #{tpu_custom_call.1} parent=55 // pred_check_branch
          %569 = sbr.rel (%p567) target = $region60
        $region59: #{tpu_custom_call.1} parent=55 // pred_region
          %s570 = sand.u32 %s64, 1
          %s571 = scalar_lea.sflag [#allocation4], %s570
          %s572 = sand.u32 %s64, 1
          %s573 = smul.addr %s572, 8
          %s574 = scalar_lea.vmem [#allocation3], %s573
          %s576 = ssub.s32 128, 128
          %577 = vsyncadd %s571, %s576
          %s578 = sadd.s32 %s48, %s47
          %s579 = smul.addr %s578, 128
          %s580 = scalar_lea.hbm %s0, %s579
          %s582 = sshll.u32 %s574, 4
          %s583 = int_to_ptr.vmem [resolvable:$true] %s582
          %585 = dma.hbm_to_vmem [thread:$0]  %s580, 128, %s583, %s571
        $region60: #{tpu_custom_call.1} parent=55 // pred_fallthru
          _
        // Predicated region
        $region61: #{tpu_custom_call.1} parent=55 // pred_check
          %p586 = pneg %p100
        $region62: #{tpu_custom_call.1} parent=55 // pred_check_branch
          %588 = sbr.rel (%p586) target = $region64
        $region63: #{tpu_custom_call.1} parent=55 // pred_region
          %p589 = scmp.lt.s32.totalorder %s47, 1
          %s590 = scalar_select %p589, %s47, 1
          %s591 = smul.addr %s590, 4
          %s592 = smul.addr %s591, 4
          %s593 = scalar_lea.vmem %s1, %s592
        $region64: #{tpu_custom_call.1} parent=55 // pred_fallthru
          _
        // Predicated region
        $region65: #{tpu_custom_call.1} parent=55 // pred_check
          %p594 = pneg %p126
        $region66: #{tpu_custom_call.1} parent=55 // pred_check_branch
          %596 = sbr.rel (%p594) target = $region68
        $region67: #{tpu_custom_call.1} parent=55 // pred_region
          %s597 = sand.u32 %s40, 1
          %s598 = scalar_lea.sflag [#allocation7], %s597
          %s599 = sand.u32 %s116, 1
          %s600 = smul.addr %s599, 16
          %s601 = scalar_lea.vmem [#allocation6], %s600
          %s603 = ssub.s32 256, 256
          %604 = vsyncadd %s598, %s603
          %s605 = smul.addr %s47, 4
          %s606 = smul.addr %s605, 64
          %s607 = scalar_lea.hbm %s2, %s606
          %s608 = sshll.u32 %s601, 4
          %s609 = int_to_ptr.vmem [resolvable:$true] %s608
          %614 = dma.hbm_to_vmem [thread:$0]  %s607, 256, %s609, %s598, 64, 64, 4
        $region68: #{tpu_custom_call.1} parent=55 // pred_fallthru
          _
        // Predicated region
        $region69: #{tpu_custom_call.1} parent=55 // pred_check
          %p615 = pneg %p152
        $region70: #{tpu_custom_call.1} parent=55 // pred_check_branch
          %617 = sbr.rel (%p615) target = $region72
        $region71: #{tpu_custom_call.1} parent=55 // pred_region
          %s618 = sand.u32 %s40, 1
          %s619 = scalar_lea.sflag [#allocation7], %s618
          %s620 = sand.u32 %s142, 1
          %s621 = smul.addr %s620, 16
          %s622 = scalar_lea.vmem [#allocation8], %s621
          %s624 = ssub.s32 256, 256
          %625 = vsyncadd %s619, %s624
          %s626 = smul.addr %s47, 4
          %s627 = smul.addr %s626, 64
          %s628 = scalar_lea.hbm %s3, %s627
          %s629 = sshll.u32 %s622, 4
          %s630 = int_to_ptr.vmem [resolvable:$true] %s629
          %635 = dma.hbm_to_vmem [thread:$0]  %s628, 256, %s630, %s619, 64, 64, 4
        $region72: #{tpu_custom_call.1} parent=55 // pred_fallthru
          _
        // Predicated region
        $region73: #{tpu_custom_call.1} parent=55 // pred_check
          %p636 = pneg %p178
        $region74: #{tpu_custom_call.1} parent=55 // pred_check_branch
          %638 = sbr.rel (%p636) target = $region76
        $region75: #{tpu_custom_call.1} parent=55 // pred_region
          %s639 = sand.u32 %s40, 1
          %s640 = scalar_lea.sflag [#allocation10], %s639
          %s641 = sand.u32 %s168, 1
          %s642 = smul.addr %s641, 16
          %s643 = scalar_lea.vmem [#allocation9], %s642
          %s645 = ssub.s32 256, 256
          %646 = vsyncadd %s640, %s645
          %s647 = smul.addr %s47, 4
          %s648 = smul.addr %s647, 64
          %s649 = scalar_lea.hbm %s4, %s648
          %s650 = sshll.u32 %s643, 4
          %s651 = int_to_ptr.vmem [resolvable:$true] %s650
          %656 = dma.hbm_to_vmem [thread:$0]  %s649, 256, %s651, %s640, 64, 64, 4
        $region76: #{tpu_custom_call.1} parent=55 // pred_fallthru
          _
        // Predicated region
        $region77: #{tpu_custom_call.1} parent=55 // pred_check
          %p657 = pneg %p204
        $region78: #{tpu_custom_call.1} parent=55 // pred_check_branch
          %659 = sbr.rel (%p657) target = $region80
        $region79: #{tpu_custom_call.1} parent=55 // pred_region
          %s660 = sand.u32 %s40, 1
          %s661 = scalar_lea.sflag [#allocation10], %s660
          %s662 = sand.u32 %s194, 1
          %s663 = scalar_lea.vmem [#allocation11], %s662
          %s665 = ssub.s32 16, 16
          %666 = vsyncadd %s661, %s665
          %s667 = smul.addr %s47, 16
          %s668 = scalar_lea.hbm %s5, %s667
          %s670 = sshll.u32 %s663, 4
          %s671 = int_to_ptr.vmem [resolvable:$true] %s670
          %673 = dma.hbm_to_vmem [thread:$0]  %s668, 16, %s671, %s661
        $region80: #{tpu_custom_call.1} parent=55 // pred_fallthru
          _
        // Predicated region
        $region81: #{tpu_custom_call.1} parent=55 // pred_check
          %p674 = pneg %p232
        $region82: #{tpu_custom_call.1} parent=55 // pred_check_branch
          %676 = sbr.rel (%p674) target = $region84
        $region83: #{tpu_custom_call.1} parent=55 // pred_region
          %s677 = sand.u32 %s40, 1
          %s678 = scalar_lea.sflag [#allocation13], %s677
          %s679 = sand.u32 %s222, 1
          %s680 = smul.addr %s679, 8
          %s681 = scalar_lea.vmem [#allocation12], %s680
          %s683 = ssub.s32 128, 128
          %684 = vsyncadd %s678, %s683
          %s685 = sadd.s32 %s48, %s47
          %s686 = smul.addr %s685, 128
          %s687 = scalar_lea.hbm %s6, %s686
          %s689 = sshll.u32 %s681, 4
          %s690 = int_to_ptr.vmem [resolvable:$true] %s689
          %692 = dma.hbm_to_vmem [thread:$0]  %s687, 128, %s690, %s678
        $region84: #{tpu_custom_call.1} parent=55 // pred_fallthru
          _
      $region56: #{tpu_custom_call.1} parent=5 // pred_fallthru
        _
      %p693 = scmp.le.s32.totalorder 1, %s40
      %p694 = scmp.lt.s32.totalorder %s40, 3
      %p695 = pnand %p693, %p694
      %p696 = pneg %p695
      // Predicated region
      $region85: #{tpu_custom_call.1} parent=5 // pred_check
        _
      $region86: #{tpu_custom_call.1} parent=5 // pred_check_branch
        %698 = sbr.rel (%p695) target = $region88
      $region87: #{tpu_custom_call.1} parent=5 // pred_region
        %s699 = ssub.s32 %s40, 1
        %s700 = sand.u32 %s67, 1
        %s701 = scalar_lea.sflag [#allocation4], %s700
        %s702 = sand.u32 %s67, 1
        %s703 = smul.addr %s702, 8
        %s704 = scalar_lea.vmem [#allocation3], %s703
        // Predicated region
        $region89: #{tpu_custom_call.1} parent=87 // pred_check
          %p705 = pneg %p80
        $region90: #{tpu_custom_call.1} parent=87 // pred_check_branch
          %707 = sbr.rel (%p705) target = $region92
        $region91: #{tpu_custom_call.1} parent=87 // pred_region
          %708 = dma.done %s701, 128
        $region92: #{tpu_custom_call.1} parent=87 // pred_fallthru
          _
        %s709 = sand.u32 %s45, 1
        %s710 = scalar_lea.sflag [#allocation7], %s709
        %s711 = sand.u32 %s119, 1
        %s712 = smul.addr %s711, 16
        %s713 = scalar_lea.vmem [#allocation6], %s712
        // Predicated region
        $region93: #{tpu_custom_call.1} parent=87 // pred_check
          %p714 = pneg %p132
        $region94: #{tpu_custom_call.1} parent=87 // pred_check_branch
          %716 = sbr.rel (%p714) target = $region96
        $region95: #{tpu_custom_call.1} parent=87 // pred_region
          %717 = dma.done %s710, 256
        $region96: #{tpu_custom_call.1} parent=87 // pred_fallthru
          _
        %s718 = sand.u32 %s45, 1
        %s719 = scalar_lea.sflag [#allocation7], %s718
        %s720 = sand.u32 %s145, 1
        %s721 = smul.addr %s720, 16
        %s722 = scalar_lea.vmem [#allocation8], %s721
        // Predicated region
        $region97: #{tpu_custom_call.1} parent=87 // pred_check
          %p723 = pneg %p158
        $region98: #{tpu_custom_call.1} parent=87 // pred_check_branch
          %725 = sbr.rel (%p723) target = $region100
        $region99: #{tpu_custom_call.1} parent=87 // pred_region
          %726 = dma.done %s719, 256
        $region100: #{tpu_custom_call.1} parent=87 // pred_fallthru
          _
        %s727 = sand.u32 %s45, 1
        %s728 = scalar_lea.sflag [#allocation10], %s727
        %s729 = sand.u32 %s171, 1
        %s730 = smul.addr %s729, 16
        %s731 = scalar_lea.vmem [#allocation9], %s730
        // Predicated region
        $region101: #{tpu_custom_call.1} parent=87 // pred_check
          %p732 = pneg %p184
        $region102: #{tpu_custom_call.1} parent=87 // pred_check_branch
          %734 = sbr.rel (%p732) target = $region104
        $region103: #{tpu_custom_call.1} parent=87 // pred_region
          %735 = dma.done %s728, 256
        $region104: #{tpu_custom_call.1} parent=87 // pred_fallthru
          _
        %s736 = sand.u32 %s45, 1
        %s737 = scalar_lea.sflag [#allocation10], %s736
        %s738 = sand.u32 %s197, 1
        %s739 = scalar_lea.vmem [#allocation11], %s738
        // Predicated region
        $region105: #{tpu_custom_call.1} parent=87 // pred_check
          %p740 = pneg %p210
        $region106: #{tpu_custom_call.1} parent=87 // pred_check_branch
          %742 = sbr.rel (%p740) target = $region108
        $region107: #{tpu_custom_call.1} parent=87 // pred_region
          %743 = dma.done %s737, 16
        $region108: #{tpu_custom_call.1} parent=87 // pred_fallthru
          _
        %s744 = sand.u32 %s45, 1
        %s745 = scalar_lea.sflag [#allocation13], %s744
        %s746 = sand.u32 %s225, 1
        %s747 = smul.addr %s746, 8
        %s748 = scalar_lea.vmem [#allocation12], %s747
        // Predicated region
        $region109: #{tpu_custom_call.1} parent=87 // pred_check
          %p749 = pneg %p238
        $region110: #{tpu_custom_call.1} parent=87 // pred_check_branch
          %751 = sbr.rel (%p749) target = $region112
        $region111: #{tpu_custom_call.1} parent=87 // pred_region
          %752 = dma.done %s745, 128
        $region112: #{tpu_custom_call.1} parent=87 // pred_fallthru
          _
        // Predicated region
        $region113: #{tpu_custom_call.1} parent=87 // pred_check
          %p753 = pneg %p259
        $region114: #{tpu_custom_call.1} parent=87 // pred_check_branch
          %755 = sbr.rel (%p753) target = $region116
        $region115: #{tpu_custom_call.1} parent=87 // pred_region
          %756 = dma.done [#allocation13], 64
        $region116: #{tpu_custom_call.1} parent=87 // pred_fallthru
          _
        // Predicated region
        $region117: #{tpu_custom_call.1} parent=87 // pred_check
          %p757 = pneg %p280
        $region118: #{tpu_custom_call.1} parent=87 // pred_check_branch
          %759 = sbr.rel (%p757) target = $region120
        $region119: #{tpu_custom_call.1} parent=87 // pred_region
          %760 = dma.done [#allocation16], 64
        $region120: #{tpu_custom_call.1} parent=87 // pred_fallthru
          _
        // Predicated region
        $region121: #{tpu_custom_call.1} parent=87 // pred_check
          %p761 = pneg %p322
        $region122: #{tpu_custom_call.1} parent=87 // pred_check_branch
          %763 = sbr.rel (%p761) target = $region124
        $region123: #{tpu_custom_call.1} parent=87 // pred_region
          %764 = dma.done [#allocation16], 512
        $region124: #{tpu_custom_call.1} parent=87 // pred_fallthru
          _
        // Predicated region
        $region125: #{tpu_custom_call.1} parent=87 // pred_check
          %p765 = pneg %p343
        $region126: #{tpu_custom_call.1} parent=87 // pred_check_branch
          %767 = sbr.rel (%p765) target = $region128
        $region127: #{tpu_custom_call.1} parent=87 // pred_region
          %768 = dma.done [#allocation19], 32
        $region128: #{tpu_custom_call.1} parent=87 // pred_fallthru
          _
        // Predicated region
        $region129: #{tpu_custom_call.1} parent=87 // pred_check
          %p769 = pneg %p364
        $region130: #{tpu_custom_call.1} parent=87 // pred_check_branch
          %771 = sbr.rel (%p769) target = $region132
        $region131: #{tpu_custom_call.1} parent=87 // pred_region
          %772 = dma.done [#allocation19], 32
        $region132: #{tpu_custom_call.1} parent=87 // pred_fallthru
          _
        %s773 = sand.u32 %s67, 1
        %s774 = scalar_lea.sflag [#allocation4], %s773
        %s775 = sand.u32 %s67, 1
        %s776 = smul.addr %s775, 8
        %s777 = scalar_lea.vmem [#allocation3], %s776
        %p778 = pneg %p80
        %p779 = pneg %p77
        %p780 = scmp.lt.s32.totalorder %s49, 1
        %s781 = scalar_select %p780, %s49, 1
        %s782 = smul.addr %s781, 4
        %s783 = smul.addr %s782, 4
        %s784 = scalar_lea.vmem %s1, %s783
        %p785 = pneg %p106
        %p786 = pneg %p103
        %s787 = sand.u32 %s45, 1
        %s788 = scalar_lea.sflag [#allocation7], %s787
        %s789 = sand.u32 %s119, 1
        %s790 = smul.addr %s789, 16
        %s791 = scalar_lea.vmem [#allocation6], %s790
        %p792 = pneg %p132
        %p793 = pneg %p129
        %s794 = sand.u32 %s45, 1
        %s795 = scalar_lea.sflag [#allocation7], %s794
        %s796 = sand.u32 %s145, 1
        %s797 = smul.addr %s796, 16
        %s798 = scalar_lea.vmem [#allocation8], %s797
        %p799 = pneg %p158
        %p800 = pneg %p155
        %s801 = sand.u32 %s45, 1
        %s802 = scalar_lea.sflag [#allocation10], %s801
        %s803 = sand.u32 %s171, 1
        %s804 = smul.addr %s803, 16
        %s805 = scalar_lea.vmem [#allocation9], %s804
        %p806 = pneg %p184
        %p807 = pneg %p181
        %s808 = sand.u32 %s45, 1
        %s809 = scalar_lea.sflag [#allocation10], %s808
        %s810 = sand.u32 %s197, 1
        %s811 = scalar_lea.vmem [#allocation11], %s810
        %p812 = pneg %p210
        %p813 = pneg %p207
        %s814 = sand.u32 %s45, 1
        %s815 = scalar_lea.sflag [#allocation13], %s814
        %s816 = sand.u32 %s225, 1
        %s817 = smul.addr %s816, 8
        %s818 = scalar_lea.vmem [#allocation12], %s817
        %p819 = pneg %p238
        %p820 = pneg %p235
        %p821 = pneg %p259
        %p822 = pneg %p256
        %p823 = pneg %p280
        %p824 = pneg %p277
        %p825 = pneg %p301
        %p826 = pneg %p298
        %p827 = pneg %p322
        %p828 = pneg %p319
        %p829 = pneg %p343
        %p830 = pneg %p340
        %p831 = pneg %p364
        %p832 = pneg %p361
        %p833 = pneg %p385
        %p834 = pneg %p382
        %p835 = pneg %p406
        %p836 = pneg %p403
        %p837 = pneg %p427
        %p838 = pneg %p424
        %p839 = pneg %p448
        %p840 = pneg %p445
        %p841 = pneg %p476
        %p842 = pneg %p473
        %s843 = sand.u32 %s463, 1
        %s844 = scalar_lea.sflag [#allocation5], %s843
        %s845 = sand.u32 %s463, 1
        %s846 = smul.addr %s845, 8
        %s847 = scalar_lea.vmem [#allocation21], %s846
        %p848 = scmp.lt.s32.totalorder %s49, 1
        %s849 = scalar_select %p848, %s49, 1
        %s850 = smul.addr %s849, 4
        %s851 = smul.addr %s850, 4
        %s852 = scalar_lea.vmem %s1, %s851
        %v854 = vld [vmem:[%s704] sm:$0xff]
        %v855 = vld [vmem:[#allocation14] sm:$0x7]
        %v856 = vld [vmem:[#allocation15] sm:$0x7]
        %v857 = vld [vmem:[#allocation18] sm:$0x3]
        %v858 = vld [vmem:[#allocation20] sm:$0x3]
        %v859 = vld [vmem:[%s748] sm:$0xff]
        %vm860 = vcmp.eq.f32.partialorder %v859, 0.0
        %v861 = vsel %vm860, -1e+09, 0.0
        %v862 = vld [vmem:[%s739] sm:$0x1]
        %vm863 = vcmp.eq.f32.partialorder %v862, 0.0
        %v864 = vsel %vm863, -1e+09, 0.0
        %vm865 = vcmask 261120
        %v866 = vsel %vm865, %v854, 0.0
        %867 = vadd.xlane.f32.xlu0 %v866
        %v868 = vpop.xlane.xlu0 %867
        %v869 = vrcp.pop 32.0
        %v870 = vmul.f32 %v868, %v869
        %v871 = vsub.f32 %v854, %v870
        %v872 = vmul.f32 %v871, %v871
        %v873 = vsel %vm865, %v872, 0.0
        %874 = vadd.xlane.f32.xlu0 %v873
        %v875 = vpop.xlane.xlu0 %874
        %v876 = vmul.f32 %v875, 0.032258064
        %v877 = vrsqrt.pop %v876
        %v878 = vmul.f32 %v876, %v877
        %vm879 = vcmp.eq.f32.partialorder %v876, inf
        %v880 = vsel %vm879, %v876, %v878
        %vm881 = vcmp.eq.f32.partialorder %v876, 0.0
        %v882 = vand.u32 %v876, 2147483648
        %v883 = vsel %vm881, %v882, %v880
        %v884 = vadd.f32 %v883, 1e-06
        %v885 = vrcp.pop %v884
        %v886 = vmul.f32 %v871, %v885
        %v887 = vlaneseq
        %v888 = vshrl.u32 %v887, 7
        %v889 = vsub.s32 0, %v888
        %v890 = vrot.slane %v855, %v889
        %v891 = vmul.f32 %v890, %v886
        %v892 = vlaneseq
        %v893 = vshrl.u32 %v892, 7
        %v894 = vsub.s32 0, %v893
        %v895 = vrot.slane %v856, %v894
        %v896 = vadd.f32 %v891, %v895
        %v897 = vpack.c.bf16 %v896, %v896
        %v898 = vld [vmem:[%s9] sm:$0xf]
        %v899 = vld [vmem:[%s9 + $0x4] sm:$0xf]
        %v900 = vld [vmem:[%s9 + $0x8] sm:$0xf]
        %v901 = vld [vmem:[%s9 + $0xc] sm:$0xf]
        %v902 = vlaneseq
        %v903 = vshrl.u32 %v902, 7
        %v904 = vsub.s32 0, %v903
        %v905 = vrot.slane %v857, %v904
        %v910 = vunpack.c.l.b16 %v898
        %v911 = vunpack.c.l.b16 %v899
        %v912 = vunpack.c.l.b16 %v900
        %v913 = vunpack.c.l.b16 %v901
        %v914 = vpack.c.b16 %v911, %v910
        %v915 = vpack.c.b16 %v913, %v912
        %v919 = vsel %vm865, %v897, 0
        %921 = vmatprep.subr.bf16.mxu0 0
        %922 = vmatpush1.bf16.msra.mxu0 %v914
        %923 = vmatprep.subr.bf16.mxu0 0
        %924 = vmatpush1.bf16.msra.mxu0 %v915
        %925 = vmatprep.subr.bf16.mxu0 0
        %926 = vmatpush1.bf16.msra.mxu0 0
        %927 = vmatprep.subr.bf16.mxu0 0
        %928 = vmatpush1.bf16.msra.mxu0 0
        %929 = vmatprep.subr.bf16.mxu0 0
        %930 = vmatpush1.bf16.msra.mxu0 0
        %931 = vmatprep.subr.bf16.mxu0 0
        %932 = vmatpush1.bf16.msra.mxu0 0
        %933 = vmatprep.subr.bf16.mxu0 0
        %934 = vmatpush1.bf16.msra.mxu0 0
        %935 = vmatprep.subr.bf16.mxu0 0
        %936 = vmatpush1.bf16.msra.mxu0 0
        %937 = vmatprep.subr.bf16.mxu0 0
        %938 = vmatpush1.bf16.msra.mxu0 0
        %939 = vmatprep.subr.bf16.mxu0 0
        %940 = vmatpush1.bf16.msra.mxu0 0
        %941 = vmatprep.subr.bf16.mxu0 0
        %942 = vmatpush1.bf16.msra.mxu0 0
        %943 = vmatprep.subr.bf16.mxu0 0
        %944 = vmatpush1.bf16.msra.mxu0 0
        %945 = vmatprep.subr.bf16.mxu0 0
        %946 = vmatpush1.bf16.msra.mxu0 0
        %947 = vmatprep.subr.bf16.mxu0 0
        %948 = vmatpush1.bf16.msra.mxu0 0
        %949 = vmatprep.subr.bf16.mxu0 0
        %950 = vmatpush1.bf16.msra.mxu0 0
        %951 = vmatprep.subr.bf16.mxu0 0
        %952 = vmatpush1.bf16.msra.mxu0 0
        %953 = vmatprep.mubr.bf16.mxu0 0
        %954 = vmatmul.mubr.bf16.gmra.mrb[0].mxu0 %v919
        %v955 = vpop.f32.mrb[0].mxu0
        %v956 = vadd.f32 %v905, %v955
        %v957 = vpop.f32.mrb[0].mxu0
        %v958 = vpop.f32.mrb[0].mxu0
        %v959 = vpop.f32.mrb[0].mxu0
        %960 = vdwg.mxu0
        %v961 = vpack.c.bf16 %v956, %v956
        %v962 = vld [vmem:[%s852] sm:$0xf]
        %vm963 = vcmask 64512
        %v965 = vsel %vm963, %v961, 0
        %vm967 = vcmask 1043456
        %v969 = vsel %vm967, %v962, 0
        %971 = vmatprep.subr.bf16.mxu0 0
        %972 = vmatpush1.bf16.msra.mxu0 %v969
        %973 = vmatprep.subr.bf16.mxu0 0
        %974 = vmatpush1.bf16.msra.mxu0 0
        %975 = vmatprep.subr.bf16.mxu0 0
        %976 = vmatpush1.bf16.msra.mxu0 0
        %977 = vmatprep.subr.bf16.mxu0 0
        %978 = vmatpush1.bf16.msra.mxu0 0
        %979 = vmatprep.subr.bf16.mxu0 0
        %980 = vmatpush1.bf16.msra.mxu0 0
        %981 = vmatprep.subr.bf16.mxu0 0
        %982 = vmatpush1.bf16.msra.mxu0 0
        %983 = vmatprep.subr.bf16.mxu0 0
        %984 = vmatpush1.bf16.msra.mxu0 0
        %985 = vmatprep.subr.bf16.mxu0 0
        %986 = vmatpush1.bf16.msra.mxu0 0
        %987 = vmatprep.subr.bf16.mxu0 0
        %988 = vmatpush1.bf16.msra.mxu0 0
        %989 = vmatprep.subr.bf16.mxu0 0
        %990 = vmatpush1.bf16.msra.mxu0 0
        %991 = vmatprep.subr.bf16.mxu0 0
        %992 = vmatpush1.bf16.msra.mxu0 0
        %993 = vmatprep.subr.bf16.mxu0 0
        %994 = vmatpush1.bf16.msra.mxu0 0
        %995 = vmatprep.subr.bf16.mxu0 0
        %996 = vmatpush1.bf16.msra.mxu0 0
        %997 = vmatprep.subr.bf16.mxu0 0
        %998 = vmatpush1.bf16.msra.mxu0 0
        %999 = vmatprep.subr.bf16.mxu0 0
        %1000 = vmatpush1.bf16.msra.mxu0 0
        %1001 = vmatprep.subr.bf16.mxu0 0
        %1002 = vmatpush1.bf16.msra.mxu0 0
        %1003 = vmatprep.mubr.bf16.mxu0 0
        %1004 = vmatmul.mubr.bf16.gmra.mrb[0].mxu0 %v965
        %v1005 = vpop.f32.mrb[0].mxu0
        %v1006 = vadd.f32 %v861, %v1005
        %v1007 = vpop.f32.mrb[0].mxu0
        %v1008 = vpop.f32.mrb[0].mxu0
        %v1009 = vpop.f32.mrb[0].mxu0
        %1010 = vdwg.mxu0
        %v1011 = vsel %vm963, %v1006, -inf
        %1012 = vmax.xlane.f32.xlu0 %v1011
        %v1013 = vpop.xlane.xlu0 %1012
        %v1014 = vsub.f32 %v1006, %v1013
        %v1015 = vmul.f32 %v1014, 1.442695
        %v1016 = vpow.pop %v1015
        %v1017 = vsel %vm963, %v1016, 0.0
        %1018 = vadd.xlane.f32.xlu0 %v1017
        %v1019 = vpop.xlane.xlu0 %1018
        %v1020 = vrcp.pop %v1019
        %v1021 = vmul.f32 %v1016, %v1020
        %v1022 = vpack.c.bf16 %v1021, %v1021
        %v1023 = vld [vmem:[%s713] sm:$0xf]
        %v1025 = vsel %vm963, %v1022, 0
        %v1028 = vsel %vm967, %v1023, 0
        %1030 = vmatprep.subr.bf16.mxu0 0
        %1031 = vmatpush1.bf16.msra.mxu0 %v1028
        %1032 = vmatprep.subr.bf16.mxu0 0
        %1033 = vmatpush1.bf16.msra.mxu0 0
        %1034 = vmatprep.subr.bf16.mxu0 0
        %1035 = vmatpush1.bf16.msra.mxu0 0
        %1036 = vmatprep.subr.bf16.mxu0 0
        %1037 = vmatpush1.bf16.msra.mxu0 0
        %1038 = vmatprep.subr.bf16.mxu0 0
        %1039 = vmatpush1.bf16.msra.mxu0 0
        %1040 = vmatprep.subr.bf16.mxu0 0
        %1041 = vmatpush1.bf16.msra.mxu0 0
        %1042 = vmatprep.subr.bf16.mxu0 0
        %1043 = vmatpush1.bf16.msra.mxu0 0
        %1044 = vmatprep.subr.bf16.mxu0 0
        %1045 = vmatpush1.bf16.msra.mxu0 0
        %1046 = vmatprep.subr.bf16.mxu0 0
        %1047 = vmatpush1.bf16.msra.mxu0 0
        %1048 = vmatprep.subr.bf16.mxu0 0
        %1049 = vmatpush1.bf16.msra.mxu0 0
        %1050 = vmatprep.subr.bf16.mxu0 0
        %1051 = vmatpush1.bf16.msra.mxu0 0
        %1052 = vmatprep.subr.bf16.mxu0 0
        %1053 = vmatpush1.bf16.msra.mxu0 0
        %1054 = vmatprep.subr.bf16.mxu0 0
        %1055 = vmatpush1.bf16.msra.mxu0 0
        %1056 = vmatprep.subr.bf16.mxu0 0
        %1057 = vmatpush1.bf16.msra.mxu0 0
        %1058 = vmatprep.subr.bf16.mxu0 0
        %1059 = vmatpush1.bf16.msra.mxu0 0
        %1060 = vmatprep.subr.bf16.mxu0 0
        %1061 = vmatpush1.bf16.msra.mxu0 0
        %1062 = vmatprep.mubr.bf16.mxu0 0
        %1063 = vmatmul.mubr.bf16.gmra.mrb[0].mxu0 %v1025
        %v1064 = vpop.f32.mrb[0].mxu0
        %v1065 = vadd.f32 0.0, %v1064
        %v1066 = vpop.f32.mrb[0].mxu0
        %v1067 = vpop.f32.mrb[0].mxu0
        %v1068 = vpop.f32.mrb[0].mxu0
        %1069 = vdwg.mxu0
        %v1070 = vpack.c.bf16 %v1065, %v1065
        %vm1071 = vcmask 60416
        %1072 = vst.msk [vmem:[#allocation2] sm:$0xf] %vm1071, %v1070
        %s1073 = scalar_lea.vmem %s852, 4
        %v1074 = vld [vmem:[%s1073] sm:$0xf]
        %1076 = vrot.lane.b32.xlu0 %v961, 120
        %v1077 = vpop.permute.xlu0 %1076
        %v1079 = vsel %vm963, %v1077, 0
        %v1082 = vsel %vm967, %v1074, 0
        %1084 = vmatprep.subr.bf16.mxu0 0
        %1085 = vmatpush1.bf16.msra.mxu0 %v1082
        %1086 = vmatprep.subr.bf16.mxu0 0
        %1087 = vmatpush1.bf16.msra.mxu0 0
        %1088 = vmatprep.subr.bf16.mxu0 0
        %1089 = vmatpush1.bf16.msra.mxu0 0
        %1090 = vmatprep.subr.bf16.mxu0 0
        %1091 = vmatpush1.bf16.msra.mxu0 0
        %1092 = vmatprep.subr.bf16.mxu0 0
        %1093 = vmatpush1.bf16.msra.mxu0 0
        %1094 = vmatprep.subr.bf16.mxu0 0
        %1095 = vmatpush1.bf16.msra.mxu0 0
        %1096 = vmatprep.subr.bf16.mxu0 0
        %1097 = vmatpush1.bf16.msra.mxu0 0
        %1098 = vmatprep.subr.bf16.mxu0 0
        %1099 = vmatpush1.bf16.msra.mxu0 0
        %1100 = vmatprep.subr.bf16.mxu0 0
        %1101 = vmatpush1.bf16.msra.mxu0 0
        %1102 = vmatprep.subr.bf16.mxu0 0
        %1103 = vmatpush1.bf16.msra.mxu0 0
        %1104 = vmatprep.subr.bf16.mxu0 0
        %1105 = vmatpush1.bf16.msra.mxu0 0
        %1106 = vmatprep.subr.bf16.mxu0 0
        %1107 = vmatpush1.bf16.msra.mxu0 0
        %1108 = vmatprep.subr.bf16.mxu0 0
        %1109 = vmatpush1.bf16.msra.mxu0 0
        %1110 = vmatprep.subr.bf16.mxu0 0
        %1111 = vmatpush1.bf16.msra.mxu0 0
        %1112 = vmatprep.subr.bf16.mxu0 0
        %1113 = vmatpush1.bf16.msra.mxu0 0
        %1114 = vmatprep.subr.bf16.mxu0 0
        %1115 = vmatpush1.bf16.msra.mxu0 0
        %1116 = vmatprep.mubr.bf16.mxu0 0
        %1117 = vmatmul.mubr.bf16.gmra.mrb[0].mxu0 %v1079
        %v1118 = vpop.f32.mrb[0].mxu0
        %v1119 = vadd.f32 %v861, %v1118
        %v1120 = vpop.f32.mrb[0].mxu0
        %v1121 = vpop.f32.mrb[0].mxu0
        %v1122 = vpop.f32.mrb[0].mxu0
        %1123 = vdwg.mxu0
        %v1124 = vsel %vm963, %v1119, -inf
        %1125 = vmax.xlane.f32.xlu0 %v1124
        %v1126 = vpop.xlane.xlu0 %1125
        %v1127 = vsub.f32 %v1119, %v1126
        %v1128 = vmul.f32 %v1127, 1.442695
        %v1129 = vpow.pop %v1128
        %v1130 = vsel %vm963, %v1129, 0.0
        %1131 = vadd.xlane.f32.xlu0 %v1130
        %v1132 = vpop.xlane.xlu0 %1131
        %v1133 = vrcp.pop %v1132
        %v1134 = vmul.f32 %v1129, %v1133
        %v1135 = vpack.c.bf16 %v1134, %v1134
        %s1136 = scalar_lea.vmem %s713, 4 [#allocation6]
        %v1137 = vld [vmem:[%s1136] sm:$0xf]
        %v1139 = vsel %vm963, %v1135, 0
        %v1142 = vsel %vm967, %v1137, 0
        %1144 = vmatprep.subr.bf16.mxu0 0
        %1145 = vmatpush1.bf16.msra.mxu0 %v1142
        %1146 = vmatprep.subr.bf16.mxu0 0
        %1147 = vmatpush1.bf16.msra.mxu0 0
        %1148 = vmatprep.subr.bf16.mxu0 0
        %1149 = vmatpush1.bf16.msra.mxu0 0
        %1150 = vmatprep.subr.bf16.mxu0 0
        %1151 = vmatpush1.bf16.msra.mxu0 0
        %1152 = vmatprep.subr.bf16.mxu0 0
        %1153 = vmatpush1.bf16.msra.mxu0 0
        %1154 = vmatprep.subr.bf16.mxu0 0
        %1155 = vmatpush1.bf16.msra.mxu0 0
        %1156 = vmatprep.subr.bf16.mxu0 0
        %1157 = vmatpush1.bf16.msra.mxu0 0
        %1158 = vmatprep.subr.bf16.mxu0 0
        %1159 = vmatpush1.bf16.msra.mxu0 0
        %1160 = vmatprep.subr.bf16.mxu0 0
        %1161 = vmatpush1.bf16.msra.mxu0 0
        %1162 = vmatprep.subr.bf16.mxu0 0
        %1163 = vmatpush1.bf16.msra.mxu0 0
        %1164 = vmatprep.subr.bf16.mxu0 0
        %1165 = vmatpush1.bf16.msra.mxu0 0
        %1166 = vmatprep.subr.bf16.mxu0 0
        %1167 = vmatpush1.bf16.msra.mxu0 0
        %1168 = vmatprep.subr.bf16.mxu0 0
        %1169 = vmatpush1.bf16.msra.mxu0 0
        %1170 = vmatprep.subr.bf16.mxu0 0
        %1171 = vmatpush1.bf16.msra.mxu0 0
        %1172 = vmatprep.subr.bf16.mxu0 0
        %1173 = vmatpush1.bf16.msra.mxu0 0
        %1174 = vmatprep.subr.bf16.mxu0 0
        %1175 = vmatpush1.bf16.msra.mxu0 0
        %1176 = vmatprep.mubr.bf16.mxu0 0
        %1177 = vmatmul.mubr.bf16.gmra.mrb[0].mxu0 %v1139
        %v1178 = vpop.f32.mrb[0].mxu0
        %v1179 = vadd.f32 0.0, %v1178
        %v1180 = vpop.f32.mrb[0].mxu0
        %v1181 = vpop.f32.mrb[0].mxu0
        %v1182 = vpop.f32.mrb[0].mxu0
        %1183 = vdwg.mxu0
        %v1184 = vpack.c.bf16 %v1179, %v1179
        %v1186 = vunpack.c.l.b16 %v1184
        %v1187 = vpack.c.b16 %v1186, %v1186
        %1188 = vrot.lane.b32.xlu0 %v1187, 8
        %v1189 = vpop.permute.xlu0 %1188
        %vm1191 = vcmask 126016
        %1192 = vst.msk [vmem:[#allocation2] sm:$0xf] %vm1191, %v1189
        %s1193 = scalar_lea.vmem %s852, 8
        %v1194 = vld [vmem:[%s1193] sm:$0xf]
        %1195 = vrot.lane.b32.xlu0 %v961, 112
        %v1196 = vpop.permute.xlu0 %1195
        %v1198 = vsel %vm963, %v1196, 0
        %v1201 = vsel %vm967, %v1194, 0
        %1203 = vmatprep.subr.bf16.mxu0 0
        %1204 = vmatpush1.bf16.msra.mxu0 %v1201
        %1205 = vmatprep.subr.bf16.mxu0 0
        %1206 = vmatpush1.bf16.msra.mxu0 0
        %1207 = vmatprep.subr.bf16.mxu0 0
        %1208 = vmatpush1.bf16.msra.mxu0 0
        %1209 = vmatprep.subr.bf16.mxu0 0
        %1210 = vmatpush1.bf16.msra.mxu0 0
        %1211 = vmatprep.subr.bf16.mxu0 0
        %1212 = vmatpush1.bf16.msra.mxu0 0
        %1213 = vmatprep.subr.bf16.mxu0 0
        %1214 = vmatpush1.bf16.msra.mxu0 0
        %1215 = vmatprep.subr.bf16.mxu0 0
        %1216 = vmatpush1.bf16.msra.mxu0 0
        %1217 = vmatprep.subr.bf16.mxu0 0
        %1218 = vmatpush1.bf16.msra.mxu0 0
        %1219 = vmatprep.subr.bf16.mxu0 0
        %1220 = vmatpush1.bf16.msra.mxu0 0
        %1221 = vmatprep.subr.bf16.mxu0 0
        %1222 = vmatpush1.bf16.msra.mxu0 0
        %1223 = vmatprep.subr.bf16.mxu0 0
        %1224 = vmatpush1.bf16.msra.mxu0 0
        %1225 = vmatprep.subr.bf16.mxu0 0
        %1226 = vmatpush1.bf16.msra.mxu0 0
        %1227 = vmatprep.subr.bf16.mxu0 0
        %1228 = vmatpush1.bf16.msra.mxu0 0
        %1229 = vmatprep.subr.bf16.mxu0 0
        %1230 = vmatpush1.bf16.msra.mxu0 0
        %1231 = vmatprep.subr.bf16.mxu0 0
        %1232 = vmatpush1.bf16.msra.mxu0 0
        %1233 = vmatprep.subr.bf16.mxu0 0
        %1234 = vmatpush1.bf16.msra.mxu0 0
        %1235 = vmatprep.mubr.bf16.mxu0 0
        %1236 = vmatmul.mubr.bf16.gmra.mrb[0].mxu0 %v1198
        %v1237 = vpop.f32.mrb[0].mxu0
        %v1238 = vadd.f32 %v861, %v1237
        %v1239 = vpop.f32.mrb[0].mxu0
        %v1240 = vpop.f32.mrb[0].mxu0
        %v1241 = vpop.f32.mrb[0].mxu0
        %1242 = vdwg.mxu0
        %v1243 = vsel %vm963, %v1238, -inf
        %1244 = vmax.xlane.f32.xlu0 %v1243
        %v1245 = vpop.xlane.xlu0 %1244
        %v1246 = vsub.f32 %v1238, %v1245
        %v1247 = vmul.f32 %v1246, 1.442695
        %v1248 = vpow.pop %v1247
        %v1249 = vsel %vm963, %v1248, 0.0
        %1250 = vadd.xlane.f32.xlu0 %v1249
        %v1251 = vpop.xlane.xlu0 %1250
        %v1252 = vrcp.pop %v1251
        %v1253 = vmul.f32 %v1248, %v1252
        %v1254 = vpack.c.bf16 %v1253, %v1253
        %s1255 = scalar_lea.vmem %s713, 8 [#allocation6]
        %v1256 = vld [vmem:[%s1255] sm:$0xf]
        %v1258 = vsel %vm963, %v1254, 0
        %v1261 = vsel %vm967, %v1256, 0
        %1263 = vmatprep.subr.bf16.mxu0 0
        %1264 = vmatpush1.bf16.msra.mxu0 %v1261
        %1265 = vmatprep.subr.bf16.mxu0 0
        %1266 = vmatpush1.bf16.msra.mxu0 0
        %1267 = vmatprep.subr.bf16.mxu0 0
        %1268 = vmatpush1.bf16.msra.mxu0 0
        %1269 = vmatprep.subr.bf16.mxu0 0
        %1270 = vmatpush1.bf16.msra.mxu0 0
        %1271 = vmatprep.subr.bf16.mxu0 0
        %1272 = vmatpush1.bf16.msra.mxu0 0
        %1273 = vmatprep.subr.bf16.mxu0 0
        %1274 = vmatpush1.bf16.msra.mxu0 0
        %1275 = vmatprep.subr.bf16.mxu0 0
        %1276 = vmatpush1.bf16.msra.mxu0 0
        %1277 = vmatprep.subr.bf16.mxu0 0
        %1278 = vmatpush1.bf16.msra.mxu0 0
        %1279 = vmatprep.subr.bf16.mxu0 0
        %1280 = vmatpush1.bf16.msra.mxu0 0
        %1281 = vmatprep.subr.bf16.mxu0 0
        %1282 = vmatpush1.bf16.msra.mxu0 0
        %1283 = vmatprep.subr.bf16.mxu0 0
        %1284 = vmatpush1.bf16.msra.mxu0 0
        %1285 = vmatprep.subr.bf16.mxu0 0
        %1286 = vmatpush1.bf16.msra.mxu0 0
        %1287 = vmatprep.subr.bf16.mxu0 0
        %1288 = vmatpush1.bf16.msra.mxu0 0
        %1289 = vmatprep.subr.bf16.mxu0 0
        %1290 = vmatpush1.bf16.msra.mxu0 0
        %1291 = vmatprep.subr.bf16.mxu0 0
        %1292 = vmatpush1.bf16.msra.mxu0 0
        %1293 = vmatprep.subr.bf16.mxu0 0
        %1294 = vmatpush1.bf16.msra.mxu0 0
        %1295 = vmatprep.mubr.bf16.mxu0 0
        %1296 = vmatmul.mubr.bf16.gmra.mrb[0].mxu0 %v1258
        %v1297 = vpop.f32.mrb[0].mxu0
        %v1298 = vadd.f32 0.0, %v1297
        %v1299 = vpop.f32.mrb[0].mxu0
        %v1300 = vpop.f32.mrb[0].mxu0
        %v1301 = vpop.f32.mrb[0].mxu0
        %1302 = vdwg.mxu0
        %v1303 = vpack.c.bf16 %v1298, %v1298
        %v1305 = vunpack.c.l.b16 %v1303
        %v1306 = vpack.c.b16 %v1305, %v1305
        %1307 = vrot.lane.b32.xlu0 %v1306, 16
        %v1308 = vpop.permute.xlu0 %1307
        %vm1310 = vcmask 191616
        %1311 = vst.msk [vmem:[#allocation2] sm:$0xf] %vm1310, %v1308
        %s1312 = scalar_lea.vmem %s852, 12
        %v1313 = vld [vmem:[%s1312] sm:$0xf]
        %1314 = vrot.lane.b32.xlu0 %v961, 104
        %v1315 = vpop.permute.xlu0 %1314
        %v1317 = vsel %vm963, %v1315, 0
        %v1320 = vsel %vm967, %v1313, 0
        %1322 = vmatprep.subr.bf16.mxu0 0
        %1323 = vmatpush1.bf16.msra.mxu0 %v1320
        %1324 = vmatprep.subr.bf16.mxu0 0
        %1325 = vmatpush1.bf16.msra.mxu0 0
        %1326 = vmatprep.subr.bf16.mxu0 0
        %1327 = vmatpush1.bf16.msra.mxu0 0
        %1328 = vmatprep.subr.bf16.mxu0 0
        %1329 = vmatpush1.bf16.msra.mxu0 0
        %1330 = vmatprep.subr.bf16.mxu0 0
        %1331 = vmatpush1.bf16.msra.mxu0 0
        %1332 = vmatprep.subr.bf16.mxu0 0
        %1333 = vmatpush1.bf16.msra.mxu0 0
        %1334 = vmatprep.subr.bf16.mxu0 0
        %1335 = vmatpush1.bf16.msra.mxu0 0
        %1336 = vmatprep.subr.bf16.mxu0 0
        %1337 = vmatpush1.bf16.msra.mxu0 0
        %1338 = vmatprep.subr.bf16.mxu0 0
        %1339 = vmatpush1.bf16.msra.mxu0 0
        %1340 = vmatprep.subr.bf16.mxu0 0
        %1341 = vmatpush1.bf16.msra.mxu0 0
        %1342 = vmatprep.subr.bf16.mxu0 0
        %1343 = vmatpush1.bf16.msra.mxu0 0
        %1344 = vmatprep.subr.bf16.mxu0 0
        %1345 = vmatpush1.bf16.msra.mxu0 0
        %1346 = vmatprep.subr.bf16.mxu0 0
        %1347 = vmatpush1.bf16.msra.mxu0 0
        %1348 = vmatprep.subr.bf16.mxu0 0
        %1349 = vmatpush1.bf16.msra.mxu0 0
        %1350 = vmatprep.subr.bf16.mxu0 0
        %1351 = vmatpush1.bf16.msra.mxu0 0
        %1352 = vmatprep.subr.bf16.mxu0 0
        %1353 = vmatpush1.bf16.msra.mxu0 0
        %1354 = vmatprep.mubr.bf16.mxu0 0
        %1355 = vmatmul.mubr.bf16.gmra.mrb[0].mxu0 %v1317
        %v1356 = vpop.f32.mrb[0].mxu0
        %v1357 = vadd.f32 %v861, %v1356
        %v1358 = vpop.f32.mrb[0].mxu0
        %v1359 = vpop.f32.mrb[0].mxu0
        %v1360 = vpop.f32.mrb[0].mxu0
        %1361 = vdwg.mxu0
        %v1362 = vsel %vm963, %v1357, -inf
        %1363 = vmax.xlane.f32.xlu0 %v1362
        %v1364 = vpop.xlane.xlu0 %1363
        %v1365 = vsub.f32 %v1357, %v1364
        %v1366 = vmul.f32 %v1365, 1.442695
        %v1367 = vpow.pop %v1366
        %v1368 = vsel %vm963, %v1367, 0.0
        %1369 = vadd.xlane.f32.xlu0 %v1368
        %v1370 = vpop.xlane.xlu0 %1369
        %v1371 = vrcp.pop %v1370
        %v1372 = vmul.f32 %v1367, %v1371
        %v1373 = vpack.c.bf16 %v1372, %v1372
        %s1374 = scalar_lea.vmem %s713, 12 [#allocation6]
        %v1375 = vld [vmem:[%s1374] sm:$0xf]
        %v1377 = vsel %vm963, %v1373, 0
        %v1380 = vsel %vm967, %v1375, 0
        %1382 = vmatprep.subr.bf16.mxu0 0
        %1383 = vmatpush1.bf16.msra.mxu0 %v1380
        %1384 = vmatprep.subr.bf16.mxu0 0
        %1385 = vmatpush1.bf16.msra.mxu0 0
        %1386 = vmatprep.subr.bf16.mxu0 0
        %1387 = vmatpush1.bf16.msra.mxu0 0
        %1388 = vmatprep.subr.bf16.mxu0 0
        %1389 = vmatpush1.bf16.msra.mxu0 0
        %1390 = vmatprep.subr.bf16.mxu0 0
        %1391 = vmatpush1.bf16.msra.mxu0 0
        %1392 = vmatprep.subr.bf16.mxu0 0
        %1393 = vmatpush1.bf16.msra.mxu0 0
        %1394 = vmatprep.subr.bf16.mxu0 0
        %1395 = vmatpush1.bf16.msra.mxu0 0
        %1396 = vmatprep.subr.bf16.mxu0 0
        %1397 = vmatpush1.bf16.msra.mxu0 0
        %1398 = vmatprep.subr.bf16.mxu0 0
        %1399 = vmatpush1.bf16.msra.mxu0 0
        %1400 = vmatprep.subr.bf16.mxu0 0
        %1401 = vmatpush1.bf16.msra.mxu0 0
        %1402 = vmatprep.subr.bf16.mxu0 0
        %1403 = vmatpush1.bf16.msra.mxu0 0
        %1404 = vmatprep.subr.bf16.mxu0 0
        %1405 = vmatpush1.bf16.msra.mxu0 0
        %1406 = vmatprep.subr.bf16.mxu0 0
        %1407 = vmatpush1.bf16.msra.mxu0 0
        %1408 = vmatprep.subr.bf16.mxu0 0
        %1409 = vmatpush1.bf16.msra.mxu0 0
        %1410 = vmatprep.subr.bf16.mxu0 0
        %1411 = vmatpush1.bf16.msra.mxu0 0
        %1412 = vmatprep.subr.bf16.mxu0 0
        %1413 = vmatpush1.bf16.msra.mxu0 0
        %1414 = vmatprep.mubr.bf16.mxu0 0
        %1415 = vmatmul.mubr.bf16.gmra.mrb[0].mxu0 %v1377
        %v1416 = vpop.f32.mrb[0].mxu0
        %v1417 = vadd.f32 0.0, %v1416
        %v1418 = vpop.f32.mrb[0].mxu0
        %v1419 = vpop.f32.mrb[0].mxu0
        %v1420 = vpop.f32.mrb[0].mxu0
        %1421 = vdwg.mxu0
        %v1422 = vpack.c.bf16 %v1417, %v1417
        %v1424 = vunpack.c.l.b16 %v1422
        %v1425 = vpack.c.b16 %v1424, %v1424
        %1426 = vrot.lane.b32.xlu0 %v1425, 24
        %v1427 = vpop.permute.xlu0 %1426
        %vm1429 = vcmask 257216
        %1430 = vst.msk [vmem:[#allocation2] sm:$0xf] %vm1429, %v1427
        %v1431 = vld [vmem:[#allocation2] sm:$0xf]
        %v1432 = vld [vmem:[#allocation17] sm:$0xf]
        %v1433 = vld [vmem:[#allocation17 + $0x4] sm:$0xf]
        %v1434 = vld [vmem:[#allocation17 + $0x8] sm:$0xf]
        %v1435 = vld [vmem:[#allocation17 + $0xc] sm:$0xf]
        %v1436 = vlaneseq
        %v1437 = vshrl.u32 %v1436, 7
        %v1438 = vsub.s32 0, %v1437
        %v1439 = vrot.slane %v858, %v1438
        %v1444 = vunpack.c.l.b16 %v1432
        %v1445 = vunpack.c.l.b16 %v1433
        %v1446 = vunpack.c.l.b16 %v1434
        %v1447 = vunpack.c.l.b16 %v1435
        %v1448 = vpack.c.b16 %v1445, %v1444
        %v1449 = vpack.c.b16 %v1447, %v1446
        %v1453 = vsel %vm865, %v1431, 0
        %1455 = vmatprep.subr.bf16.mxu0 0
        %1456 = vmatpush1.bf16.msra.mxu0 %v1448
        %1457 = vmatprep.subr.bf16.mxu0 0
        %1458 = vmatpush1.bf16.msra.mxu0 %v1449
        %1459 = vmatprep.subr.bf16.mxu0 0
        %1460 = vmatpush1.bf16.msra.mxu0 0
        %1461 = vmatprep.subr.bf16.mxu0 0
        %1462 = vmatpush1.bf16.msra.mxu0 0
        %1463 = vmatprep.subr.bf16.mxu0 0
        %1464 = vmatpush1.bf16.msra.mxu0 0
        %1465 = vmatprep.subr.bf16.mxu0 0
        %1466 = vmatpush1.bf16.msra.mxu0 0
        %1467 = vmatprep.subr.bf16.mxu0 0
        %1468 = vmatpush1.bf16.msra.mxu0 0
        %1469 = vmatprep.subr.bf16.mxu0 0
        %1470 = vmatpush1.bf16.msra.mxu0 0
        %1471 = vmatprep.subr.bf16.mxu0 0
        %1472 = vmatpush1.bf16.msra.mxu0 0
        %1473 = vmatprep.subr.bf16.mxu0 0
        %1474 = vmatpush1.bf16.msra.mxu0 0
        %1475 = vmatprep.subr.bf16.mxu0 0
        %1476 = vmatpush1.bf16.msra.mxu0 0
        %1477 = vmatprep.subr.bf16.mxu0 0
        %1478 = vmatpush1.bf16.msra.mxu0 0
        %1479 = vmatprep.subr.bf16.mxu0 0
        %1480 = vmatpush1.bf16.msra.mxu0 0
        %1481 = vmatprep.subr.bf16.mxu0 0
        %1482 = vmatpush1.bf16.msra.mxu0 0
        %1483 = vmatprep.subr.bf16.mxu0 0
        %1484 = vmatpush1.bf16.msra.mxu0 0
        %1485 = vmatprep.subr.bf16.mxu0 0
        %1486 = vmatpush1.bf16.msra.mxu0 0
        %1487 = vmatprep.mubr.bf16.mxu0 0
        %1488 = vmatmul.mubr.bf16.gmra.mrb[0].mxu0 %v1453
        %v1489 = vpop.f32.mrb[0].mxu0
        %v1490 = vadd.f32 %v1439, %v1489
        %v1491 = vpop.f32.mrb[0].mxu0
        %v1492 = vpop.f32.mrb[0].mxu0
        %v1493 = vpop.f32.mrb[0].mxu0
        %1494 = vdwg.mxu0
        %v1495 = vadd.f32 %v854, %v1490
        %v1496 = vsel %vm865, %v1495, 0.0
        %1497 = vadd.xlane.f32.xlu0 %v1496
        %v1498 = vpop.xlane.xlu0 %1497
        %v1499 = vmul.f32 %v1498, %v869
        %v1500 = vsub.f32 %v1495, %v1499
        %v1501 = vmul.f32 %v1500, %v1500
        %v1502 = vsel %vm865, %v1501, 0.0
        %1503 = vadd.xlane.f32.xlu0 %v1502
        %v1504 = vpop.xlane.xlu0 %1503
        %v1505 = vmul.f32 %v1504, 0.032258064
        %v1506 = vrsqrt.pop %v1505
        %v1507 = vmul.f32 %v1505, %v1506
        %vm1508 = vcmp.eq.f32.partialorder %v1505, inf
        %v1509 = vsel %vm1508, %v1505, %v1507
        %vm1510 = vcmp.eq.f32.partialorder %v1505, 0.0
        %v1511 = vand.u32 %v1505, 2147483648
        %v1512 = vsel %vm1510, %v1511, %v1509
        %v1513 = vadd.f32 %v1512, 1e-06
        %v1514 = vrcp.pop %v1513
        %v1515 = vmul.f32 %v1500, %v1514
        %v1516 = vlaneseq
        %v1517 = vshrl.u32 %v1516, 7
        %v1518 = vsub.s32 1, %v1517
        %v1519 = vrot.slane %v855, %v1518
        %v1520 = vmul.f32 %v1519, %v1515
        %v1521 = vlaneseq
        %v1522 = vshrl.u32 %v1521, 7
        %v1523 = vsub.s32 1, %v1522
        %v1524 = vrot.slane %v856, %v1523
        %v1525 = vadd.f32 %v1520, %v1524
        %v1526 = vpack.c.bf16 %v1525, %v1525
        %s1527 = scalar_lea.vmem %s9, 16
        %v1528 = vld [vmem:[%s1527] sm:$0xf]
        %v1529 = vld [vmem:[%s1527 + $0x4] sm:$0xf]
        %v1530 = vld [vmem:[%s1527 + $0x8] sm:$0xf]
        %v1531 = vld [vmem:[%s1527 + $0xc] sm:$0xf]
        %v1532 = vlaneseq
        %v1533 = vshrl.u32 %v1532, 7
        %v1534 = vsub.s32 1, %v1533
        %v1535 = vrot.slane %v857, %v1534
        %v1540 = vunpack.c.l.b16 %v1528
        %v1541 = vunpack.c.l.b16 %v1529
        %v1542 = vunpack.c.l.b16 %v1530
        %v1543 = vunpack.c.l.b16 %v1531
        %v1544 = vpack.c.b16 %v1541, %v1540
        %v1545 = vpack.c.b16 %v1543, %v1542
        %v1549 = vsel %vm865, %v1526, 0
        %1551 = vmatprep.subr.bf16.mxu0 0
        %1552 = vmatpush1.bf16.msra.mxu0 %v1544
        %1553 = vmatprep.subr.bf16.mxu0 0
        %1554 = vmatpush1.bf16.msra.mxu0 %v1545
        %1555 = vmatprep.subr.bf16.mxu0 0
        %1556 = vmatpush1.bf16.msra.mxu0 0
        %1557 = vmatprep.subr.bf16.mxu0 0
        %1558 = vmatpush1.bf16.msra.mxu0 0
        %1559 = vmatprep.subr.bf16.mxu0 0
        %1560 = vmatpush1.bf16.msra.mxu0 0
        %1561 = vmatprep.subr.bf16.mxu0 0
        %1562 = vmatpush1.bf16.msra.mxu0 0
        %1563 = vmatprep.subr.bf16.mxu0 0
        %1564 = vmatpush1.bf16.msra.mxu0 0
        %1565 = vmatprep.subr.bf16.mxu0 0
        %1566 = vmatpush1.bf16.msra.mxu0 0
        %1567 = vmatprep.subr.bf16.mxu0 0
        %1568 = vmatpush1.bf16.msra.mxu0 0
        %1569 = vmatprep.subr.bf16.mxu0 0
        %1570 = vmatpush1.bf16.msra.mxu0 0
        %1571 = vmatprep.subr.bf16.mxu0 0
        %1572 = vmatpush1.bf16.msra.mxu0 0
        %1573 = vmatprep.subr.bf16.mxu0 0
        %1574 = vmatpush1.bf16.msra.mxu0 0
        %1575 = vmatprep.subr.bf16.mxu0 0
        %1576 = vmatpush1.bf16.msra.mxu0 0
        %1577 = vmatprep.subr.bf16.mxu0 0
        %1578 = vmatpush1.bf16.msra.mxu0 0
        %1579 = vmatprep.subr.bf16.mxu0 0
        %1580 = vmatpush1.bf16.msra.mxu0 0
        %1581 = vmatprep.subr.bf16.mxu0 0
        %1582 = vmatpush1.bf16.msra.mxu0 0
        %1583 = vmatprep.mubr.bf16.mxu0 0
        %1584 = vmatmul.mubr.bf16.gmra.mrb[0].mxu0 %v1549
        %v1585 = vpop.f32.mrb[0].mxu0
        %v1586 = vadd.f32 %v1535, %v1585
        %v1587 = vpop.f32.mrb[0].mxu0
        %v1588 = vpop.f32.mrb[0].mxu0
        %v1589 = vpop.f32.mrb[0].mxu0
        %1590 = vdwg.mxu0
        %v1591 = vpack.c.bf16 %v1586, %v1586
        %v1592 = vld [vmem:[%s722] sm:$0xf]
        %v1594 = vlaneseq
        %v1595 = vshrl.u32 %v1594, 7
        %v1596 = vsub.s32 0, %v1595
        %v1597 = vrot.slane %v864, %v1596
        %v1600 = vsel %vm963, %v1591, 0
        %v1603 = vsel %vm967, %v1592, 0
        %1605 = vmatprep.subr.bf16.mxu0 0
        %1606 = vmatpush1.bf16.msra.mxu0 %v1603
        %1607 = vmatprep.subr.bf16.mxu0 0
        %1608 = vmatpush1.bf16.msra.mxu0 0
        %1609 = vmatprep.subr.bf16.mxu0 0
        %1610 = vmatpush1.bf16.msra.mxu0 0
        %1611 = vmatprep.subr.bf16.mxu0 0
        %1612 = vmatpush1.bf16.msra.mxu0 0
        %1613 = vmatprep.subr.bf16.mxu0 0
        %1614 = vmatpush1.bf16.msra.mxu0 0
        %1615 = vmatprep.subr.bf16.mxu0 0
        %1616 = vmatpush1.bf16.msra.mxu0 0
        %1617 = vmatprep.subr.bf16.mxu0 0
        %1618 = vmatpush1.bf16.msra.mxu0 0
        %1619 = vmatprep.subr.bf16.mxu0 0
        %1620 = vmatpush1.bf16.msra.mxu0 0
        %1621 = vmatprep.subr.bf16.mxu0 0
        %1622 = vmatpush1.bf16.msra.mxu0 0
        %1623 = vmatprep.subr.bf16.mxu0 0
        %1624 = vmatpush1.bf16.msra.mxu0 0
        %1625 = vmatprep.subr.bf16.mxu0 0
        %1626 = vmatpush1.bf16.msra.mxu0 0
        %1627 = vmatprep.subr.bf16.mxu0 0
        %1628 = vmatpush1.bf16.msra.mxu0 0
        %1629 = vmatprep.subr.bf16.mxu0 0
        %1630 = vmatpush1.bf16.msra.mxu0 0
        %1631 = vmatprep.subr.bf16.mxu0 0
        %1632 = vmatpush1.bf16.msra.mxu0 0
        %1633 = vmatprep.subr.bf16.mxu0 0
        %1634 = vmatpush1.bf16.msra.mxu0 0
        %1635 = vmatprep.subr.bf16.mxu0 0
        %1636 = vmatpush1.bf16.msra.mxu0 0
        %1637 = vmatprep.mubr.bf16.mxu0 0
        %1638 = vmatmul.mubr.bf16.gmra.mrb[0].mxu0 %v1600
        %v1639 = vpop.f32.mrb[0].mxu0
        %v1640 = vadd.f32 %v1597, %v1639
        %v1641 = vpop.f32.mrb[0].mxu0
        %v1642 = vpop.f32.mrb[0].mxu0
        %v1643 = vpop.f32.mrb[0].mxu0
        %1644 = vdwg.mxu0
        %v1645 = vsel %vm963, %v1640, -inf
        %1646 = vmax.xlane.f32.xlu0 %v1645
        %v1647 = vpop.xlane.xlu0 %1646
        %v1648 = vsub.f32 %v1640, %v1647
        %v1649 = vmul.f32 %v1648, 1.442695
        %v1650 = vpow.pop %v1649
        %v1651 = vsel %vm963, %v1650, 0.0
        %1652 = vadd.xlane.f32.xlu0 %v1651
        %v1653 = vpop.xlane.xlu0 %1652
        %v1654 = vrcp.pop %v1653
        %v1655 = vmul.f32 %v1650, %v1654
        %v1656 = vpack.c.bf16 %v1655, %v1655
        %v1657 = vld [vmem:[%s731] sm:$0xf]
        %v1659 = vsel %vm963, %v1656, 0
        %v1662 = vsel %vm967, %v1657, 0
        %1664 = vmatprep.subr.bf16.mxu0 0
        %1665 = vmatpush1.bf16.msra.mxu0 %v1662
        %1666 = vmatprep.subr.bf16.mxu0 0
        %1667 = vmatpush1.bf16.msra.mxu0 0
        %1668 = vmatprep.subr.bf16.mxu0 0
        %1669 = vmatpush1.bf16.msra.mxu0 0
        %1670 = vmatprep.subr.bf16.mxu0 0
        %1671 = vmatpush1.bf16.msra.mxu0 0
        %1672 = vmatprep.subr.bf16.mxu0 0
        %1673 = vmatpush1.bf16.msra.mxu0 0
        %1674 = vmatprep.subr.bf16.mxu0 0
        %1675 = vmatpush1.bf16.msra.mxu0 0
        %1676 = vmatprep.subr.bf16.mxu0 0
        %1677 = vmatpush1.bf16.msra.mxu0 0
        %1678 = vmatprep.subr.bf16.mxu0 0
        %1679 = vmatpush1.bf16.msra.mxu0 0
        %1680 = vmatprep.subr.bf16.mxu0 0
        %1681 = vmatpush1.bf16.msra.mxu0 0
        %1682 = vmatprep.subr.bf16.mxu0 0
        %1683 = vmatpush1.bf16.msra.mxu0 0
        %1684 = vmatprep.subr.bf16.mxu0 0
        %1685 = vmatpush1.bf16.msra.mxu0 0
        %1686 = vmatprep.subr.bf16.mxu0 0
        %1687 = vmatpush1.bf16.msra.mxu0 0
        %1688 = vmatprep.subr.bf16.mxu0 0
        %1689 = vmatpush1.bf16.msra.mxu0 0
        %1690 = vmatprep.subr.bf16.mxu0 0
        %1691 = vmatpush1.bf16.msra.mxu0 0
        %1692 = vmatprep.subr.bf16.mxu0 0
        %1693 = vmatpush1.bf16.msra.mxu0 0
        %1694 = vmatprep.subr.bf16.mxu0 0
        %1695 = vmatpush1.bf16.msra.mxu0 0
        %1696 = vmatprep.mubr.bf16.mxu0 0
        %1697 = vmatmul.mubr.bf16.gmra.mrb[0].mxu0 %v1659
        %v1698 = vpop.f32.mrb[0].mxu0
        %v1699 = vadd.f32 0.0, %v1698
        %v1700 = vpop.f32.mrb[0].mxu0
        %v1701 = vpop.f32.mrb[0].mxu0
        %v1702 = vpop.f32.mrb[0].mxu0
        %1703 = vdwg.mxu0
        %v1704 = vpack.c.bf16 %v1699, %v1699
        %1705 = vst.msk [vmem:[#allocation2] sm:$0xf] %vm1071, %v1704
        %s1706 = scalar_lea.vmem %s722, 4 [#allocation8]
        %v1707 = vld [vmem:[%s1706] sm:$0xf]
        %1709 = vrot.lane.b32.xlu0 %v1591, 120
        %v1710 = vpop.permute.xlu0 %1709
        %v1712 = vsel %vm963, %v1710, 0
        %v1715 = vsel %vm967, %v1707, 0
        %1717 = vmatprep.subr.bf16.mxu0 0
        %1718 = vmatpush1.bf16.msra.mxu0 %v1715
        %1719 = vmatprep.subr.bf16.mxu0 0
        %1720 = vmatpush1.bf16.msra.mxu0 0
        %1721 = vmatprep.subr.bf16.mxu0 0
        %1722 = vmatpush1.bf16.msra.mxu0 0
        %1723 = vmatprep.subr.bf16.mxu0 0
        %1724 = vmatpush1.bf16.msra.mxu0 0
        %1725 = vmatprep.subr.bf16.mxu0 0
        %1726 = vmatpush1.bf16.msra.mxu0 0
        %1727 = vmatprep.subr.bf16.mxu0 0
        %1728 = vmatpush1.bf16.msra.mxu0 0
        %1729 = vmatprep.subr.bf16.mxu0 0
        %1730 = vmatpush1.bf16.msra.mxu0 0
        %1731 = vmatprep.subr.bf16.mxu0 0
        %1732 = vmatpush1.bf16.msra.mxu0 0
        %1733 = vmatprep.subr.bf16.mxu0 0
        %1734 = vmatpush1.bf16.msra.mxu0 0
        %1735 = vmatprep.subr.bf16.mxu0 0
        %1736 = vmatpush1.bf16.msra.mxu0 0
        %1737 = vmatprep.subr.bf16.mxu0 0
        %1738 = vmatpush1.bf16.msra.mxu0 0
        %1739 = vmatprep.subr.bf16.mxu0 0
        %1740 = vmatpush1.bf16.msra.mxu0 0
        %1741 = vmatprep.subr.bf16.mxu0 0
        %1742 = vmatpush1.bf16.msra.mxu0 0
        %1743 = vmatprep.subr.bf16.mxu0 0
        %1744 = vmatpush1.bf16.msra.mxu0 0
        %1745 = vmatprep.subr.bf16.mxu0 0
        %1746 = vmatpush1.bf16.msra.mxu0 0
        %1747 = vmatprep.subr.bf16.mxu0 0
        %1748 = vmatpush1.bf16.msra.mxu0 0
        %1749 = vmatprep.mubr.bf16.mxu0 0
        %1750 = vmatmul.mubr.bf16.gmra.mrb[0].mxu0 %v1712
        %v1751 = vpop.f32.mrb[0].mxu0
        %v1752 = vadd.f32 %v1597, %v1751
        %v1753 = vpop.f32.mrb[0].mxu0
        %v1754 = vpop.f32.mrb[0].mxu0
        %v1755 = vpop.f32.mrb[0].mxu0
        %1756 = vdwg.mxu0
        %v1757 = vsel %vm963, %v1752, -inf
        %1758 = vmax.xlane.f32.xlu0 %v1757
        %v1759 = vpop.xlane.xlu0 %1758
        %v1760 = vsub.f32 %v1752, %v1759
        %v1761 = vmul.f32 %v1760, 1.442695
        %v1762 = vpow.pop %v1761
        %v1763 = vsel %vm963, %v1762, 0.0
        %1764 = vadd.xlane.f32.xlu0 %v1763
        %v1765 = vpop.xlane.xlu0 %1764
        %v1766 = vrcp.pop %v1765
        %v1767 = vmul.f32 %v1762, %v1766
        %v1768 = vpack.c.bf16 %v1767, %v1767
        %s1769 = scalar_lea.vmem %s731, 4 [#allocation9]
        %v1770 = vld [vmem:[%s1769] sm:$0xf]
        %v1772 = vsel %vm963, %v1768, 0
        %v1775 = vsel %vm967, %v1770, 0
        %1777 = vmatprep.subr.bf16.mxu0 0
        %1778 = vmatpush1.bf16.msra.mxu0 %v1775
        %1779 = vmatprep.subr.bf16.mxu0 0
        %1780 = vmatpush1.bf16.msra.mxu0 0
        %1781 = vmatprep.subr.bf16.mxu0 0
        %1782 = vmatpush1.bf16.msra.mxu0 0
        %1783 = vmatprep.subr.bf16.mxu0 0
        %1784 = vmatpush1.bf16.msra.mxu0 0
        %1785 = vmatprep.subr.bf16.mxu0 0
        %1786 = vmatpush1.bf16.msra.mxu0 0
        %1787 = vmatprep.subr.bf16.mxu0 0
        %1788 = vmatpush1.bf16.msra.mxu0 0
        %1789 = vmatprep.subr.bf16.mxu0 0
        %1790 = vmatpush1.bf16.msra.mxu0 0
        %1791 = vmatprep.subr.bf16.mxu0 0
        %1792 = vmatpush1.bf16.msra.mxu0 0
        %1793 = vmatprep.subr.bf16.mxu0 0
        %1794 = vmatpush1.bf16.msra.mxu0 0
        %1795 = vmatprep.subr.bf16.mxu0 0
        %1796 = vmatpush1.bf16.msra.mxu0 0
        %1797 = vmatprep.subr.bf16.mxu0 0
        %1798 = vmatpush1.bf16.msra.mxu0 0
        %1799 = vmatprep.subr.bf16.mxu0 0
        %1800 = vmatpush1.bf16.msra.mxu0 0
        %1801 = vmatprep.subr.bf16.mxu0 0
        %1802 = vmatpush1.bf16.msra.mxu0 0
        %1803 = vmatprep.subr.bf16.mxu0 0
        %1804 = vmatpush1.bf16.msra.mxu0 0
        %1805 = vmatprep.subr.bf16.mxu0 0
        %1806 = vmatpush1.bf16.msra.mxu0 0
        %1807 = vmatprep.subr.bf16.mxu0 0
        %1808 = vmatpush1.bf16.msra.mxu0 0
        %1809 = vmatprep.mubr.bf16.mxu0 0
        %1810 = vmatmul.mubr.bf16.gmra.mrb[0].mxu0 %v1772
        %v1811 = vpop.f32.mrb[0].mxu0
        %v1812 = vadd.f32 0.0, %v1811
        %v1813 = vpop.f32.mrb[0].mxu0
        %v1814 = vpop.f32.mrb[0].mxu0
        %v1815 = vpop.f32.mrb[0].mxu0
        %1816 = vdwg.mxu0
        %v1817 = vpack.c.bf16 %v1812, %v1812
        %v1819 = vunpack.c.l.b16 %v1817
        %v1820 = vpack.c.b16 %v1819, %v1819
        %1821 = vrot.lane.b32.xlu0 %v1820, 8
        %v1822 = vpop.permute.xlu0 %1821
        %1824 = vst.msk [vmem:[#allocation2] sm:$0xf] %vm1191, %v1822
        %s1825 = scalar_lea.vmem %s722, 8 [#allocation8]
        %v1826 = vld [vmem:[%s1825] sm:$0xf]
        %1827 = vrot.lane.b32.xlu0 %v1591, 112
        %v1828 = vpop.permute.xlu0 %1827
        %v1830 = vsel %vm963, %v1828, 0
        %v1833 = vsel %vm967, %v1826, 0
        %1835 = vmatprep.subr.bf16.mxu0 0
        %1836 = vmatpush1.bf16.msra.mxu0 %v1833
        %1837 = vmatprep.subr.bf16.mxu0 0
        %1838 = vmatpush1.bf16.msra.mxu0 0
        %1839 = vmatprep.subr.bf16.mxu0 0
        %1840 = vmatpush1.bf16.msra.mxu0 0
        %1841 = vmatprep.subr.bf16.mxu0 0
        %1842 = vmatpush1.bf16.msra.mxu0 0
        %1843 = vmatprep.subr.bf16.mxu0 0
        %1844 = vmatpush1.bf16.msra.mxu0 0
        %1845 = vmatprep.subr.bf16.mxu0 0
        %1846 = vmatpush1.bf16.msra.mxu0 0
        %1847 = vmatprep.subr.bf16.mxu0 0
        %1848 = vmatpush1.bf16.msra.mxu0 0
        %1849 = vmatprep.subr.bf16.mxu0 0
        %1850 = vmatpush1.bf16.msra.mxu0 0
        %1851 = vmatprep.subr.bf16.mxu0 0
        %1852 = vmatpush1.bf16.msra.mxu0 0
        %1853 = vmatprep.subr.bf16.mxu0 0
        %1854 = vmatpush1.bf16.msra.mxu0 0
        %1855 = vmatprep.subr.bf16.mxu0 0
        %1856 = vmatpush1.bf16.msra.mxu0 0
        %1857 = vmatprep.subr.bf16.mxu0 0
        %1858 = vmatpush1.bf16.msra.mxu0 0
        %1859 = vmatprep.subr.bf16.mxu0 0
        %1860 = vmatpush1.bf16.msra.mxu0 0
        %1861 = vmatprep.subr.bf16.mxu0 0
        %1862 = vmatpush1.bf16.msra.mxu0 0
        %1863 = vmatprep.subr.bf16.mxu0 0
        %1864 = vmatpush1.bf16.msra.mxu0 0
        %1865 = vmatprep.subr.bf16.mxu0 0
        %1866 = vmatpush1.bf16.msra.mxu0 0
        %1867 = vmatprep.mubr.bf16.mxu0 0
        %1868 = vmatmul.mubr.bf16.gmra.mrb[0].mxu0 %v1830
        %v1869 = vpop.f32.mrb[0].mxu0
        %v1870 = vadd.f32 %v1597, %v1869
        %v1871 = vpop.f32.mrb[0].mxu0
        %v1872 = vpop.f32.mrb[0].mxu0
        %v1873 = vpop.f32.mrb[0].mxu0
        %1874 = vdwg.mxu0
        %v1875 = vsel %vm963, %v1870, -inf
        %1876 = vmax.xlane.f32.xlu0 %v1875
        %v1877 = vpop.xlane.xlu0 %1876
        %v1878 = vsub.f32 %v1870, %v1877
        %v1879 = vmul.f32 %v1878, 1.442695
        %v1880 = vpow.pop %v1879
        %v1881 = vsel %vm963, %v1880, 0.0
        %1882 = vadd.xlane.f32.xlu0 %v1881
        %v1883 = vpop.xlane.xlu0 %1882
        %v1884 = vrcp.pop %v1883
        %v1885 = vmul.f32 %v1880, %v1884
        %v1886 = vpack.c.bf16 %v1885, %v1885
        %s1887 = scalar_lea.vmem %s731, 8 [#allocation9]
        %v1888 = vld [vmem:[%s1887] sm:$0xf]
        %v1890 = vsel %vm963, %v1886, 0
        %v1893 = vsel %vm967, %v1888, 0
        %1895 = vmatprep.subr.bf16.mxu0 0
        %1896 = vmatpush1.bf16.msra.mxu0 %v1893
        %1897 = vmatprep.subr.bf16.mxu0 0
        %1898 = vmatpush1.bf16.msra.mxu0 0
        %1899 = vmatprep.subr.bf16.mxu0 0
        %1900 = vmatpush1.bf16.msra.mxu0 0
        %1901 = vmatprep.subr.bf16.mxu0 0
        %1902 = vmatpush1.bf16.msra.mxu0 0
        %1903 = vmatprep.subr.bf16.mxu0 0
        %1904 = vmatpush1.bf16.msra.mxu0 0
        %1905 = vmatprep.subr.bf16.mxu0 0
        %1906 = vmatpush1.bf16.msra.mxu0 0
        %1907 = vmatprep.subr.bf16.mxu0 0
        %1908 = vmatpush1.bf16.msra.mxu0 0
        %1909 = vmatprep.subr.bf16.mxu0 0
        %1910 = vmatpush1.bf16.msra.mxu0 0
        %1911 = vmatprep.subr.bf16.mxu0 0
        %1912 = vmatpush1.bf16.msra.mxu0 0
        %1913 = vmatprep.subr.bf16.mxu0 0
        %1914 = vmatpush1.bf16.msra.mxu0 0
        %1915 = vmatprep.subr.bf16.mxu0 0
        %1916 = vmatpush1.bf16.msra.mxu0 0
        %1917 = vmatprep.subr.bf16.mxu0 0
        %1918 = vmatpush1.bf16.msra.mxu0 0
        %1919 = vmatprep.subr.bf16.mxu0 0
        %1920 = vmatpush1.bf16.msra.mxu0 0
        %1921 = vmatprep.subr.bf16.mxu0 0
        %1922 = vmatpush1.bf16.msra.mxu0 0
        %1923 = vmatprep.subr.bf16.mxu0 0
        %1924 = vmatpush1.bf16.msra.mxu0 0
        %1925 = vmatprep.subr.bf16.mxu0 0
        %1926 = vmatpush1.bf16.msra.mxu0 0
        %1927 = vmatprep.mubr.bf16.mxu0 0
        %1928 = vmatmul.mubr.bf16.gmra.mrb[0].mxu0 %v1890
        %v1929 = vpop.f32.mrb[0].mxu0
        %v1930 = vadd.f32 0.0, %v1929
        %v1931 = vpop.f32.mrb[0].mxu0
        %v1932 = vpop.f32.mrb[0].mxu0
        %v1933 = vpop.f32.mrb[0].mxu0
        %1934 = vdwg.mxu0
        %v1935 = vpack.c.bf16 %v1930, %v1930
        %v1937 = vunpack.c.l.b16 %v1935
        %v1938 = vpack.c.b16 %v1937, %v1937
        %1939 = vrot.lane.b32.xlu0 %v1938, 16
        %v1940 = vpop.permute.xlu0 %1939
        %1942 = vst.msk [vmem:[#allocation2] sm:$0xf] %vm1310, %v1940
        %s1943 = scalar_lea.vmem %s722, 12 [#allocation8]
        %v1944 = vld [vmem:[%s1943] sm:$0xf]
        %1945 = vrot.lane.b32.xlu0 %v1591, 104
        %v1946 = vpop.permute.xlu0 %1945
        %v1948 = vsel %vm963, %v1946, 0
        %v1951 = vsel %vm967, %v1944, 0
        %1953 = vmatprep.subr.bf16.mxu0 0
        %1954 = vmatpush1.bf16.msra.mxu0 %v1951
        %1955 = vmatprep.subr.bf16.mxu0 0
        %1956 = vmatpush1.bf16.msra.mxu0 0
        %1957 = vmatprep.subr.bf16.mxu0 0
        %1958 = vmatpush1.bf16.msra.mxu0 0
        %1959 = vmatprep.subr.bf16.mxu0 0
        %1960 = vmatpush1.bf16.msra.mxu0 0
        %1961 = vmatprep.subr.bf16.mxu0 0
        %1962 = vmatpush1.bf16.msra.mxu0 0
        %1963 = vmatprep.subr.bf16.mxu0 0
        %1964 = vmatpush1.bf16.msra.mxu0 0
        %1965 = vmatprep.subr.bf16.mxu0 0
        %1966 = vmatpush1.bf16.msra.mxu0 0
        %1967 = vmatprep.subr.bf16.mxu0 0
        %1968 = vmatpush1.bf16.msra.mxu0 0
        %1969 = vmatprep.subr.bf16.mxu0 0
        %1970 = vmatpush1.bf16.msra.mxu0 0
        %1971 = vmatprep.subr.bf16.mxu0 0
        %1972 = vmatpush1.bf16.msra.mxu0 0
        %1973 = vmatprep.subr.bf16.mxu0 0
        %1974 = vmatpush1.bf16.msra.mxu0 0
        %1975 = vmatprep.subr.bf16.mxu0 0
        %1976 = vmatpush1.bf16.msra.mxu0 0
        %1977 = vmatprep.subr.bf16.mxu0 0
        %1978 = vmatpush1.bf16.msra.mxu0 0
        %1979 = vmatprep.subr.bf16.mxu0 0
        %1980 = vmatpush1.bf16.msra.mxu0 0
        %1981 = vmatprep.subr.bf16.mxu0 0
        %1982 = vmatpush1.bf16.msra.mxu0 0
        %1983 = vmatprep.subr.bf16.mxu0 0
        %1984 = vmatpush1.bf16.msra.mxu0 0
        %1985 = vmatprep.mubr.bf16.mxu0 0
        %1986 = vmatmul.mubr.bf16.gmra.mrb[0].mxu0 %v1948
        %v1987 = vpop.f32.mrb[0].mxu0
        %v1988 = vadd.f32 %v1597, %v1987
        %v1989 = vpop.f32.mrb[0].mxu0
        %v1990 = vpop.f32.mrb[0].mxu0
        %v1991 = vpop.f32.mrb[0].mxu0
        %1992 = vdwg.mxu0
        %v1993 = vsel %vm963, %v1988, -inf
        %1994 = vmax.xlane.f32.xlu0 %v1993
        %v1995 = vpop.xlane.xlu0 %1994
        %v1996 = vsub.f32 %v1988, %v1995
        %v1997 = vmul.f32 %v1996, 1.442695
        %v1998 = vpow.pop %v1997
        %v1999 = vsel %vm963, %v1998, 0.0
        %2000 = vadd.xlane.f32.xlu0 %v1999
        %v2001 = vpop.xlane.xlu0 %2000
        %v2002 = vrcp.pop %v2001
        %v2003 = vmul.f32 %v1998, %v2002
        %v2004 = vpack.c.bf16 %v2003, %v2003
        %s2005 = scalar_lea.vmem %s731, 12 [#allocation9]
        %v2006 = vld [vmem:[%s2005] sm:$0xf]
        %v2008 = vsel %vm963, %v2004, 0
        %v2011 = vsel %vm967, %v2006, 0
        %2013 = vmatprep.subr.bf16.mxu0 0
        %2014 = vmatpush1.bf16.msra.mxu0 %v2011
        %2015 = vmatprep.subr.bf16.mxu0 0
        %2016 = vmatpush1.bf16.msra.mxu0 0
        %2017 = vmatprep.subr.bf16.mxu0 0
        %2018 = vmatpush1.bf16.msra.mxu0 0
        %2019 = vmatprep.subr.bf16.mxu0 0
        %2020 = vmatpush1.bf16.msra.mxu0 0
        %2021 = vmatprep.subr.bf16.mxu0 0
        %2022 = vmatpush1.bf16.msra.mxu0 0
        %2023 = vmatprep.subr.bf16.mxu0 0
        %2024 = vmatpush1.bf16.msra.mxu0 0
        %2025 = vmatprep.subr.bf16.mxu0 0
        %2026 = vmatpush1.bf16.msra.mxu0 0
        %2027 = vmatprep.subr.bf16.mxu0 0
        %2028 = vmatpush1.bf16.msra.mxu0 0
        %2029 = vmatprep.subr.bf16.mxu0 0
        %2030 = vmatpush1.bf16.msra.mxu0 0
        %2031 = vmatprep.subr.bf16.mxu0 0
        %2032 = vmatpush1.bf16.msra.mxu0 0
        %2033 = vmatprep.subr.bf16.mxu0 0
        %2034 = vmatpush1.bf16.msra.mxu0 0
        %2035 = vmatprep.subr.bf16.mxu0 0
        %2036 = vmatpush1.bf16.msra.mxu0 0
        %2037 = vmatprep.subr.bf16.mxu0 0
        %2038 = vmatpush1.bf16.msra.mxu0 0
        %2039 = vmatprep.subr.bf16.mxu0 0
        %2040 = vmatpush1.bf16.msra.mxu0 0
        %2041 = vmatprep.subr.bf16.mxu0 0
        %2042 = vmatpush1.bf16.msra.mxu0 0
        %2043 = vmatprep.subr.bf16.mxu0 0
        %2044 = vmatpush1.bf16.msra.mxu0 0
        %2045 = vmatprep.mubr.bf16.mxu0 0
        %2046 = vmatmul.mubr.bf16.gmra.mrb[0].mxu0 %v2008
        %v2047 = vpop.f32.mrb[0].mxu0
        %v2048 = vadd.f32 0.0, %v2047
        %v2049 = vpop.f32.mrb[0].mxu0
        %v2050 = vpop.f32.mrb[0].mxu0
        %v2051 = vpop.f32.mrb[0].mxu0
        %2052 = vdwg.mxu0
        %v2053 = vpack.c.bf16 %v2048, %v2048
        %v2055 = vunpack.c.l.b16 %v2053
        %v2056 = vpack.c.b16 %v2055, %v2055
        %2057 = vrot.lane.b32.xlu0 %v2056, 24
        %v2058 = vpop.permute.xlu0 %2057
        %2060 = vst.msk [vmem:[#allocation2] sm:$0xf] %vm1429, %v2058
        %v2061 = vld [vmem:[#allocation2] sm:$0xf]
        %s2062 = scalar_lea.vmem [#allocation17], 16
        %v2063 = vld [vmem:[%s2062] sm:$0xf]
        %v2064 = vld [vmem:[%s2062 + $0x4] sm:$0xf]
        %v2065 = vld [vmem:[%s2062 + $0x8] sm:$0xf]
        %v2066 = vld [vmem:[%s2062 + $0xc] sm:$0xf]
        %v2067 = vlaneseq
        %v2068 = vshrl.u32 %v2067, 7
        %v2069 = vsub.s32 1, %v2068
        %v2070 = vrot.slane %v858, %v2069
        %v2075 = vunpack.c.l.b16 %v2063
        %v2076 = vunpack.c.l.b16 %v2064
        %v2077 = vunpack.c.l.b16 %v2065
        %v2078 = vunpack.c.l.b16 %v2066
        %v2079 = vpack.c.b16 %v2076, %v2075
        %v2080 = vpack.c.b16 %v2078, %v2077
        %v2084 = vsel %vm865, %v2061, 0
        %2086 = vmatprep.subr.bf16.mxu0 0
        %2087 = vmatpush1.bf16.msra.mxu0 %v2079
        %2088 = vmatprep.subr.bf16.mxu0 0
        %2089 = vmatpush1.bf16.msra.mxu0 %v2080
        %2090 = vmatprep.subr.bf16.mxu0 0
        %2091 = vmatpush1.bf16.msra.mxu0 0
        %2092 = vmatprep.subr.bf16.mxu0 0
        %2093 = vmatpush1.bf16.msra.mxu0 0
        %2094 = vmatprep.subr.bf16.mxu0 0
        %2095 = vmatpush1.bf16.msra.mxu0 0
        %2096 = vmatprep.subr.bf16.mxu0 0
        %2097 = vmatpush1.bf16.msra.mxu0 0
        %2098 = vmatprep.subr.bf16.mxu0 0
        %2099 = vmatpush1.bf16.msra.mxu0 0
        %2100 = vmatprep.subr.bf16.mxu0 0
        %2101 = vmatpush1.bf16.msra.mxu0 0
        %2102 = vmatprep.subr.bf16.mxu0 0
        %2103 = vmatpush1.bf16.msra.mxu0 0
        %2104 = vmatprep.subr.bf16.mxu0 0
        %2105 = vmatpush1.bf16.msra.mxu0 0
        %2106 = vmatprep.subr.bf16.mxu0 0
        %2107 = vmatpush1.bf16.msra.mxu0 0
        %2108 = vmatprep.subr.bf16.mxu0 0
        %2109 = vmatpush1.bf16.msra.mxu0 0
        %2110 = vmatprep.subr.bf16.mxu0 0
        %2111 = vmatpush1.bf16.msra.mxu0 0
        %2112 = vmatprep.subr.bf16.mxu0 0
        %2113 = vmatpush1.bf16.msra.mxu0 0
        %2114 = vmatprep.subr.bf16.mxu0 0
        %2115 = vmatpush1.bf16.msra.mxu0 0
        %2116 = vmatprep.subr.bf16.mxu0 0
        %2117 = vmatpush1.bf16.msra.mxu0 0
        %2118 = vmatprep.mubr.bf16.mxu0 0
        %2119 = vmatmul.mubr.bf16.gmra.mrb[0].mxu0 %v2084
        %v2120 = vpop.f32.mrb[0].mxu0
        %v2121 = vadd.f32 %v2070, %v2120
        %v2122 = vpop.f32.mrb[0].mxu0
        %v2123 = vpop.f32.mrb[0].mxu0
        %v2124 = vpop.f32.mrb[0].mxu0
        %2125 = vdwg.mxu0
        %v2126 = vadd.f32 %v1495, %v2121
        %v2127 = vsel %vm865, %v2126, 0.0
        %2128 = vadd.xlane.f32.xlu0 %v2127
        %v2129 = vpop.xlane.xlu0 %2128
        %v2130 = vmul.f32 %v2129, %v869
        %v2131 = vsub.f32 %v2126, %v2130
        %v2132 = vmul.f32 %v2131, %v2131
        %v2133 = vsel %vm865, %v2132, 0.0
        %2134 = vadd.xlane.f32.xlu0 %v2133
        %v2135 = vpop.xlane.xlu0 %2134
        %v2136 = vmul.f32 %v2135, 0.032258064
        %v2137 = vrsqrt.pop %v2136
        %v2138 = vmul.f32 %v2136, %v2137
        %vm2139 = vcmp.eq.f32.partialorder %v2136, inf
        %v2140 = vsel %vm2139, %v2136, %v2138
        %vm2141 = vcmp.eq.f32.partialorder %v2136, 0.0
        %v2142 = vand.u32 %v2136, 2147483648
        %v2143 = vsel %vm2141, %v2142, %v2140
        %v2144 = vadd.f32 %v2143, 1e-06
        %v2145 = vrcp.pop %v2144
        %v2146 = vmul.f32 %v2131, %v2145
        %v2147 = vlaneseq
        %v2148 = vshrl.u32 %v2147, 7
        %v2149 = vsub.s32 2, %v2148
        %v2150 = vrot.slane %v855, %v2149
        %v2151 = vmul.f32 %v2150, %v2146
        %v2152 = vlaneseq
        %v2153 = vshrl.u32 %v2152, 7
        %v2154 = vsub.s32 2, %v2153
        %v2155 = vrot.slane %v856, %v2154
        %v2156 = vadd.f32 %v2151, %v2155
        %v2157 = vpack.c.bf16 %v2156, %v2156
        %v2158 = vld [vmem:[%s13] sm:$0xf]
        %v2159 = vld [vmem:[%s13 + $0x4] sm:$0xf]
        %v2160 = vld [vmem:[%s13 + $0x8] sm:$0xf]
        %v2161 = vld [vmem:[%s13 + $0xc] sm:$0xf]
        %v2162 = vld [vmem:[%s14] sm:$0x1]
        %v2164 = vlaneseq
        %v2165 = vshrl.u32 %v2164, 7
        %v2166 = vsub.s32 0, %v2165
        %v2167 = vrot.slane %v2162, %v2166
        %v2173 = vunpack.c.l.b16 %v2158
        %v2174 = vunpack.c.l.b16 %v2159
        %v2175 = vunpack.c.l.b16 %v2160
        %v2176 = vunpack.c.l.b16 %v2161
        %v2177 = vpack.c.b16 %v2174, %v2173
        %v2178 = vpack.c.b16 %v2176, %v2175
        %v2182 = vsel %vm865, %v2157, 0
        %2184 = vmatprep.subr.bf16.mxu0 0
        %2185 = vmatpush1.bf16.msra.mxu0 %v2177
        %2186 = vmatprep.subr.bf16.mxu0 0
        %2187 = vmatpush1.bf16.msra.mxu0 %v2178
        %2188 = vmatprep.subr.bf16.mxu0 0
        %2189 = vmatpush1.bf16.msra.mxu0 0
        %2190 = vmatprep.subr.bf16.mxu0 0
        %2191 = vmatpush1.bf16.msra.mxu0 0
        %2192 = vmatprep.subr.bf16.mxu0 0
        %2193 = vmatpush1.bf16.msra.mxu0 0
        %2194 = vmatprep.subr.bf16.mxu0 0
        %2195 = vmatpush1.bf16.msra.mxu0 0
        %2196 = vmatprep.subr.bf16.mxu0 0
        %2197 = vmatpush1.bf16.msra.mxu0 0
        %2198 = vmatprep.subr.bf16.mxu0 0
        %2199 = vmatpush1.bf16.msra.mxu0 0
        %2200 = vmatprep.subr.bf16.mxu0 0
        %2201 = vmatpush1.bf16.msra.mxu0 0
        %2202 = vmatprep.subr.bf16.mxu0 0
        %2203 = vmatpush1.bf16.msra.mxu0 0
        %2204 = vmatprep.subr.bf16.mxu0 0
        %2205 = vmatpush1.bf16.msra.mxu0 0
        %2206 = vmatprep.subr.bf16.mxu0 0
        %2207 = vmatpush1.bf16.msra.mxu0 0
        %2208 = vmatprep.subr.bf16.mxu0 0
        %2209 = vmatpush1.bf16.msra.mxu0 0
        %2210 = vmatprep.subr.bf16.mxu0 0
        %2211 = vmatpush1.bf16.msra.mxu0 0
        %2212 = vmatprep.subr.bf16.mxu0 0
        %2213 = vmatpush1.bf16.msra.mxu0 0
        %2214 = vmatprep.subr.bf16.mxu0 0
        %2215 = vmatpush1.bf16.msra.mxu0 0
        %2216 = vmatprep.mubr.bf16.mxu0 0
        %2217 = vmatmul.mubr.bf16.gmra.mrb[0].mxu0 %v2182
        %v2218 = vpop.f32.mrb[0].mxu0
        %v2219 = vadd.f32 %v2167, %v2218
        %v2220 = vpop.f32.mrb[0].mxu0
        %v2221 = vpop.f32.mrb[0].mxu0
        %v2222 = vpop.f32.mrb[0].mxu0
        %2223 = vdwg.mxu0
        %v2224 = vmax.f32 %v2219, 0.0
        %v2225 = vpack.c.bf16 %v2224, %v2224
        %v2226 = vld [vmem:[%s15] sm:$0xf]
        %v2227 = vld [vmem:[%s15 + $0x4] sm:$0xf]
        %v2228 = vld [vmem:[%s15 + $0x8] sm:$0xf]
        %v2229 = vld [vmem:[%s15 + $0xc] sm:$0xf]
        %v2230 = vld [vmem:[%s15 + $0x10] sm:$0xf]
        %v2231 = vld [vmem:[%s15 + $0x14] sm:$0xf]
        %v2232 = vld [vmem:[%s15 + $0x18] sm:$0xf]
        %v2233 = vld [vmem:[%s15 + $0x1c] sm:$0xf]
        %v2242 = vunpack.c.l.b16 %v2226
        %v2243 = vunpack.c.l.b16 %v2227
        %v2244 = vunpack.c.l.b16 %v2228
        %v2245 = vunpack.c.l.b16 %v2229
        %v2246 = vunpack.c.l.b16 %v2230
        %v2247 = vunpack.c.l.b16 %v2231
        %v2248 = vunpack.c.l.b16 %v2232
        %v2249 = vunpack.c.l.b16 %v2233
        %v2250 = vpack.c.b16 %v2243, %v2242
        %v2251 = vpack.c.b16 %v2245, %v2244
        %v2252 = vpack.c.b16 %v2247, %v2246
        %v2253 = vpack.c.b16 %v2249, %v2248
        %vm2258 = vcmask 523264
        %v2260 = vsel %vm2258, %v2225, 0
        %2262 = vmatprep.subr.bf16.mxu0 0
        %2263 = vmatpush1.bf16.msra.mxu0 %v2250
        %2264 = vmatprep.subr.bf16.mxu0 0
        %2265 = vmatpush1.bf16.msra.mxu0 %v2251
        %2266 = vmatprep.subr.bf16.mxu0 0
        %2267 = vmatpush1.bf16.msra.mxu0 %v2252
        %2268 = vmatprep.subr.bf16.mxu0 0
        %2269 = vmatpush1.bf16.msra.mxu0 %v2253
        %2270 = vmatprep.subr.bf16.mxu0 0
        %2271 = vmatpush1.bf16.msra.mxu0 0
        %2272 = vmatprep.subr.bf16.mxu0 0
        %2273 = vmatpush1.bf16.msra.mxu0 0
        %2274 = vmatprep.subr.bf16.mxu0 0
        %2275 = vmatpush1.bf16.msra.mxu0 0
        %2276 = vmatprep.subr.bf16.mxu0 0
        %2277 = vmatpush1.bf16.msra.mxu0 0
        %2278 = vmatprep.subr.bf16.mxu0 0
        %2279 = vmatpush1.bf16.msra.mxu0 0
        %2280 = vmatprep.subr.bf16.mxu0 0
        %2281 = vmatpush1.bf16.msra.mxu0 0
        %2282 = vmatprep.subr.bf16.mxu0 0
        %2283 = vmatpush1.bf16.msra.mxu0 0
        %2284 = vmatprep.subr.bf16.mxu0 0
        %2285 = vmatpush1.bf16.msra.mxu0 0
        %2286 = vmatprep.subr.bf16.mxu0 0
        %2287 = vmatpush1.bf16.msra.mxu0 0
        %2288 = vmatprep.subr.bf16.mxu0 0
        %2289 = vmatpush1.bf16.msra.mxu0 0
        %2290 = vmatprep.subr.bf16.mxu0 0
        %2291 = vmatpush1.bf16.msra.mxu0 0
        %2292 = vmatprep.subr.bf16.mxu0 0
        %2293 = vmatpush1.bf16.msra.mxu0 0
        %2294 = vmatprep.mubr.bf16.mxu0 0
        %2295 = vmatmul.mubr.bf16.gmra.mrb[0].mxu0 %v2260
        %v2296 = vpop.f32.mrb[0].mxu0
        %v2297 = vadd.f32 0.0, %v2296
        %v2298 = vpop.f32.mrb[0].mxu0
        %v2299 = vpop.f32.mrb[0].mxu0
        %v2300 = vpop.f32.mrb[0].mxu0
        %2301 = vdwg.mxu0
        %v2302 = vadd.f32 %v2126, %v2297
        %v2303 = vld [vmem:[%s16] sm:$0x1]
        %v2305 = vlaneseq
        %v2306 = vshrl.u32 %v2305, 7
        %v2307 = vsub.s32 0, %v2306
        %v2308 = vrot.slane %v2303, %v2307
        %v2310 = vadd.f32 %v2302, %v2308
        %2311 = vst.msk [vmem:[%s847] sm:$0xff] %vm865, %v2310
        %s2312 = sand.u32 %s463, 1
        %s2313 = scalar_lea.sflag [#allocation5], %s2312
        %s2314 = sand.u32 %s463, 1
        %s2315 = smul.addr %s2314, 8
        %s2316 = scalar_lea.vmem [#allocation21], %s2315
        // Predicated region
        $region133: #{tpu_custom_call.1} parent=87 // pred_check
          %p2317 = pneg %p473
        $region134: #{tpu_custom_call.1} parent=87 // pred_check_branch
          %2319 = sbr.rel (%p2317) target = $region136
        $region135: #{tpu_custom_call.1} parent=87 // pred_region
          %s2321 = ssub.s32 128, 128
          %2322 = vsyncadd %s2313, %s2321
          %s2323 = sadd.s32 %s50, %s49
          %s2324 = smul.addr %s2323, 128
          %s2325 = scalar_lea.hbm %s17, %s2324
          %s2327 = sshll.u32 %s2316, 4
          %s2328 = int_to_ptr.vmem [resolvable:$true] %s2327
          %2330 = dma.vmem_to_hbm [thread:$0]  %s2328, 128, %s2325, %s2313
        $region136: #{tpu_custom_call.1} parent=87 // pred_fallthru
          _
      $region88: #{tpu_custom_call.1} parent=5 // pred_fallthru
        _
      %p2331 = scmp.le.s32.totalorder 2, %s40
      // Predicated region
      $region137: #{tpu_custom_call.1} parent=5 // pred_check
        %p2332 = pneg %p2331
      $region138: #{tpu_custom_call.1} parent=5 // pred_check_branch
        %2334 = sbr.rel (%p2332) target = $region140
      $region139: #{tpu_custom_call.1} parent=5 // pred_region
        %s2335 = ssub.s32 %s40, 2
        // Predicated region
        $region141: #{tpu_custom_call.1} parent=139 // pred_check
          %p2336 = pneg %p479
        $region142: #{tpu_custom_call.1} parent=139 // pred_check_branch
          %2338 = sbr.rel (%p2336) target = $region144
        $region143: #{tpu_custom_call.1} parent=139 // pred_region
          %s2339 = sand.u32 %s464, 1
          %s2340 = scalar_lea.sflag [#allocation5], %s2339
          %s2341 = sand.u32 %s464, 1
          %s2342 = smul.addr %s2341, 8
          %s2343 = scalar_lea.vmem [#allocation21], %s2342
          %2344 = dma.done %s2340, 128
        $region144: #{tpu_custom_call.1} parent=139 // pred_fallthru
          _
      $region140: #{tpu_custom_call.1} parent=5 // pred_fallthru
        _
    $region6: #{tpu_custom_call.1} parent=1 // loop_footer
      %s44 = sadd.s32 1, %s40
    $region7: #{tpu_custom_call.1} parent=1 // loop_footer_branch
      %39 = sbr.rel target = $region3
    $region8: #{tpu_custom_call.1} parent=1 // loop_exit
      _
    %2345 = vsyncpa [#allocation4], 1
    %s2346 = scalar_lea.sflag [#allocation4], 1
    %2347 = vsyncpa %s2346, 1
    %2348 = vsyncpa [#allocation7], 1
    %s2349 = scalar_lea.sflag [#allocation7], 1
    %2350 = vsyncpa %s2349, 1
    %2351 = vsyncpa [#allocation10], 1
    %s2352 = scalar_lea.sflag [#allocation10], 1
    %2353 = vsyncpa %s2352, 1
    %2354 = vsyncpa [#allocation13], 1
    %s2355 = scalar_lea.sflag [#allocation13], 1
    %2356 = vsyncpa %s2355, 1
    %2357 = vsyncpa [#allocation16], 1
    %2358 = vsyncpa [#allocation19], 1
    %2359 = vsyncpa [#allocation5], 1
    %s2360 = scalar_lea.sflag [#allocation5], 1
    %2361 = vsyncpa %s2360, 1

</llo_original>
